<compile_context>
chip_gen: v5e
topology: v5e:2x2
jax: 0.10.0
libtpu: 0.0.40
codegen_flags: <defaults>
</compile_context>

<pallas_src>
import functools

import jax
import jax.numpy as jnp
from jax.experimental import pallas as pl
from jax.experimental.pallas import tpu as pltpu

BN_EPS = 1e-5
LANES = 128


def _round_up(x, m):
    return (x + m - 1) // m * m


def _choose_tm(m):
    """Row tile: big enough to amortise per-step overhead, small enough that the grid
    has >= 2 steps when possible (v7x has 2 TensorCores); capped at 512 rows."""
    tm = _round_up((max(m, 16) + 1) // 2, 8)
    return min(512, tm)


# ---------------------------------------------------------------------------
# Pallas kernel: fused (patches @ W) * scale + shift [+ shortcut], optional ReLU
# ---------------------------------------------------------------------------
def _conv_bn_kernel(*refs, mode, apply_relu):
    if mode == "plain":
        p_ref, w_ref, sc_ref, sh_ref, o_ref = refs
    elif mode == "residual":
        p_ref, w_ref, sc_ref, sh_ref, r_ref, o_ref = refs
    else:  # "shortcut": fused 1x1 projection shortcut
        p_ref, w_ref, sc_ref, sh_ref, p3_ref, w3_ref, b3_ref, o_ref = refs

    # bf16 operands -> single-pass MXU; f32 accumulation.
    acc = jnp.dot(p_ref[...], w_ref[...], preferred_element_type=jnp.float32)
    y = acc * sc_ref[...] + sh_ref[...]

    if mode == "residual":
        y = y + r_ref[...]
    elif mode == "shortcut":
        res = jnp.dot(p3_ref[...], w3_ref[...], preferred_element_type=jnp.float32)
        y = y + res + b3_ref[...]

    if apply_relu:
        y = jnp.maximum(y, 0.0)
    o_ref[...] = y.astype(o_ref.dtype)


def fused_conv_bn(patches, w, scale, shift, *, residual=None, shortcut=None,
                  apply_relu=True):
    """patches: (M, K) f32; w: (K, Cout) f32; scale/shift: (Cout,) f32.
    residual: optional (M, Cout) f32 tensor added before ReLU (identity shortcut).
    shortcut: optional (patches3 (M, K3), w3 (K3, Cout), b3 (Cout,)) fused 1x1 conv.
    Returns (M, Cout) f32."""
    M, K = patches.shape
    Cout = w.shape[1]
    Cp = _round_up(Cout, LANES)          # lane-dense output width
    pad_c = Cp - Cout

    # Channel-pad weights / per-channel vectors; cast matmul operands to bf16.
    w_p = jnp.pad(w, ((0, 0), (0, pad_c))).astype(jnp.bfloat16)
    scale_p = jnp.pad(scale, (0, pad_c)).reshape(1, Cp).astype(jnp.float32)
    shift_p = jnp.pad(shift, (0, pad_c)).reshape(1, Cp).astype(jnp.float32)
    patches_bf = patches.astype(jnp.bfloat16)

    tm = _choose_tm(M)
    grid = (pl.cdiv(M, tm),)

    in_arrays = [patches_bf, w_p, scale_p, shift_p]
    in_specs = [
        pl.BlockSpec((tm, K), lambda i: (i, 0)),       # patches tile
        pl.BlockSpec((K, Cp), lambda i: (0, 0)),       # full weight
        pl.BlockSpec((1, Cp), lambda i: (0, 0)),       # bn scale
        pl.BlockSpec((1, Cp), lambda i: (0, 0)),       # bn shift
    ]

    if residual is not None:
        mode = "residual"
        r_p = jnp.pad(residual.astype(jnp.float32),
                      ((0, 0), (0, Cp - residual.shape[1])))
        in_arrays.append(r_p)
        in_specs.append(pl.BlockSpec((tm, Cp), lambda i: (i, 0)))
    elif shortcut is not None:
        mode = "shortcut"
        p3, w3, b3 = shortcut
        K3 = p3.shape[1]
        w3_p = jnp.pad(w3, ((0, 0), (0, pad_c))).astype(jnp.bfloat16)
        b3_p = jnp.pad(b3, (0, pad_c)).reshape(1, Cp).astype(jnp.float32)
        in_arrays += [p3.astype(jnp.bfloat16), w3_p, b3_p]
        in_specs += [
            pl.BlockSpec((tm, K3), lambda i: (i, 0)),  # 1x1 shortcut patches
            pl.BlockSpec((K3, Cp), lambda i: (0, 0)),  # 1x1 shortcut weight
            pl.BlockSpec((1, Cp), lambda i: (0, 0)),   # shortcut bias
        ]
    else:
        mode = "plain"

    out = pl.pallas_call(
        functools.partial(_conv_bn_kernel, mode=mode, apply_relu=apply_relu),
        out_shape=jax.ShapeDtypeStruct((M, Cp), jnp.float32),
        grid_spec=pltpu.PrefetchScalarGridSpec(
            num_scalar_prefetch=0,
            grid=grid,
            in_specs=in_specs,
            out_specs=pl.BlockSpec((tm, Cp), lambda i: (i, 0)),
        ),
        compiler_params=pltpu.CompilerParams(dimension_semantics=("parallel",)),
    )(*in_arrays)
    return out[:, :Cout]


# ---------------------------------------------------------------------------
# Glue: im2col on NHWC, columns ordered (ky, kx, cin) to match HWIO weights
# ---------------------------------------------------------------------------
def _im2col_nhwc(x, kh, kw, stride, pad):
    N, H, W, C = x.shape
    if pad:
        x = jnp.pad(x, ((0, 0), (pad, pad), (pad, pad), (0, 0)))
    Hp, Wp = H + 2 * pad, W + 2 * pad
    Hout = (Hp - kh) // stride + 1
    Wout = (Wp - kw) // stride + 1
    cols = []
    for ky in range(kh):
        for kx in range(kw):
            sl = x[:, ky:ky + stride * (Hout - 1) + 1:stride,
                     kx:kx + stride * (Wout - 1) + 1:stride, :]   # (N,Hout,Wout,C)
            cols.append(sl)
    p = jnp.concatenate(cols, axis=-1).reshape(N * Hout * Wout, kh * kw * C)
    return p, Hout, Wout


def _w_hwio(w):
    """(Cout, Cin, kh, kw) -> (kh*kw*Cin, Cout) matching (ky, kx, cin) column order."""
    cout = w.shape[0]
    return jnp.transpose(w, (2, 3, 1, 0)).reshape(-1, cout)


# ---------------------------------------------------------------------------
# Residual block forward (NHWC activations)
# ---------------------------------------------------------------------------
def residual_forward_nhwc(x, p, strides):
    N, H, W, Cin = x.shape
    Cout = p["w1"].shape[0]

    # conv1 + bn1 + relu
    patches1, Ho, Wo = _im2col_nhwc(x, 3, 3, strides, 1)
    M = N * Ho * Wo
    scale1 = p["g1"] * jax.lax.rsqrt(p["rv1"] + BN_EPS)
    shift1 = p["be1"] + (p["cb1"] - p["rm1"]) * scale1
    y1 = fused_conv_bn(patches1, _w_hwio(p["w1"]), scale1, shift1, apply_relu=True)
    y1_img = y1.reshape(N, Ho, Wo, Cout)

    # conv2 + bn2 + shortcut + relu — single fused pallas_call
    patches2, _, _ = _im2col_nhwc(y1_img, 3, 3, 1, 1)
    scale2 = p["g2"] * jax.lax.rsqrt(p["rv2"] + BN_EPS)
    shift2 = p["be2"] + (p["cb2"] - p["rm2"]) * scale2

    if "w3" in p:
        # 1x1 strided projection shortcut fused into the conv2 kernel
        patches3 = x[:, ::strides, ::strides, :].reshape(M, Cin)
        y2 = fused_conv_bn(patches2, _w_hwio(p["w2"]), scale2, shift2,
                           shortcut=(patches3, _w_hwio(p["w3"]), p["cb3"]),
                           apply_relu=True)
    else:
        # identity shortcut streamed in as a residual tile
        y2 = fused_conv_bn(patches2, _w_hwio(p["w2"]), scale2, shift2,
                           residual=x.reshape(M, Cin), apply_relu=True)
    return y2.reshape(N, Ho, Wo, Cout)


def s1_res_forward(x_pyramid, params):
    def run_single(x_nchw):
        x = jnp.transpose(x_nchw, (0, 2, 3, 1))           # NCHW -> NHWC (once)
        x = residual_forward_nhwc(x, params[0], 2)        # Residual(3, 48, strides=2)
        x = residual_forward_nhwc(x, params[1], 1)        # Residual(48, 48)
        x = residual_forward_nhwc(x, params[2], 2)        # Residual(48, 96, strides=2)
        return jnp.transpose(x, (0, 3, 1, 2))             # back to NCHW
    if isinstance(x_pyramid, list):
        return [run_single(x) for x in x_pyramid]
    return run_single(x_pyramid)


# ---------------------------------------------------------------------------
# Deterministic parameter init (matching nn.Module shapes)
# ---------------------------------------------------------------------------
def init_residual_params(key, cin, cout, strides):
    ks = jax.random.split(key, 14)
    p = {
        "w1": jax.random.normal(ks[0], (cout, cin, 3, 3), jnp.float32) * 0.1,
        "cb1": jax.random.normal(ks[1], (cout,), jnp.float32) * 0.1,
        "w2": jax.random.normal(ks[2], (cout, cout, 3, 3), jnp.float32) * 0.1,
        "cb2": jax.random.normal(ks[3], (cout,), jnp.float32) * 0.1,
        "g1": 1.0 + 0.1 * jax.random.normal(ks[4], (cout,), jnp.float32),
        "be1": 0.1 * jax.random.normal(ks[5], (cout,), jnp.float32),
        "rm1": 0.1 * jax.random.normal(ks[6], (cout,), jnp.float32),
        "rv1": 0.5 + jnp.abs(jax.random.normal(ks[7], (cout,), jnp.float32)) * 0.5,
        "g2": 1.0 + 0.1 * jax.random.normal(ks[8], (cout,), jnp.float32),
        "be2": 0.1 * jax.random.normal(ks[9], (cout,), jnp.float32),
        "rm2": 0.1 * jax.random.normal(ks[10], (cout,), jnp.float32),
        "rv2": 0.5 + jnp.abs(jax.random.normal(ks[11], (cout,), jnp.float32)) * 0.5,
    }
    if strides > 1 or cin != cout:
        p["w3"] = jax.random.normal(ks[12], (cout, cin, 1, 1), jnp.float32) * 0.1
        p["cb3"] = jax.random.normal(ks[13], (cout,), jnp.float32) * 0.1
    return p


# ---------------------------------------------------------------------------
# Pure-JAX reference (f32 lax conv, NCHW) for correctness check
# ---------------------------------------------------------------------------
def _conv_ref(x, w, b, stride, pad):
    y = jax.lax.conv_general_dilated(
        x, w, (stride, stride), ((pad, pad), (pad, pad)),
        dimension_numbers=("NCHW", "OIHW", "NCHW"),
        precision=jax.lax.Precision.HIGHEST)
    return y + b[None, :, None, None]


def _bn_ref(x, g, be, rm, rv):
    return ((x - rm[None, :, None, None])
            / jnp.sqrt(rv[None, :, None, None] + BN_EPS)
            * g[None, :, None, None] + be[None, :, None, None])


def residual_ref(x, p, strides):
    y = jax.nn.relu(_bn_ref(_conv_ref(x, p["w1"], p["cb1"], strides, 1),
                            p["g1"], p["be1"], p["rm1"], p["rv1"]))
    y = _bn_ref(_conv_ref(y, p["w2"], p["cb2"], 1, 1),
                p["g2"], p["be2"], p["rm2"], p["rv2"])
    xr = _conv_ref(x, p["w3"], p["cb3"], strides, 0) if "w3" in p else x
    return jax.nn.relu(y + xr)


def s1_res_ref(x, params):
    x = residual_ref(x, params[0], 2)
    x = residual_ref(x, params[1], 1)
    x = residual_ref(x, params[2], 2)
    return x


# ---------------------------------------------------------------------------
if __name__ == "__main__":
    key = jax.random.PRNGKey(0)
    kx, k0, k1, k2 = jax.random.split(key, 4)

    # small deterministic input, NCHW (3 input channels as the module requires)
    x = jax.random.normal(kx, (2, 3, 16, 16), jnp.float32)

    params = [
        init_residual_params(k0, 3, 48, 2),
        init_residual_params(k1, 48, 48, 1),
        init_residual_params(k2, 48, 96, 2),
    ]

    run = jax.jit(lambda inp: s1_res_forward(inp, params))
    out = jax.block_until_ready(run(x))
    assert out.shape == (2, 96, 4, 4), out.shape

    # Correctness vs f32 reference.  Kernel uses bf16 MXU operands (f32 accumulation),
    # so the tolerance is set for bf16 operand rounding across the 3 stacked blocks.
    ref = jax.block_until_ready(s1_res_ref(x, params))
    max_err = float(jnp.max(jnp.abs(out - ref)))
    ref_scale = max(float(jnp.max(jnp.abs(ref))), 1.0)
    assert max_err <= 5e-2 * ref_scale, (max_err, ref_scale)

    # also exercise the list-of-tensors (pyramid) path of the module
    run_pyr = jax.jit(lambda inps: s1_res_forward(inps, params))
    pyr_out = jax.block_until_ready(run_pyr([x, x[:, :, :8, :8]]))
    assert pyr_out[0].shape == (2, 96, 4, 4) and pyr_out[1].shape == (2, 96, 2, 2)

    print("KERNEL_OK")
</pallas_src>

<mosaic_0001>
module attributes {stable_mosaic.version = 11 : i64} {
  func.func @_conv_bn_kernel(%arg0: i32, %arg1: memref<64x27xbf16, #tpu.memory_space<vmem>>, %arg2: memref<27x128xbf16, #tpu.memory_space<vmem>>, %arg3: memref<1x128xf32, #tpu.memory_space<vmem>>, %arg4: memref<1x128xf32, #tpu.memory_space<vmem>>, %arg5: memref<64x128xf32, #tpu.memory_space<vmem>>) attributes {dimension_semantics = [#tpu.dimension_semantics<parallel>], iteration_bounds = array<i64: 2>, scalar_prefetch = 0 : i64, scratch_operands = 0 : i64, tpu.core_type = #tpu.core_type<tc>, window_params = [{transform_indices = @transform_0, window_bounds = array<i64: 64, 27>}, {pipeline_mode = #tpu.pipeline_mode<synchronous>, transform_indices = @transform_1, window_bounds = array<i64: 27, 128>}, {pipeline_mode = #tpu.pipeline_mode<synchronous>, transform_indices = @transform_2, window_bounds = array<i64: 1, 128>}, {pipeline_mode = #tpu.pipeline_mode<synchronous>, transform_indices = @transform_3, window_bounds = array<i64: 1, 128>}, {transform_indices = @transform_4, window_bounds = array<i64: 64, 128>}]} {
    %c0 = arith.constant 0 : index
    %c0_0 = arith.constant 0 : index
    %0 = vector.load %arg1[%c0, %c0_0] : memref<64x27xbf16, #tpu.memory_space<vmem>>, vector<64x27xbf16>
    %c0_1 = arith.constant 0 : index
    %c0_2 = arith.constant 0 : index
    %1 = vector.load %arg2[%c0_1, %c0_2] : memref<27x128xbf16, #tpu.memory_space<vmem>>, vector<27x128xbf16>
    %cst = arith.constant dense<0.000000e+00> : vector<64x128xf32>
    %2 = tpu.matmul %0, %1, %cst {dimension_numbers = #tpu.dot_dimension_numbers<[1], [0], [0], [1], [0, 0, 1, 1], [], []>} : vector<64x27xbf16>, vector<27x128xbf16>, vector<64x128xf32> -> vector<64x128xf32>
    %c0_3 = arith.constant 0 : index
    %c0_4 = arith.constant 0 : index
    %3 = vector.load %arg3[%c0_3, %c0_4] : memref<1x128xf32, #tpu.memory_space<vmem>>, vector<1x128xf32>
    %4 = vector.broadcast %3 : vector<1x128xf32> to vector<64x128xf32>
    %5 = arith.mulf %2, %4 : vector<64x128xf32>
    %c0_5 = arith.constant 0 : index
    %c0_6 = arith.constant 0 : index
    %6 = vector.load %arg4[%c0_5, %c0_6] : memref<1x128xf32, #tpu.memory_space<vmem>>, vector<1x128xf32>
    %7 = vector.broadcast %6 : vector<1x128xf32> to vector<64x128xf32>
    %8 = arith.addf %5, %7 : vector<64x128xf32>
    %cst_7 = arith.constant 0.000000e+00 : f32
    %9 = vector.broadcast %cst_7 : f32 to vector<64x128xf32>
    %10 = arith.maximumf %8, %9 : vector<64x128xf32>
    %c0_8 = arith.constant 0 : index
    %c0_9 = arith.constant 0 : index
    %11 = vector.load %arg5[%c0_8, %c0_9] : memref<64x128xf32, #tpu.memory_space<vmem>>, vector<64x128xf32>
    tpu.vector_store %arg5[%c0_8, %c0_9], %10 {strides = array<i32>} : memref<64x128xf32, #tpu.memory_space<vmem>>, vector<64x128xf32>,
    return
  }
  func.func @transform_0(%arg0: i32) -> (i32, i32) {
    %c0_i32 = arith.constant 0 : i32
    %c0_i32_0 = arith.constant 0 : i32
    return %arg0, %c0_i32 : i32, i32
  }
  func.func @transform_1(%arg0: i32) -> (i32, i32) {
    %c0_i32 = arith.constant 0 : i32
    %c0_i32_0 = arith.constant 0 : i32
    %c0_i32_1 = arith.constant 0 : i32
    return %c0_i32, %c0_i32_0 : i32, i32
  }
  func.func @transform_2(%arg0: i32) -> (i32, i32) {
    %c0_i32 = arith.constant 0 : i32
    %c0_i32_0 = arith.constant 0 : i32
    %c0_i32_1 = arith.constant 0 : i32
    return %c0_i32, %c0_i32_0 : i32, i32
  }
  func.func @transform_3(%arg0: i32) -> (i32, i32) {
    %c0_i32 = arith.constant 0 : i32
    %c0_i32_0 = arith.constant 0 : i32
    %c0_i32_1 = arith.constant 0 : i32
    return %c0_i32, %c0_i32_0 : i32, i32
  }
  func.func @transform_4(%arg0: i32) -> (i32, i32) {
    %c0_i32 = arith.constant 0 : i32
    %c0_i32_0 = arith.constant 0 : i32
    return %arg0, %c0_i32 : i32, i32
  }
}

module attributes {stable_mosaic.version = 11 : i64} {
  func.func @_conv_bn_kernel(%arg0: i32, %arg1: memref<64x432xbf16, #tpu.memory_space<vmem>>, %arg2: memref<432x128xbf16, #tpu.memory_space<vmem>>, %arg3: memref<1x128xf32, #tpu.memory_space<vmem>>, %arg4: memref<1x128xf32, #tpu.memory_space<vmem>>, %arg5: memref<64x128xf32, #tpu.memory_space<vmem>>) attributes {dimension_semantics = [#tpu.dimension_semantics<parallel>], iteration_bounds = array<i64: 2>, scalar_prefetch = 0 : i64, scratch_operands = 0 : i64, tpu.core_type = #tpu.core_type<tc>, window_params = [{transform_indices = @transform_0, window_bounds = array<i64: 64, 432>}, {pipeline_mode = #tpu.pipeline_mode<synchronous>, transform_indices = @transform_1, window_bounds = array<i64: 432, 128>}, {pipeline_mode = #tpu.pipeline_mode<synchronous>, transform_indices = @transform_2, window_bounds = array<i64: 1, 128>}, {pipeline_mode = #tpu.pipeline_mode<synchronous>, transform_indices = @transform_3, window_bounds = array<i64: 1, 128>}, {transform_indices = @transform_4, window_bounds = array<i64: 64, 128>}]} {
    %c0 = arith.constant 0 : index
    %c0_0 = arith.constant 0 : index
    %0 = vector.load %arg1[%c0, %c0_0] : memref<64x432xbf16, #tpu.memory_space<vmem>>, vector<64x432xbf16>
    %c0_1 = arith.constant 0 : index
    %c0_2 = arith.constant 0 : index
    %1 = vector.load %arg2[%c0_1, %c0_2] : memref<432x128xbf16, #tpu.memory_space<vmem>>, vector<432x128xbf16>
    %cst = arith.constant dense<0.000000e+00> : vector<64x128xf32>
    %2 = tpu.matmul %0, %1, %cst {dimension_numbers = #tpu.dot_dimension_numbers<[1], [0], [0], [1], [0, 0, 1, 1], [], []>} : vector<64x432xbf16>, vector<432x128xbf16>, vector<64x128xf32> -> vector<64x128xf32>
    %c0_3 = arith.constant 0 : index
    %c0_4 = arith.constant 0 : index
    %3 = vector.load %arg3[%c0_3, %c0_4] : memref<1x128xf32, #tpu.memory_space<vmem>>, vector<1x128xf32>
    %4 = vector.broadcast %3 : vector<1x128xf32> to vector<64x128xf32>
    %5 = arith.mulf %2, %4 : vector<64x128xf32>
    %c0_5 = arith.constant 0 : index
    %c0_6 = arith.constant 0 : index
    %6 = vector.load %arg4[%c0_5, %c0_6] : memref<1x128xf32, #tpu.memory_space<vmem>>, vector<1x128xf32>
    %7 = vector.broadcast %6 : vector<1x128xf32> to vector<64x128xf32>
    %8 = arith.addf %5, %7 : vector<64x128xf32>
    %cst_7 = arith.constant 0.000000e+00 : f32
    %9 = vector.broadcast %cst_7 : f32 to vector<64x128xf32>
    %10 = arith.maximumf %8, %9 : vector<64x128xf32>
    %c0_8 = arith.constant 0 : index
    %c0_9 = arith.constant 0 : index
    %11 = vector.load %arg5[%c0_8, %c0_9] : memref<64x128xf32, #tpu.memory_space<vmem>>, vector<64x128xf32>
    tpu.vector_store %arg5[%c0_8, %c0_9], %10 {strides = array<i32>} : memref<64x128xf32, #tpu.memory_space<vmem>>, vector<64x128xf32>,
    return
  }
  func.func @transform_0(%arg0: i32) -> (i32, i32) {
    %c0_i32 = arith.constant 0 : i32
    %c0_i32_0 = arith.constant 0 : i32
    return %arg0, %c0_i32 : i32, i32
  }
  func.func @transform_1(%arg0: i32) -> (i32, i32) {
    %c0_i32 = arith.constant 0 : i32
    %c0_i32_0 = arith.constant 0 : i32
    %c0_i32_1 = arith.constant 0 : i32
    return %c0_i32, %c0_i32_0 : i32, i32
  }
  func.func @transform_2(%arg0: i32) -> (i32, i32) {
    %c0_i32 = arith.constant 0 : i32
    %c0_i32_0 = arith.constant 0 : i32
    %c0_i32_1 = arith.constant 0 : i32
    return %c0_i32, %c0_i32_0 : i32, i32
  }
  func.func @transform_3(%arg0: i32) -> (i32, i32) {
    %c0_i32 = arith.constant 0 : i32
    %c0_i32_0 = arith.constant 0 : i32
    %c0_i32_1 = arith.constant 0 : i32
    return %c0_i32, %c0_i32_0 : i32, i32
  }
  func.func @transform_4(%arg0: i32) -> (i32, i32) {
    %c0_i32 = arith.constant 0 : i32
    %c0_i32_0 = arith.constant 0 : i32
    return %arg0, %c0_i32 : i32, i32
  }
}

module attributes {stable_mosaic.version = 11 : i64} {
  func.func @_conv_bn_kernel(%arg0: i32, %arg1: memref<64x432xbf16, #tpu.memory_space<vmem>>, %arg2: memref<432x128xbf16, #tpu.memory_space<vmem>>, %arg3: memref<1x128xf32, #tpu.memory_space<vmem>>, %arg4: memref<1x128xf32, #tpu.memory_space<vmem>>, %arg5: memref<64x3xbf16, #tpu.memory_space<vmem>>, %arg6: memref<3x128xbf16, #tpu.memory_space<vmem>>, %arg7: memref<1x128xf32, #tpu.memory_space<vmem>>, %arg8: memref<64x128xf32, #tpu.memory_space<vmem>>) attributes {dimension_semantics = [#tpu.dimension_semantics<parallel>], iteration_bounds = array<i64: 2>, scalar_prefetch = 0 : i64, scratch_operands = 0 : i64, tpu.core_type = #tpu.core_type<tc>, window_params = [{transform_indices = @transform_0, window_bounds = array<i64: 64, 432>}, {pipeline_mode = #tpu.pipeline_mode<synchronous>, transform_indices = @transform_1, window_bounds = array<i64: 432, 128>}, {pipeline_mode = #tpu.pipeline_mode<synchronous>, transform_indices = @transform_2, window_bounds = array<i64: 1, 128>}, {pipeline_mode = #tpu.pipeline_mode<synchronous>, transform_indices = @transform_3, window_bounds = array<i64: 1, 128>}, {transform_indices = @transform_4, window_bounds = array<i64: 64, 3>}, {pipeline_mode = #tpu.pipeline_mode<synchronous>, transform_indices = @transform_5, window_bounds = array<i64: 3, 128>}, {pipeline_mode = #tpu.pipeline_mode<synchronous>, transform_indices = @transform_6, window_bounds = array<i64: 1, 128>}, {transform_indices = @transform_7, window_bounds = array<i64: 64, 128>}]} {
    %c0 = arith.constant 0 : index
    %c0_0 = arith.constant 0 : index
    %0 = vector.load %arg1[%c0, %c0_0] : memref<64x432xbf16, #tpu.memory_space<vmem>>, vector<64x432xbf16>
    %c0_1 = arith.constant 0 : index
    %c0_2 = arith.constant 0 : index
    %1 = vector.load %arg2[%c0_1, %c0_2] : memref<432x128xbf16, #tpu.memory_space<vmem>>, vector<432x128xbf16>
    %cst = arith.constant dense<0.000000e+00> : vector<64x128xf32>
    %2 = tpu.matmul %0, %1, %cst {dimension_numbers = #tpu.dot_dimension_numbers<[1], [0], [0], [1], [0, 0, 1, 1], [], []>} : vector<64x432xbf16>, vector<432x128xbf16>, vector<64x128xf32> -> vector<64x128xf32>
    %c0_3 = arith.constant 0 : index
    %c0_4 = arith.constant 0 : index
    %3 = vector.load %arg3[%c0_3, %c0_4] : memref<1x128xf32, #tpu.memory_space<vmem>>, vector<1x128xf32>
    %4 = vector.broadcast %3 : vector<1x128xf32> to vector<64x128xf32>
    %5 = arith.mulf %2, %4 : vector<64x128xf32>
    %c0_5 = arith.constant 0 : index
    %c0_6 = arith.constant 0 : index
    %6 = vector.load %arg4[%c0_5, %c0_6] : memref<1x128xf32, #tpu.memory_space<vmem>>, vector<1x128xf32>
    %7 = vector.broadcast %6 : vector<1x128xf32> to vector<64x128xf32>
    %8 = arith.addf %5, %7 : vector<64x128xf32>
    %c0_7 = arith.constant 0 : index
    %c0_8 = arith.constant 0 : index
    %9 = vector.load %arg5[%c0_7, %c0_8] : memref<64x3xbf16, #tpu.memory_space<vmem>>, vector<64x3xbf16>
    %c0_9 = arith.constant 0 : index
    %c0_10 = arith.constant 0 : index
    %10 = vector.load %arg6[%c0_9, %c0_10] : memref<3x128xbf16, #tpu.memory_space<vmem>>, vector<3x128xbf16>
    %cst_11 = arith.constant dense<0.000000e+00> : vector<64x128xf32>
    %11 = tpu.matmul %9, %10, %cst_11 {dimension_numbers = #tpu.dot_dimension_numbers<[1], [0], [0], [1], [0, 0, 1, 1], [], []>} : vector<64x3xbf16>, vector<3x128xbf16>, vector<64x128xf32> -> vector<64x128xf32>
    %12 = arith.addf %8, %11 : vector<64x128xf32>
    %c0_12 = arith.constant 0 : index
    %c0_13 = arith.constant 0 : index
    %13 = vector.load %arg7[%c0_12, %c0_13] : memref<1x128xf32, #tpu.memory_space<vmem>>, vector<1x128xf32>
    %14 = vector.broadcast %13 : vector<1x128xf32> to vector<64x128xf32>
    %15 = arith.addf %12, %14 : vector<64x128xf32>
    %cst_14 = arith.constant 0.000000e+00 : f32
    %16 = vector.broadcast %cst_14 : f32 to vector<64x128xf32>
    %17 = arith.maximumf %15, %16 : vector<64x128xf32>
    %c0_15 = arith.constant 0 : index
    %c0_16 = arith.constant 0 : index
    %18 = vector.load %arg8[%c0_15, %c0_16] : memref<64x128xf32, #tpu.memory_space<vmem>>, vector<64x128xf32>
    tpu.vector_store %arg8[%c0_15, %c0_16], %17 {strides = array<i32>} : memref<64x128xf32, #tpu.memory_space<vmem>>, vector<64x128xf32>,
    return
  }
  func.func @transform_0(%arg0: i32) -> (i32, i32) {
    %c0_i32 = arith.constant 0 : i32
    %c0_i32_0 = arith.constant 0 : i32
    return %arg0, %c0_i32 : i32, i32
  }
  func.func @transform_1(%arg0: i32) -> (i32, i32) {
    %c0_i32 = arith.constant 0 : i32
    %c0_i32_0 = arith.constant 0 : i32
    %c0_i32_1 = arith.constant 0 : i32
    return %c0_i32, %c0_i32_0 : i32, i32
  }
  func.func @transform_2(%arg0: i32) -> (i32, i32) {
    %c0_i32 = arith.constant 0 : i32
    %c0_i32_0 = arith.constant 0 : i32
    %c0_i32_1 = arith.constant 0 : i32
    return %c0_i32, %c0_i32_0 : i32, i32
  }
  func.func @transform_3(%arg0: i32) -> (i32, i32) {
    %c0_i32 = arith.constant 0 : i32
    %c0_i32_0 = arith.constant 0 : i32
    %c0_i32_1 = arith.constant 0 : i32
    return %c0_i32, %c0_i32_0 : i32, i32
  }
  func.func @transform_4(%arg0: i32) -> (i32, i32) {
    %c0_i32 = arith.constant 0 : i32
    %c0_i32_0 = arith.constant 0 : i32
    return %arg0, %c0_i32 : i32, i32
  }
  func.func @transform_5(%arg0: i32) -> (i32, i32) {
    %c0_i32 = arith.constant 0 : i32
    %c0_i32_0 = arith.constant 0 : i32
    %c0_i32_1 = arith.constant 0 : i32
    return %c0_i32, %c0_i32_0 : i32, i32
  }
  func.func @transform_6(%arg0: i32) -> (i32, i32) {
    %c0_i32 = arith.constant 0 : i32
    %c0_i32_0 = arith.constant 0 : i32
    %c0_i32_1 = arith.constant 0 : i32
    return %c0_i32, %c0_i32_0 : i32, i32
  }
  func.func @transform_7(%arg0: i32) -> (i32, i32) {
    %c0_i32 = arith.constant 0 : i32
    %c0_i32_0 = arith.constant 0 : i32
    return %arg0, %c0_i32 : i32, i32
  }
}

module attributes {stable_mosaic.version = 11 : i64} {
  func.func @_conv_bn_kernel(%arg0: i32, %arg1: memref<64x432xbf16, #tpu.memory_space<vmem>>, %arg2: memref<432x128xbf16, #tpu.memory_space<vmem>>, %arg3: memref<1x128xf32, #tpu.memory_space<vmem>>, %arg4: memref<1x128xf32, #tpu.memory_space<vmem>>, %arg5: memref<64x128xf32, #tpu.memory_space<vmem>>, %arg6: memref<64x128xf32, #tpu.memory_space<vmem>>) attributes {dimension_semantics = [#tpu.dimension_semantics<parallel>], iteration_bounds = array<i64: 2>, scalar_prefetch = 0 : i64, scratch_operands = 0 : i64, tpu.core_type = #tpu.core_type<tc>, window_params = [{transform_indices = @transform_0, window_bounds = array<i64: 64, 432>}, {pipeline_mode = #tpu.pipeline_mode<synchronous>, transform_indices = @transform_1, window_bounds = array<i64: 432, 128>}, {pipeline_mode = #tpu.pipeline_mode<synchronous>, transform_indices = @transform_2, window_bounds = array<i64: 1, 128>}, {pipeline_mode = #tpu.pipeline_mode<synchronous>, transform_indices = @transform_3, window_bounds = array<i64: 1, 128>}, {transform_indices = @transform_4, window_bounds = array<i64: 64, 128>}, {transform_indices = @transform_5, window_bounds = array<i64: 64, 128>}]} {
    %c0 = arith.constant 0 : index
    %c0_0 = arith.constant 0 : index
    %0 = vector.load %arg1[%c0, %c0_0] : memref<64x432xbf16, #tpu.memory_space<vmem>>, vector<64x432xbf16>
    %c0_1 = arith.constant 0 : index
    %c0_2 = arith.constant 0 : index
    %1 = vector.load %arg2[%c0_1, %c0_2] : memref<432x128xbf16, #tpu.memory_space<vmem>>, vector<432x128xbf16>
    %cst = arith.constant dense<0.000000e+00> : vector<64x128xf32>
    %2 = tpu.matmul %0, %1, %cst {dimension_numbers = #tpu.dot_dimension_numbers<[1], [0], [0], [1], [0, 0, 1, 1], [], []>} : vector<64x432xbf16>, vector<432x128xbf16>, vector<64x128xf32> -> vector<64x128xf32>
    %c0_3 = arith.constant 0 : index
    %c0_4 = arith.constant 0 : index
    %3 = vector.load %arg3[%c0_3, %c0_4] : memref<1x128xf32, #tpu.memory_space<vmem>>, vector<1x128xf32>
    %4 = vector.broadcast %3 : vector<1x128xf32> to vector<64x128xf32>
    %5 = arith.mulf %2, %4 : vector<64x128xf32>
    %c0_5 = arith.constant 0 : index
    %c0_6 = arith.constant 0 : index
    %6 = vector.load %arg4[%c0_5, %c0_6] : memref<1x128xf32, #tpu.memory_space<vmem>>, vector<1x128xf32>
    %7 = vector.broadcast %6 : vector<1x128xf32> to vector<64x128xf32>
    %8 = arith.addf %5, %7 : vector<64x128xf32>
    %c0_7 = arith.constant 0 : index
    %c0_8 = arith.constant 0 : index
    %9 = vector.load %arg5[%c0_7, %c0_8] : memref<64x128xf32, #tpu.memory_space<vmem>>, vector<64x128xf32>
    %10 = arith.addf %8, %9 : vector<64x128xf32>
    %cst_9 = arith.constant 0.000000e+00 : f32
    %11 = vector.broadcast %cst_9 : f32 to vector<64x128xf32>
    %12 = arith.maximumf %10, %11 : vector<64x128xf32>
    %c0_10 = arith.constant 0 : index
    %c0_11 = arith.constant 0 : index
    %13 = vector.load %arg6[%c0_10, %c0_11] : memref<64x128xf32, #tpu.memory_space<vmem>>, vector<64x128xf32>
    tpu.vector_store %arg6[%c0_10, %c0_11], %12 {strides = array<i32>} : memref<64x128xf32, #tpu.memory_space<vmem>>, vector<64x128xf32>,
    return
  }
  func.func @transform_0(%arg0: i32) -> (i32, i32) {
    %c0_i32 = arith.constant 0 : i32
    %c0_i32_0 = arith.constant 0 : i32
    return %arg0, %c0_i32 : i32, i32
  }
  func.func @transform_1(%arg0: i32) -> (i32, i32) {
    %c0_i32 = arith.constant 0 : i32
    %c0_i32_0 = arith.constant 0 : i32
    %c0_i32_1 = arith.constant 0 : i32
    return %c0_i32, %c0_i32_0 : i32, i32
  }
  func.func @transform_2(%arg0: i32) -> (i32, i32) {
    %c0_i32 = arith.constant 0 : i32
    %c0_i32_0 = arith.constant 0 : i32
    %c0_i32_1 = arith.constant 0 : i32
    return %c0_i32, %c0_i32_0 : i32, i32
  }
  func.func @transform_3(%arg0: i32) -> (i32, i32) {
    %c0_i32 = arith.constant 0 : i32
    %c0_i32_0 = arith.constant 0 : i32
    %c0_i32_1 = arith.constant 0 : i32
    return %c0_i32, %c0_i32_0 : i32, i32
  }
  func.func @transform_4(%arg0: i32) -> (i32, i32) {
    %c0_i32 = arith.constant 0 : i32
    %c0_i32_0 = arith.constant 0 : i32
    return %arg0, %c0_i32 : i32, i32
  }
  func.func @transform_5(%arg0: i32) -> (i32, i32) {
    %c0_i32 = arith.constant 0 : i32
    %c0_i32_0 = arith.constant 0 : i32
    return %arg0, %c0_i32 : i32, i32
  }
}

module attributes {stable_mosaic.version = 11 : i64} {
  func.func @_conv_bn_kernel(%arg0: i32, %arg1: memref<16x432xbf16, #tpu.memory_space<vmem>>, %arg2: memref<432x128xbf16, #tpu.memory_space<vmem>>, %arg3: memref<1x128xf32, #tpu.memory_space<vmem>>, %arg4: memref<1x128xf32, #tpu.memory_space<vmem>>, %arg5: memref<16x128xf32, #tpu.memory_space<vmem>>) attributes {dimension_semantics = [#tpu.dimension_semantics<parallel>], iteration_bounds = array<i64: 2>, scalar_prefetch = 0 : i64, scratch_operands = 0 : i64, tpu.core_type = #tpu.core_type<tc>, window_params = [{transform_indices = @transform_0, window_bounds = array<i64: 16, 432>}, {pipeline_mode = #tpu.pipeline_mode<synchronous>, transform_indices = @transform_1, window_bounds = array<i64: 432, 128>}, {pipeline_mode = #tpu.pipeline_mode<synchronous>, transform_indices = @transform_2, window_bounds = array<i64: 1, 128>}, {pipeline_mode = #tpu.pipeline_mode<synchronous>, transform_indices = @transform_3, window_bounds = array<i64: 1, 128>}, {transform_indices = @transform_4, window_bounds = array<i64: 16, 128>}]} {
    %c0 = arith.constant 0 : index
    %c0_0 = arith.constant 0 : index
    %0 = vector.load %arg1[%c0, %c0_0] : memref<16x432xbf16, #tpu.memory_space<vmem>>, vector<16x432xbf16>
    %c0_1 = arith.constant 0 : index
    %c0_2 = arith.constant 0 : index
    %1 = vector.load %arg2[%c0_1, %c0_2] : memref<432x128xbf16, #tpu.memory_space<vmem>>, vector<432x128xbf16>
    %cst = arith.constant dense<0.000000e+00> : vector<16x128xf32>
    %2 = tpu.matmul %0, %1, %cst {dimension_numbers = #tpu.dot_dimension_numbers<[1], [0], [0], [1], [0, 0, 1, 1], [], []>} : vector<16x432xbf16>, vector<432x128xbf16>, vector<16x128xf32> -> vector<16x128xf32>
    %c0_3 = arith.constant 0 : index
    %c0_4 = arith.constant 0 : index
    %3 = vector.load %arg3[%c0_3, %c0_4] : memref<1x128xf32, #tpu.memory_space<vmem>>, vector<1x128xf32>
    %4 = vector.broadcast %3 : vector<1x128xf32> to vector<16x128xf32>
    %5 = arith.mulf %2, %4 : vector<16x128xf32>
    %c0_5 = arith.constant 0 : index
    %c0_6 = arith.constant 0 : index
    %6 = vector.load %arg4[%c0_5, %c0_6] : memref<1x128xf32, #tpu.memory_space<vmem>>, vector<1x128xf32>
    %7 = vector.broadcast %6 : vector<1x128xf32> to vector<16x128xf32>
    %8 = arith.addf %5, %7 : vector<16x128xf32>
    %cst_7 = arith.constant 0.000000e+00 : f32
    %9 = vector.broadcast %cst_7 : f32 to vector<16x128xf32>
    %10 = arith.maximumf %8, %9 : vector<16x128xf32>
    %c0_8 = arith.constant 0 : index
    %c0_9 = arith.constant 0 : index
    %11 = vector.load %arg5[%c0_8, %c0_9] : memref<16x128xf32, #tpu.memory_space<vmem>>, vector<16x128xf32>
    tpu.vector_store %arg5[%c0_8, %c0_9], %10 {strides = array<i32>} : memref<16x128xf32, #tpu.memory_space<vmem>>, vector<16x128xf32>,
    return
  }
  func.func @transform_0(%arg0: i32) -> (i32, i32) {
    %c0_i32 = arith.constant 0 : i32
    %c0_i32_0 = arith.constant 0 : i32
    return %arg0, %c0_i32 : i32, i32
  }
  func.func @transform_1(%arg0: i32) -> (i32, i32) {
    %c0_i32 = arith.constant 0 : i32
    %c0_i32_0 = arith.constant 0 : i32
    %c0_i32_1 = arith.constant 0 : i32
    return %c0_i32, %c0_i32_0 : i32, i32
  }
  func.func @transform_2(%arg0: i32) -> (i32, i32) {
    %c0_i32 = arith.constant 0 : i32
    %c0_i32_0 = arith.constant 0 : i32
    %c0_i32_1 = arith.constant 0 : i32
    return %c0_i32, %c0_i32_0 : i32, i32
  }
  func.func @transform_3(%arg0: i32) -> (i32, i32) {
    %c0_i32 = arith.constant 0 : i32
    %c0_i32_0 = arith.constant 0 : i32
    %c0_i32_1 = arith.constant 0 : i32
    return %c0_i32, %c0_i32_0 : i32, i32
  }
  func.func @transform_4(%arg0: i32) -> (i32, i32) {
    %c0_i32 = arith.constant 0 : i32
    %c0_i32_0 = arith.constant 0 : i32
    return %arg0, %c0_i32 : i32, i32
  }
}

module attributes {stable_mosaic.version = 11 : i64} {
  func.func @_conv_bn_kernel(%arg0: i32, %arg1: memref<16x864xbf16, #tpu.memory_space<vmem>>, %arg2: memref<864x128xbf16, #tpu.memory_space<vmem>>, %arg3: memref<1x128xf32, #tpu.memory_space<vmem>>, %arg4: memref<1x128xf32, #tpu.memory_space<vmem>>, %arg5: memref<16x48xbf16, #tpu.memory_space<vmem>>, %arg6: memref<48x128xbf16, #tpu.memory_space<vmem>>, %arg7: memref<1x128xf32, #tpu.memory_space<vmem>>, %arg8: memref<16x128xf32, #tpu.memory_space<vmem>>) attributes {dimension_semantics = [#tpu.dimension_semantics<parallel>], iteration_bounds = array<i64: 2>, scalar_prefetch = 0 : i64, scratch_operands = 0 : i64, tpu.core_type = #tpu.core_type<tc>, window_params = [{transform_indices = @transform_0, window_bounds = array<i64: 16, 864>}, {pipeline_mode = #tpu.pipeline_mode<synchronous>, transform_indices = @transform_1, window_bounds = array<i64: 864, 128>}, {pipeline_mode = #tpu.pipeline_mode<synchronous>, transform_indices = @transform_2, window_bounds = array<i64: 1, 128>}, {pipeline_mode = #tpu.pipeline_mode<synchronous>, transform_indices = @transform_3, window_bounds = array<i64: 1, 128>}, {transform_indices = @transform_4, window_bounds = array<i64: 16, 48>}, {pipeline_mode = #tpu.pipeline_mode<synchronous>, transform_indices = @transform_5, window_bounds = array<i64: 48, 128>}, {pipeline_mode = #tpu.pipeline_mode<synchronous>, transform_indices = @transform_6, window_bounds = array<i64: 1, 128>}, {transform_indices = @transform_7, window_bounds = array<i64: 16, 128>}]} {
    %c0 = arith.constant 0 : index
    %c0_0 = arith.constant 0 : index
    %0 = vector.load %arg1[%c0, %c0_0] : memref<16x864xbf16, #tpu.memory_space<vmem>>, vector<16x864xbf16>
    %c0_1 = arith.constant 0 : index
    %c0_2 = arith.constant 0 : index
    %1 = vector.load %arg2[%c0_1, %c0_2] : memref<864x128xbf16, #tpu.memory_space<vmem>>, vector<864x128xbf16>
    %cst = arith.constant dense<0.000000e+00> : vector<16x128xf32>
    %2 = tpu.matmul %0, %1, %cst {dimension_numbers = #tpu.dot_dimension_numbers<[1], [0], [0], [1], [0, 0, 1, 1], [], []>} : vector<16x864xbf16>, vector<864x128xbf16>, vector<16x128xf32> -> vector<16x128xf32>
    %c0_3 = arith.constant 0 : index
    %c0_4 = arith.constant 0 : index
    %3 = vector.load %arg3[%c0_3, %c0_4] : memref<1x128xf32, #tpu.memory_space<vmem>>, vector<1x128xf32>
    %4 = vector.broadcast %3 : vector<1x128xf32> to vector<16x128xf32>
    %5 = arith.mulf %2, %4 : vector<16x128xf32>
    %c0_5 = arith.constant 0 : index
    %c0_6 = arith.constant 0 : index
    %6 = vector.load %arg4[%c0_5, %c0_6] : memref<1x128xf32, #tpu.memory_space<vmem>>, vector<1x128xf32>
    %7 = vector.broadcast %6 : vector<1x128xf32> to vector<16x128xf32>
    %8 = arith.addf %5, %7 : vector<16x128xf32>
    %c0_7 = arith.constant 0 : index
    %c0_8 = arith.constant 0 : index
    %9 = vector.load %arg5[%c0_7, %c0_8] : memref<16x48xbf16, #tpu.memory_space<vmem>>, vector<16x48xbf16>
    %c0_9 = arith.constant 0 : index
    %c0_10 = arith.constant 0 : index
    %10 = vector.load %arg6[%c0_9, %c0_10] : memref<48x128xbf16, #tpu.memory_space<vmem>>, vector<48x128xbf16>
    %cst_11 = arith.constant dense<0.000000e+00> : vector<16x128xf32>
    %11 = tpu.matmul %9, %10, %cst_11 {dimension_numbers = #tpu.dot_dimension_numbers<[1], [0], [0], [1], [0, 0, 1, 1], [], []>} : vector<16x48xbf16>, vector<48x128xbf16>, vector<16x128xf32> -> vector<16x128xf32>
    %12 = arith.addf %8, %11 : vector<16x128xf32>
    %c0_12 = arith.constant 0 : index
    %c0_13 = arith.constant 0 : index
    %13 = vector.load %arg7[%c0_12, %c0_13] : memref<1x128xf32, #tpu.memory_space<vmem>>, vector<1x128xf32>
    %14 = vector.broadcast %13 : vector<1x128xf32> to vector<16x128xf32>
    %15 = arith.addf %12, %14 : vector<16x128xf32>
    %cst_14 = arith.constant 0.000000e+00 : f32
    %16 = vector.broadcast %cst_14 : f32 to vector<16x128xf32>
    %17 = arith.maximumf %15, %16 : vector<16x128xf32>
    %c0_15 = arith.constant 0 : index
    %c0_16 = arith.constant 0 : index
    %18 = vector.load %arg8[%c0_15, %c0_16] : memref<16x128xf32, #tpu.memory_space<vmem>>, vector<16x128xf32>
    tpu.vector_store %arg8[%c0_15, %c0_16], %17 {strides = array<i32>} : memref<16x128xf32, #tpu.memory_space<vmem>>, vector<16x128xf32>,
    return
  }
  func.func @transform_0(%arg0: i32) -> (i32, i32) {
    %c0_i32 = arith.constant 0 : i32
    %c0_i32_0 = arith.constant 0 : i32
    return %arg0, %c0_i32 : i32, i32
  }
  func.func @transform_1(%arg0: i32) -> (i32, i32) {
    %c0_i32 = arith.constant 0 : i32
    %c0_i32_0 = arith.constant 0 : i32
    %c0_i32_1 = arith.constant 0 : i32
    return %c0_i32, %c0_i32_0 : i32, i32
  }
  func.func @transform_2(%arg0: i32) -> (i32, i32) {
    %c0_i32 = arith.constant 0 : i32
    %c0_i32_0 = arith.constant 0 : i32
    %c0_i32_1 = arith.constant 0 : i32
    return %c0_i32, %c0_i32_0 : i32, i32
  }
  func.func @transform_3(%arg0: i32) -> (i32, i32) {
    %c0_i32 = arith.constant 0 : i32
    %c0_i32_0 = arith.constant 0 : i32
    %c0_i32_1 = arith.constant 0 : i32
    return %c0_i32, %c0_i32_0 : i32, i32
  }
  func.func @transform_4(%arg0: i32) -> (i32, i32) {
    %c0_i32 = arith.constant 0 : i32
    %c0_i32_0 = arith.constant 0 : i32
    return %arg0, %c0_i32 : i32, i32
  }
  func.func @transform_5(%arg0: i32) -> (i32, i32) {
    %c0_i32 = arith.constant 0 : i32
    %c0_i32_0 = arith.constant 0 : i32
    %c0_i32_1 = arith.constant 0 : i32
    return %c0_i32, %c0_i32_0 : i32, i32
  }
  func.func @transform_6(%arg0: i32) -> (i32, i32) {
    %c0_i32 = arith.constant 0 : i32
    %c0_i32_0 = arith.constant 0 : i32
    %c0_i32_1 = arith.constant 0 : i32
    return %c0_i32, %c0_i32_0 : i32, i32
  }
  func.func @transform_7(%arg0: i32) -> (i32, i32) {
    %c0_i32 = arith.constant 0 : i32
    %c0_i32_0 = arith.constant 0 : i32
    return %arg0, %c0_i32 : i32, i32
  }
}

</mosaic_0001>

<llo_original>
// kernel: _lambda_.6
$region0: #{_lambda_.6}
  #allocation0 [shape = 'u32[]', space=smem, size = 0x4, offset = 0x4, fixed_abs, tag = 'smem constant byte address 0x4 - core index']
  #allocation1 [shape = 'u32[72,128]{1,0:T(1,128)}', space=vmem, size = 0x9000, scoped, tag = 'internal scratch']
  %s0 = inlined_call_operand.vmem [shape: bf16[128,27], index: 0, kind: input, shape index: {}]
  %s1 = inlined_call_operand.vmem [shape: bf16[27,128], index: 1, kind: input, shape index: {}]
  %s2 = inlined_call_operand.vmem [shape: f32[1,128], index: 2, kind: input, shape index: {}]
  %s3 = inlined_call_operand.vmem [shape: f32[1,128], index: 3, kind: input, shape index: {}]
  %s4 = inlined_call_operand.vmem [shape: f32[128,128], index: 4, kind: output, shape index: {}]
  %s5 = sld [smem:[#allocation0]]
  $region49: #{_lambda_.6} parent=0
    _
  %s7 = ssub.s32 1, %s5
  %s8 = scalar_select 0, %s7, %s5
  loop: start=0, step=1, limit=4
  $region2: #{_lambda_.6} parent=0 // loop_pre_header
    _
  $region3: #{_lambda_.6} parent=0 // loop_header
    %s10 = sphi 0, %s14
    %p11 = scmp.ge.s32.totalorder %s10, 4
    %s20 = sphi 0, %s22
    %s23 = sphi 0, %s20
    %s24 = sphi 0, %s23
    %s40 = sphi 0, %s24
    %s44 = sphi 0, %s44
    %s46 = sphi 0, %s44
    %s47 = sphi 0, %s46
    %s61 = sphi 0, %s47
    %s65 = sphi 0, %s65
    %s67 = sphi 0, %s65
    %s68 = sphi 0, %s67
    %s82 = sphi 0, %s68
    %s86 = sphi 0, %s86
    %s88 = sphi 0, %s86
    %s89 = sphi 0, %s88
    %s103 = sphi 0, %s89
    %s109 = sphi 0, %s111
    %s112 = sphi 0, %s109
    %s113 = sphi 0, %s112
    %s129 = sphi 0, %s113
  $region4: #{_lambda_.6} parent=0 // loop_header_branch
    %13 = sbr.rel (%p11) target = $region8
  $region5: #{_lambda_.6} parent=0 // loop_body
    %s15 = ssub.s32 %s10, 1
    %s16 = ssub.s32 %s10, 2
    %s17 = sadd.s32 %s10, 1
    %s18 = ssub.s32 %s10, %s17
    %p19 = scmp.eq.s32.totalorder %s18, 0
    %s21 = sadd.s32 %s20, 1
    %s22 = scalar_select %p19, %s20, %s21
    %p25 = pneg %p19
    %p26 = scmp.eq.s32.totalorder %s10, 1
    %p27 = por %p25, %p26
    %p28 = scmp.ne.s32.totalorder %s20, %s23
    %p29 = scmp.eq.s32.totalorder %s10, 0
    %p30 = por %p28, %p29
    %p31 = scmp.ne.s32.totalorder %s20, %s23
    %p32 = scmp.eq.s32.totalorder %s15, 1
    %p33 = por %p31, %p32
    %p34 = scmp.ne.s32.totalorder %s23, %s24
    %p35 = scmp.eq.s32.totalorder %s15, 0
    %p36 = por %p34, %p35
    %p37 = scmp.ne.s32.totalorder %s23, %s24
    %p38 = scmp.eq.s32.totalorder %s16, 1
    %p39 = por %p37, %p38
    %p41 = scmp.ne.s32.totalorder %s24, %s40
    %p42 = scmp.eq.s32.totalorder %s16, 0
    %p43 = por %p41, %p42
    %s45 = sadd.s32 %s44, 1
    %p48 = scmp.eq.s32.totalorder %s10, 1
    %p49 = scmp.ne.s32.totalorder %s44, %s46
    %p50 = scmp.eq.s32.totalorder %s10, 0
    %p51 = por %p49, %p50
    %p52 = scmp.ne.s32.totalorder %s44, %s46
    %p53 = scmp.eq.s32.totalorder %s15, 1
    %p54 = por %p52, %p53
    %p55 = scmp.ne.s32.totalorder %s46, %s47
    %p56 = scmp.eq.s32.totalorder %s15, 0
    %p57 = por %p55, %p56
    %p58 = scmp.ne.s32.totalorder %s46, %s47
    %p59 = scmp.eq.s32.totalorder %s16, 1
    %p60 = por %p58, %p59
    %p62 = scmp.ne.s32.totalorder %s47, %s61
    %p63 = scmp.eq.s32.totalorder %s16, 0
    %p64 = por %p62, %p63
    %s66 = sadd.s32 %s65, 1
    %p69 = scmp.eq.s32.totalorder %s10, 1
    %p70 = scmp.ne.s32.totalorder %s65, %s67
    %p71 = scmp.eq.s32.totalorder %s10, 0
    %p72 = por %p70, %p71
    %p73 = scmp.ne.s32.totalorder %s65, %s67
    %p74 = scmp.eq.s32.totalorder %s15, 1
    %p75 = por %p73, %p74
    %p76 = scmp.ne.s32.totalorder %s67, %s68
    %p77 = scmp.eq.s32.totalorder %s15, 0
    %p78 = por %p76, %p77
    %p79 = scmp.ne.s32.totalorder %s67, %s68
    %p80 = scmp.eq.s32.totalorder %s16, 1
    %p81 = por %p79, %p80
    %p83 = scmp.ne.s32.totalorder %s68, %s82
    %p84 = scmp.eq.s32.totalorder %s16, 0
    %p85 = por %p83, %p84
    %s87 = sadd.s32 %s86, 1
    %p90 = scmp.eq.s32.totalorder %s10, 1
    %p91 = scmp.ne.s32.totalorder %s86, %s88
    %p92 = scmp.eq.s32.totalorder %s10, 0
    %p93 = por %p91, %p92
    %p94 = scmp.ne.s32.totalorder %s86, %s88
    %p95 = scmp.eq.s32.totalorder %s15, 1
    %p96 = por %p94, %p95
    %p97 = scmp.ne.s32.totalorder %s88, %s89
    %p98 = scmp.eq.s32.totalorder %s15, 0
    %p99 = por %p97, %p98
    %p100 = scmp.ne.s32.totalorder %s88, %s89
    %p101 = scmp.eq.s32.totalorder %s16, 1
    %p102 = por %p100, %p101
    %p104 = scmp.ne.s32.totalorder %s89, %s103
    %p105 = scmp.eq.s32.totalorder %s16, 0
    %p106 = por %p104, %p105
    %s107 = ssub.s32 %s10, %s17
    %p108 = scmp.eq.s32.totalorder %s107, 0
    %s110 = sadd.s32 %s109, 1
    %s111 = scalar_select %p108, %s109, %s110
    %p114 = pneg %p108
    %p115 = scmp.eq.s32.totalorder %s10, 1
    %p116 = por %p114, %p115
    %p117 = scmp.ne.s32.totalorder %s109, %s112
    %p118 = scmp.eq.s32.totalorder %s10, 0
    %p119 = por %p117, %p118
    %p120 = scmp.ne.s32.totalorder %s109, %s112
    %p121 = scmp.eq.s32.totalorder %s15, 1
    %p122 = por %p120, %p121
    %p123 = scmp.ne.s32.totalorder %s112, %s113
    %p124 = scmp.eq.s32.totalorder %s15, 0
    %p125 = por %p123, %p124
    %p126 = scmp.ne.s32.totalorder %s112, %s113
    %p127 = scmp.eq.s32.totalorder %s16, 1
    %p128 = por %p126, %p127
    %p130 = scmp.ne.s32.totalorder %s113, %s129
    %p131 = scmp.eq.s32.totalorder %s16, 0
    %p132 = por %p130, %p131
    %p133 = scmp.le.s32.totalorder 1, %s10
    %p134 = scmp.lt.s32.totalorder %s10, 3
    %p135 = pnand %p133, %p134
    %p136 = pneg %p135
    // Predicated region
    $region9: #{_lambda_.6} parent=5 // pred_check
      _
    $region10: #{_lambda_.6} parent=5 // pred_check_branch
      %138 = sbr.rel (%p135) target = $region12
    $region11: #{_lambda_.6} parent=5 // pred_region
      %s139 = ssub.s32 %s10, 1
      // Predicated region
      $region13: #{_lambda_.6} parent=11 // pred_check
        %p140 = pneg %p57
      $region14: #{_lambda_.6} parent=11 // pred_check_branch
        %142 = sbr.rel (%p140) target = $region16
      $region15: #{_lambda_.6} parent=11 // pred_region
        _
      $region16: #{_lambda_.6} parent=11 // pred_fallthru
        _
      // Predicated region
      $region17: #{_lambda_.6} parent=11 // pred_check
        %p143 = pneg %p78
      $region18: #{_lambda_.6} parent=11 // pred_check_branch
        %145 = sbr.rel (%p143) target = $region20
      $region19: #{_lambda_.6} parent=11 // pred_region
        _
      $region20: #{_lambda_.6} parent=11 // pred_fallthru
        _
      // Predicated region
      $region21: #{_lambda_.6} parent=11 // pred_check
        %p146 = pneg %p99
      $region22: #{_lambda_.6} parent=11 // pred_check_branch
        %148 = sbr.rel (%p146) target = $region24
      $region23: #{_lambda_.6} parent=11 // pred_region
        _
      $region24: #{_lambda_.6} parent=11 // pred_fallthru
        _
    $region12: #{_lambda_.6} parent=5 // pred_fallthru
      _
    %p149 = scmp.lt.s32.totalorder %s10, 2
    // Predicated region
    $region25: #{_lambda_.6} parent=5 // pred_check
      %p150 = pneg %p149
    $region26: #{_lambda_.6} parent=5 // pred_check_branch
      %152 = sbr.rel (%p150) target = $region28
    $region27: #{_lambda_.6} parent=5 // pred_region
      // Predicated region
      $region29: #{_lambda_.6} parent=27 // pred_check
        %p153 = pneg %p30
      $region30: #{_lambda_.6} parent=27 // pred_check_branch
        %155 = sbr.rel (%p153) target = $region32
      $region31: #{_lambda_.6} parent=27 // pred_region
        %s156 = smul.u32 8, %s10
        %p157 = scmp.lt.s32.totalorder %s156, 15
        %s158 = scalar_select %p157, %s156, 15
        %s159 = smul.addr %s158, 4
        %s160 = scalar_lea.vmem %s0, %s159
        %s161 = smul.u32 8, %s10
      $region32: #{_lambda_.6} parent=27 // pred_fallthru
        _
    $region28: #{_lambda_.6} parent=5 // pred_fallthru
      _
    %p162 = scmp.le.s32.totalorder 1, %s10
    %p163 = scmp.lt.s32.totalorder %s10, 3
    %p164 = pnand %p162, %p163
    %p165 = pneg %p164
    // Predicated region
    $region33: #{_lambda_.6} parent=5 // pred_check
      _
    $region34: #{_lambda_.6} parent=5 // pred_check_branch
      %167 = sbr.rel (%p164) target = $region36
    $region35: #{_lambda_.6} parent=5 // pred_region
      %s168 = ssub.s32 %s10, 1
      %s169 = smul.u32 8, %s15
      %p170 = scmp.lt.s32.totalorder %s169, 15
      %s171 = scalar_select %p170, %s169, 15
      %s172 = smul.addr %s171, 4
      %s173 = scalar_lea.vmem %s0, %s172
      %p174 = pneg %p36
      %p175 = pneg %p33
      %p176 = pneg %p57
      %p177 = pneg %p54
      %p178 = pneg %p78
      %p179 = pneg %p75
      %p180 = pneg %p99
      %p181 = pneg %p96
      %p182 = pneg %p125
      %p183 = pneg %p122
      %s184 = smul.u32 8, %s15
      %p185 = scmp.lt.s32.totalorder %s184, 15
      %s186 = scalar_select %p185, %s184, 15
      %s187 = smul.addr %s186, 8
      %s188 = scalar_lea.vmem %s4, %s187
      %s189 = smul.u32 8, %s15
      %p190 = scmp.lt.s32.totalorder %s189, 15
      %s191 = scalar_select %p190, %s189, 15
      %s192 = smul.addr %s191, 4
      %s193 = scalar_lea.vmem %s0, %s192
      %s194 = smul.u32 8, %s15
      %s195 = smul.u32 8, %s15
      %p196 = scmp.lt.s32.totalorder %s195, 15
      %s197 = scalar_select %p196, %s195, 15
      %s198 = smul.addr %s197, 8
      %s199 = scalar_lea.vmem %s4, %s198
      %s200 = smul.u32 8, %s15
      %v202 = vld [vmem:[%s193] sm:$0xf]
      %v203 = vld [vmem:[%s193 + $0x4] sm:$0xf]
      %v204 = vld [vmem:[%s193 + $0x8] sm:$0xf]
      %v205 = vld [vmem:[%s193 + $0xc] sm:$0xf]
      %v206 = vld [vmem:[%s193 + $0x10] sm:$0xf]
      %v207 = vld [vmem:[%s193 + $0x14] sm:$0xf]
      %v208 = vld [vmem:[%s193 + $0x18] sm:$0xf]
      %v209 = vld [vmem:[%s193 + $0x1c] sm:$0xf]
      %v210 = vld [vmem:[%s1] sm:$0xf]
      %v211 = vld [vmem:[%s1 + $0x4] sm:$0xf]
      %v212 = vld [vmem:[%s1 + $0x8] sm:$0xf]
      %v213 = vld [vmem:[%s1 + $0xc] sm:$0x3]
      %v222 = vunpack.c.l.b16 %v202
      %v223 = vunpack.c.l.b16 %v203
      %v224 = vunpack.c.l.b16 %v204
      %v225 = vunpack.c.l.b16 %v205
      %v226 = vunpack.c.l.b16 %v206
      %v227 = vunpack.c.l.b16 %v207
      %v228 = vunpack.c.l.b16 %v208
      %v229 = vunpack.c.l.b16 %v209
      %v230 = vpack.c.b16 %v223, %v222
      %v231 = vpack.c.b16 %v225, %v224
      %v232 = vpack.c.b16 %v227, %v226
      %v233 = vpack.c.b16 %v229, %v228
      %v238 = vunpack.c.l.b16 %v210
      %v239 = vunpack.c.l.b16 %v211
      %v240 = vunpack.c.l.b16 %v212
      %v241 = vunpack.c.l.b16 %v213
      %v242 = vpack.c.b16 %v239, %v238
      %v243 = vpack.c.b16 %v241, %v240
      %vm245 = vcmask 220160
      %v247 = vsel %vm245, %v230, 0
      %v250 = vsel %vm245, %v231, 0
      %v253 = vsel %vm245, %v232, 0
      %v256 = vsel %vm245, %v233, 0
      %vm258 = vcmask 1044480
      %vm259 = vcmask 1045504
      %v260 = vsel %vm258, 4294967295, 65535
      %v261 = vsel %vm259, %v260, 0
      %v263 = vand.u32 %v243, %v261
      %265 = vmatpush.bf16.msra.mxu0 0
      %266 = vmatpush.bf16.msra.mxu0 0
      %267 = vmatpush.bf16.msra.mxu0 0
      %268 = vmatpush.bf16.msra.mxu0 0
      %269 = vmatpush.bf16.msra.mxu0 0
      %270 = vmatpush.bf16.msra.mxu0 0
      %271 = vmatpush.bf16.msra.mxu0 %v263
      %272 = vmatpush.bf16.msra.mxu0 %v242
      %273 = vmatmul.bf16.gmra.mxu0 %v247
      %v274 = vpop.f32.mrf.mxu0
      %v275 = vadd.f32 0.0, %v274
      %v276 = vpop.f32.mrf.mxu0
      %v277 = vadd.f32 0.0, %v276
      %278 = vmatmul.bf16.gmra.mxu0 %v250
      %v279 = vpop.f32.mrf.mxu0
      %v280 = vadd.f32 0.0, %v279
      %v281 = vpop.f32.mrf.mxu0
      %v282 = vadd.f32 0.0, %v281
      %283 = vmatmul.bf16.gmra.mxu0 %v253
      %v284 = vpop.f32.mrf.mxu0
      %v285 = vadd.f32 0.0, %v284
      %v286 = vpop.f32.mrf.mxu0
      %v287 = vadd.f32 0.0, %v286
      %288 = vmatmul.bf16.gmra.mxu0 %v256
      %v289 = vpop.f32.mrf.mxu0
      %v290 = vadd.f32 0.0, %v289
      %v291 = vpop.f32.mrf.mxu0
      %v292 = vadd.f32 0.0, %v291
      %293 = vdwg.mxu0
      %v294 = vld [vmem:[%s2] sm:$0x1]
      %v296 = vperm.slane %v294, 0
      %v298 = vmul.f32 %v275, %v296
      %v299 = vmul.f32 %v277, %v296
      %v300 = vmul.f32 %v280, %v296
      %v301 = vmul.f32 %v282, %v296
      %v302 = vmul.f32 %v285, %v296
      %v303 = vmul.f32 %v287, %v296
      %v304 = vmul.f32 %v290, %v296
      %v305 = vmul.f32 %v292, %v296
      %v306 = vld [vmem:[%s3] sm:$0x1]
      %v308 = vperm.slane %v306, 0
      %v310 = vadd.f32 %v298, %v308
      %v311 = vadd.f32 %v299, %v308
      %v312 = vadd.f32 %v300, %v308
      %v313 = vadd.f32 %v301, %v308
      %v314 = vadd.f32 %v302, %v308
      %v315 = vadd.f32 %v303, %v308
      %v316 = vadd.f32 %v304, %v308
      %v317 = vadd.f32 %v305, %v308
      %v318 = vmax.f32 %v310, 0.0
      %v319 = vmax.f32 %v311, 0.0
      %v320 = vmax.f32 %v312, 0.0
      %v321 = vmax.f32 %v313, 0.0
      %v322 = vmax.f32 %v314, 0.0
      %v323 = vmax.f32 %v315, 0.0
      %v324 = vmax.f32 %v316, 0.0
      %v325 = vmax.f32 %v317, 0.0
      %326 = vst [vmem:[%s199] sm:$0xff] %v318
      %327 = vst [vmem:[%s199 + $0x8] sm:$0xff] %v319
      %328 = vst [vmem:[%s199 + $0x10] sm:$0xff] %v320
      %329 = vst [vmem:[%s199 + $0x18] sm:$0xff] %v321
      %330 = vst [vmem:[%s199 + $0x20] sm:$0xff] %v322
      %331 = vst [vmem:[%s199 + $0x28] sm:$0xff] %v323
      %332 = vst [vmem:[%s199 + $0x30] sm:$0xff] %v324
      %333 = vst [vmem:[%s199 + $0x38] sm:$0xff] %v325
      %s334 = smul.u32 8, %s15
      %p335 = scmp.lt.s32.totalorder %s334, 15
      %s336 = scalar_select %p335, %s334, 15
      %s337 = smul.addr %s336, 8
      %s338 = scalar_lea.vmem %s4, %s337
      // Predicated region
      $region37: #{_lambda_.6} parent=35 // pred_check
        %p339 = pneg %p122
      $region38: #{_lambda_.6} parent=35 // pred_check_branch
        %341 = sbr.rel (%p339) target = $region40
      $region39: #{_lambda_.6} parent=35 // pred_region
        %s342 = smul.u32 8, %s15
      $region40: #{_lambda_.6} parent=35 // pred_fallthru
        _
    $region36: #{_lambda_.6} parent=5 // pred_fallthru
      _
    %p343 = scmp.le.s32.totalorder 2, %s10
    // Predicated region
    $region41: #{_lambda_.6} parent=5 // pred_check
      %p344 = pneg %p343
    $region42: #{_lambda_.6} parent=5 // pred_check_branch
      %346 = sbr.rel (%p344) target = $region44
    $region43: #{_lambda_.6} parent=5 // pred_region
      %s347 = ssub.s32 %s10, 2
      // Predicated region
      $region45: #{_lambda_.6} parent=43 // pred_check
        %p348 = pneg %p128
      $region46: #{_lambda_.6} parent=43 // pred_check_branch
        %350 = sbr.rel (%p348) target = $region48
      $region47: #{_lambda_.6} parent=43 // pred_region
        %s351 = smul.u32 8, %s16
        %p352 = scmp.lt.s32.totalorder %s351, 15
        %s353 = scalar_select %p352, %s351, 15
        %s354 = smul.addr %s353, 8
        %s355 = scalar_lea.vmem %s4, %s354
      $region48: #{_lambda_.6} parent=43 // pred_fallthru
        _
    $region44: #{_lambda_.6} parent=5 // pred_fallthru
      _
  $region6: #{_lambda_.6} parent=0 // loop_footer
    %s14 = sadd.s32 1, %s10
  $region7: #{_lambda_.6} parent=0 // loop_footer_branch
    %9 = sbr.rel target = $region3
  $region8: #{_lambda_.6} parent=0 // loop_exit
    _

// kernel: _lambda_.8
$region0: #{_lambda_.8}
  #allocation0 [shape = 'u32[]', space=smem, size = 0x4, offset = 0x4, fixed_abs, tag = 'smem constant byte address 0x4 - core index']
  #allocation1 [shape = 'u32[72,128]{1,0:T(1,128)}', space=vmem, size = 0x9000, scoped, tag = 'internal scratch']
  %s0 = inlined_call_operand.vmem [shape: bf16[128,432], index: 0, kind: input, shape index: {}]
  %s1 = inlined_call_operand.vmem [shape: bf16[432,128], index: 1, kind: input, shape index: {}]
  %s2 = inlined_call_operand.vmem [shape: f32[1,128], index: 2, kind: input, shape index: {}]
  %s3 = inlined_call_operand.vmem [shape: f32[1,128], index: 3, kind: input, shape index: {}]
  %s4 = inlined_call_operand.vmem [shape: f32[128,128], index: 4, kind: output, shape index: {}]
  %s5 = sld [smem:[#allocation0]]
  $region49: #{_lambda_.8} parent=0
    _
  %s7 = ssub.s32 1, %s5
  %s8 = scalar_select 0, %s7, %s5
  loop: start=0, step=1, limit=4
  $region2: #{_lambda_.8} parent=0 // loop_pre_header
    _
  $region3: #{_lambda_.8} parent=0 // loop_header
    %s10 = sphi 0, %s14
    %p11 = scmp.ge.s32.totalorder %s10, 4
    %s20 = sphi 0, %s22
    %s23 = sphi 0, %s20
    %s24 = sphi 0, %s23
    %s40 = sphi 0, %s24
    %s44 = sphi 0, %s44
    %s46 = sphi 0, %s44
    %s47 = sphi 0, %s46
    %s61 = sphi 0, %s47
    %s65 = sphi 0, %s65
    %s67 = sphi 0, %s65
    %s68 = sphi 0, %s67
    %s82 = sphi 0, %s68
    %s86 = sphi 0, %s86
    %s88 = sphi 0, %s86
    %s89 = sphi 0, %s88
    %s103 = sphi 0, %s89
    %s109 = sphi 0, %s111
    %s112 = sphi 0, %s109
    %s113 = sphi 0, %s112
    %s129 = sphi 0, %s113
  $region4: #{_lambda_.8} parent=0 // loop_header_branch
    %13 = sbr.rel (%p11) target = $region8
  $region5: #{_lambda_.8} parent=0 // loop_body
    %s15 = ssub.s32 %s10, 1
    %s16 = ssub.s32 %s10, 2
    %s17 = sadd.s32 %s10, 1
    %s18 = ssub.s32 %s10, %s17
    %p19 = scmp.eq.s32.totalorder %s18, 0
    %s21 = sadd.s32 %s20, 1
    %s22 = scalar_select %p19, %s20, %s21
    %p25 = pneg %p19
    %p26 = scmp.eq.s32.totalorder %s10, 1
    %p27 = por %p25, %p26
    %p28 = scmp.ne.s32.totalorder %s20, %s23
    %p29 = scmp.eq.s32.totalorder %s10, 0
    %p30 = por %p28, %p29
    %p31 = scmp.ne.s32.totalorder %s20, %s23
    %p32 = scmp.eq.s32.totalorder %s15, 1
    %p33 = por %p31, %p32
    %p34 = scmp.ne.s32.totalorder %s23, %s24
    %p35 = scmp.eq.s32.totalorder %s15, 0
    %p36 = por %p34, %p35
    %p37 = scmp.ne.s32.totalorder %s23, %s24
    %p38 = scmp.eq.s32.totalorder %s16, 1
    %p39 = por %p37, %p38
    %p41 = scmp.ne.s32.totalorder %s24, %s40
    %p42 = scmp.eq.s32.totalorder %s16, 0
    %p43 = por %p41, %p42
    %s45 = sadd.s32 %s44, 1
    %p48 = scmp.eq.s32.totalorder %s10, 1
    %p49 = scmp.ne.s32.totalorder %s44, %s46
    %p50 = scmp.eq.s32.totalorder %s10, 0
    %p51 = por %p49, %p50
    %p52 = scmp.ne.s32.totalorder %s44, %s46
    %p53 = scmp.eq.s32.totalorder %s15, 1
    %p54 = por %p52, %p53
    %p55 = scmp.ne.s32.totalorder %s46, %s47
    %p56 = scmp.eq.s32.totalorder %s15, 0
    %p57 = por %p55, %p56
    %p58 = scmp.ne.s32.totalorder %s46, %s47
    %p59 = scmp.eq.s32.totalorder %s16, 1
    %p60 = por %p58, %p59
    %p62 = scmp.ne.s32.totalorder %s47, %s61
    %p63 = scmp.eq.s32.totalorder %s16, 0
    %p64 = por %p62, %p63
    %s66 = sadd.s32 %s65, 1
    %p69 = scmp.eq.s32.totalorder %s10, 1
    %p70 = scmp.ne.s32.totalorder %s65, %s67
    %p71 = scmp.eq.s32.totalorder %s10, 0
    %p72 = por %p70, %p71
    %p73 = scmp.ne.s32.totalorder %s65, %s67
    %p74 = scmp.eq.s32.totalorder %s15, 1
    %p75 = por %p73, %p74
    %p76 = scmp.ne.s32.totalorder %s67, %s68
    %p77 = scmp.eq.s32.totalorder %s15, 0
    %p78 = por %p76, %p77
    %p79 = scmp.ne.s32.totalorder %s67, %s68
    %p80 = scmp.eq.s32.totalorder %s16, 1
    %p81 = por %p79, %p80
    %p83 = scmp.ne.s32.totalorder %s68, %s82
    %p84 = scmp.eq.s32.totalorder %s16, 0
    %p85 = por %p83, %p84
    %s87 = sadd.s32 %s86, 1
    %p90 = scmp.eq.s32.totalorder %s10, 1
    %p91 = scmp.ne.s32.totalorder %s86, %s88
    %p92 = scmp.eq.s32.totalorder %s10, 0
    %p93 = por %p91, %p92
    %p94 = scmp.ne.s32.totalorder %s86, %s88
    %p95 = scmp.eq.s32.totalorder %s15, 1
    %p96 = por %p94, %p95
    %p97 = scmp.ne.s32.totalorder %s88, %s89
    %p98 = scmp.eq.s32.totalorder %s15, 0
    %p99 = por %p97, %p98
    %p100 = scmp.ne.s32.totalorder %s88, %s89
    %p101 = scmp.eq.s32.totalorder %s16, 1
    %p102 = por %p100, %p101
    %p104 = scmp.ne.s32.totalorder %s89, %s103
    %p105 = scmp.eq.s32.totalorder %s16, 0
    %p106 = por %p104, %p105
    %s107 = ssub.s32 %s10, %s17
    %p108 = scmp.eq.s32.totalorder %s107, 0
    %s110 = sadd.s32 %s109, 1
    %s111 = scalar_select %p108, %s109, %s110
    %p114 = pneg %p108
    %p115 = scmp.eq.s32.totalorder %s10, 1
    %p116 = por %p114, %p115
    %p117 = scmp.ne.s32.totalorder %s109, %s112
    %p118 = scmp.eq.s32.totalorder %s10, 0
    %p119 = por %p117, %p118
    %p120 = scmp.ne.s32.totalorder %s109, %s112
    %p121 = scmp.eq.s32.totalorder %s15, 1
    %p122 = por %p120, %p121
    %p123 = scmp.ne.s32.totalorder %s112, %s113
    %p124 = scmp.eq.s32.totalorder %s15, 0
    %p125 = por %p123, %p124
    %p126 = scmp.ne.s32.totalorder %s112, %s113
    %p127 = scmp.eq.s32.totalorder %s16, 1
    %p128 = por %p126, %p127
    %p130 = scmp.ne.s32.totalorder %s113, %s129
    %p131 = scmp.eq.s32.totalorder %s16, 0
    %p132 = por %p130, %p131
    %p133 = scmp.le.s32.totalorder 1, %s10
    %p134 = scmp.lt.s32.totalorder %s10, 3
    %p135 = pnand %p133, %p134
    %p136 = pneg %p135
    // Predicated region
    $region9: #{_lambda_.8} parent=5 // pred_check
      _
    $region10: #{_lambda_.8} parent=5 // pred_check_branch
      %138 = sbr.rel (%p135) target = $region12
    $region11: #{_lambda_.8} parent=5 // pred_region
      %s139 = ssub.s32 %s10, 1
      // Predicated region
      $region13: #{_lambda_.8} parent=11 // pred_check
        %p140 = pneg %p57
      $region14: #{_lambda_.8} parent=11 // pred_check_branch
        %142 = sbr.rel (%p140) target = $region16
      $region15: #{_lambda_.8} parent=11 // pred_region
        _
      $region16: #{_lambda_.8} parent=11 // pred_fallthru
        _
      // Predicated region
      $region17: #{_lambda_.8} parent=11 // pred_check
        %p143 = pneg %p78
      $region18: #{_lambda_.8} parent=11 // pred_check_branch
        %145 = sbr.rel (%p143) target = $region20
      $region19: #{_lambda_.8} parent=11 // pred_region
        _
      $region20: #{_lambda_.8} parent=11 // pred_fallthru
        _
      // Predicated region
      $region21: #{_lambda_.8} parent=11 // pred_check
        %p146 = pneg %p99
      $region22: #{_lambda_.8} parent=11 // pred_check_branch
        %148 = sbr.rel (%p146) target = $region24
      $region23: #{_lambda_.8} parent=11 // pred_region
        _
      $region24: #{_lambda_.8} parent=11 // pred_fallthru
        _
    $region12: #{_lambda_.8} parent=5 // pred_fallthru
      _
    %p149 = scmp.lt.s32.totalorder %s10, 2
    // Predicated region
    $region25: #{_lambda_.8} parent=5 // pred_check
      %p150 = pneg %p149
    $region26: #{_lambda_.8} parent=5 // pred_check_branch
      %152 = sbr.rel (%p150) target = $region28
    $region27: #{_lambda_.8} parent=5 // pred_region
      // Predicated region
      $region29: #{_lambda_.8} parent=27 // pred_check
        %p153 = pneg %p30
      $region30: #{_lambda_.8} parent=27 // pred_check_branch
        %155 = sbr.rel (%p153) target = $region32
      $region31: #{_lambda_.8} parent=27 // pred_region
        %s156 = smul.u32 8, %s10
        %p157 = scmp.lt.s32.totalorder %s156, 15
        %s158 = scalar_select %p157, %s156, 15
        %s159 = smul.addr %s158, 4
        %s160 = smul.addr %s159, 4
        %s161 = scalar_lea.vmem %s0, %s160
        %s162 = smul.u32 8, %s10
      $region32: #{_lambda_.8} parent=27 // pred_fallthru
        _
    $region28: #{_lambda_.8} parent=5 // pred_fallthru
      _
    %p163 = scmp.le.s32.totalorder 1, %s10
    %p164 = scmp.lt.s32.totalorder %s10, 3
    %p165 = pnand %p163, %p164
    %p166 = pneg %p165
    // Predicated region
    $region33: #{_lambda_.8} parent=5 // pred_check
      _
    $region34: #{_lambda_.8} parent=5 // pred_check_branch
      %168 = sbr.rel (%p165) target = $region36
    $region35: #{_lambda_.8} parent=5 // pred_region
      %s169 = ssub.s32 %s10, 1
      %s170 = smul.u32 8, %s15
      %p171 = scmp.lt.s32.totalorder %s170, 15
      %s172 = scalar_select %p171, %s170, 15
      %s173 = smul.addr %s172, 4
      %s174 = smul.addr %s173, 4
      %s175 = scalar_lea.vmem %s0, %s174
      %p176 = pneg %p36
      %p177 = pneg %p33
      %p178 = pneg %p57
      %p179 = pneg %p54
      %p180 = pneg %p78
      %p181 = pneg %p75
      %p182 = pneg %p99
      %p183 = pneg %p96
      %p184 = pneg %p125
      %p185 = pneg %p122
      %s186 = smul.u32 8, %s15
      %p187 = scmp.lt.s32.totalorder %s186, 15
      %s188 = scalar_select %p187, %s186, 15
      %s189 = smul.addr %s188, 8
      %s190 = scalar_lea.vmem %s4, %s189
      %s191 = smul.u32 8, %s15
      %p192 = scmp.lt.s32.totalorder %s191, 15
      %s193 = scalar_select %p192, %s191, 15
      %s194 = smul.addr %s193, 4
      %s195 = smul.addr %s194, 4
      %s196 = scalar_lea.vmem %s0, %s195
      %s197 = smul.u32 8, %s15
      %s198 = smul.u32 8, %s15
      %p199 = scmp.lt.s32.totalorder %s198, 15
      %s200 = scalar_select %p199, %s198, 15
      %s201 = smul.addr %s200, 8
      %s202 = scalar_lea.vmem %s4, %s201
      %s203 = smul.u32 8, %s15
      %v205 = vld [vmem:[%s196] sm:$0xff]
      %v206 = vld [vmem:[%s196 + $0x8] sm:$0xff]
      %v207 = vld [vmem:[%s196 + $0x10] sm:$0xff]
      %v208 = vld [vmem:[%s196 + $0x18] sm:$0xff]
      %v209 = vld [vmem:[%s196 + $0x20] sm:$0xff]
      %v210 = vld [vmem:[%s196 + $0x28] sm:$0xff]
      %v211 = vld [vmem:[%s196 + $0x30] sm:$0xff]
      %v212 = vld [vmem:[%s196 + $0x38] sm:$0xff]
      %v213 = vld [vmem:[%s196 + $0x40] sm:$0xff]
      %v214 = vld [vmem:[%s196 + $0x48] sm:$0xff]
      %v215 = vld [vmem:[%s196 + $0x50] sm:$0xff]
      %v216 = vld [vmem:[%s196 + $0x58] sm:$0xff]
      %v217 = vld [vmem:[%s196 + $0x60] sm:$0xff]
      %v218 = vld [vmem:[%s196 + $0x68] sm:$0xff]
      %v219 = vld [vmem:[%s196 + $0x70] sm:$0xff]
      %v220 = vld [vmem:[%s196 + $0x78] sm:$0xff]
      %v221 = vld [vmem:[%s1] sm:$0xf]
      %v222 = vld [vmem:[%s1 + $0x4] sm:$0xf]
      %v223 = vld [vmem:[%s1 + $0x8] sm:$0xf]
      %v224 = vld [vmem:[%s1 + $0xc] sm:$0xf]
      %v225 = vld [vmem:[%s1 + $0x10] sm:$0xf]
      %v226 = vld [vmem:[%s1 + $0x14] sm:$0xf]
      %v227 = vld [vmem:[%s1 + $0x18] sm:$0xf]
      %v228 = vld [vmem:[%s1 + $0x1c] sm:$0xf]
      %v229 = vld [vmem:[%s1 + $0x20] sm:$0xf]
      %v230 = vld [vmem:[%s1 + $0x24] sm:$0xf]
      %v231 = vld [vmem:[%s1 + $0x28] sm:$0xf]
      %v232 = vld [vmem:[%s1 + $0x2c] sm:$0xf]
      %v233 = vld [vmem:[%s1 + $0x30] sm:$0xf]
      %v234 = vld [vmem:[%s1 + $0x34] sm:$0xf]
      %v235 = vld [vmem:[%s1 + $0x38] sm:$0xf]
      %v236 = vld [vmem:[%s1 + $0x3c] sm:$0xf]
      %v237 = vld [vmem:[%s1 + $0x40] sm:$0xf]
      %v238 = vld [vmem:[%s1 + $0x44] sm:$0xf]
      %v239 = vld [vmem:[%s1 + $0x48] sm:$0xf]
      %v240 = vld [vmem:[%s1 + $0x4c] sm:$0xf]
      %v241 = vld [vmem:[%s1 + $0x50] sm:$0xf]
      %v242 = vld [vmem:[%s1 + $0x54] sm:$0xf]
      %v243 = vld [vmem:[%s1 + $0x58] sm:$0xf]
      %v244 = vld [vmem:[%s1 + $0x5c] sm:$0xf]
      %v245 = vld [vmem:[%s1 + $0x60] sm:$0xf]
      %v246 = vld [vmem:[%s1 + $0x64] sm:$0xf]
      %v247 = vld [vmem:[%s1 + $0x68] sm:$0xf]
      %v248 = vld [vmem:[%s1 + $0x6c] sm:$0xf]
      %v249 = vld [vmem:[%s1 + $0x70] sm:$0xf]
      %v250 = vld [vmem:[%s1 + $0x74] sm:$0xf]
      %v251 = vld [vmem:[%s1 + $0x78] sm:$0xf]
      %v252 = vld [vmem:[%s1 + $0x7c] sm:$0xf]
      %v253 = vld [vmem:[%s1 + $0x80] sm:$0xf]
      %v254 = vld [vmem:[%s1 + $0x84] sm:$0xf]
      %v255 = vld [vmem:[%s1 + $0x88] sm:$0xf]
      %v256 = vld [vmem:[%s1 + $0x8c] sm:$0xf]
      %v257 = vld [vmem:[%s1 + $0x90] sm:$0xf]
      %v258 = vld [vmem:[%s1 + $0x94] sm:$0xf]
      %v259 = vld [vmem:[%s1 + $0x98] sm:$0xf]
      %v260 = vld [vmem:[%s1 + $0x9c] sm:$0xf]
      %v261 = vld [vmem:[%s1 + $0xa0] sm:$0xf]
      %v262 = vld [vmem:[%s1 + $0xa4] sm:$0xf]
      %v263 = vld [vmem:[%s1 + $0xa8] sm:$0xf]
      %v264 = vld [vmem:[%s1 + $0xac] sm:$0xf]
      %v265 = vld [vmem:[%s1 + $0xb0] sm:$0xf]
      %v266 = vld [vmem:[%s1 + $0xb4] sm:$0xf]
      %v267 = vld [vmem:[%s1 + $0xb8] sm:$0xf]
      %v268 = vld [vmem:[%s1 + $0xbc] sm:$0xf]
      %v269 = vld [vmem:[%s1 + $0xc0] sm:$0xf]
      %v270 = vld [vmem:[%s1 + $0xc4] sm:$0xf]
      %v271 = vld [vmem:[%s1 + $0xc8] sm:$0xf]
      %v272 = vld [vmem:[%s1 + $0xcc] sm:$0xf]
      %v273 = vld [vmem:[%s1 + $0xd0] sm:$0xf]
      %v274 = vld [vmem:[%s1 + $0xd4] sm:$0xf]
      %v291 = vunpack.c.l.b16 %v205
      %v292 = vunpack.c.h.b16 %v205
      %v293 = vunpack.c.l.b16 %v206
      %v294 = vunpack.c.h.b16 %v206
      %v295 = vunpack.c.l.b16 %v207
      %v296 = vunpack.c.h.b16 %v207
      %v297 = vunpack.c.l.b16 %v208
      %v298 = vunpack.c.h.b16 %v208
      %v299 = vunpack.c.l.b16 %v209
      %v300 = vunpack.c.h.b16 %v209
      %v301 = vunpack.c.l.b16 %v210
      %v302 = vunpack.c.h.b16 %v210
      %v303 = vunpack.c.l.b16 %v211
      %v304 = vunpack.c.h.b16 %v211
      %v305 = vunpack.c.l.b16 %v212
      %v306 = vunpack.c.h.b16 %v212
      %v307 = vunpack.c.l.b16 %v213
      %v308 = vunpack.c.h.b16 %v213
      %v309 = vunpack.c.l.b16 %v214
      %v310 = vunpack.c.h.b16 %v214
      %v311 = vunpack.c.l.b16 %v215
      %v312 = vunpack.c.h.b16 %v215
      %v313 = vunpack.c.l.b16 %v216
      %v314 = vunpack.c.h.b16 %v216
      %v315 = vunpack.c.l.b16 %v217
      %v316 = vunpack.c.h.b16 %v217
      %v317 = vunpack.c.l.b16 %v218
      %v318 = vunpack.c.h.b16 %v218
      %v319 = vunpack.c.l.b16 %v219
      %v320 = vunpack.c.h.b16 %v219
      %v321 = vunpack.c.l.b16 %v220
      %v322 = vunpack.c.h.b16 %v220
      %v323 = vpack.c.b16 %v295, %v291
      %v324 = vpack.c.b16 %v296, %v292
      %v325 = vpack.c.b16 %v297, %v293
      %v326 = vpack.c.b16 %v298, %v294
      %v327 = vpack.c.b16 %v303, %v299
      %v328 = vpack.c.b16 %v304, %v300
      %v329 = vpack.c.b16 %v305, %v301
      %v330 = vpack.c.b16 %v306, %v302
      %v331 = vpack.c.b16 %v311, %v307
      %v332 = vpack.c.b16 %v312, %v308
      %v333 = vpack.c.b16 %v313, %v309
      %v334 = vpack.c.b16 %v314, %v310
      %v335 = vpack.c.b16 %v319, %v315
      %v336 = vpack.c.b16 %v320, %v316
      %v337 = vpack.c.b16 %v321, %v317
      %v338 = vpack.c.b16 %v322, %v318
      %v405 = vunpack.c.l.b16 %v221
      %v406 = vunpack.c.l.b16 %v222
      %v407 = vunpack.c.l.b16 %v223
      %v408 = vunpack.c.l.b16 %v224
      %v409 = vunpack.c.l.b16 %v225
      %v410 = vunpack.c.l.b16 %v226
      %v411 = vunpack.c.l.b16 %v227
      %v412 = vunpack.c.l.b16 %v228
      %v413 = vunpack.c.l.b16 %v229
      %v414 = vunpack.c.l.b16 %v230
      %v415 = vunpack.c.l.b16 %v231
      %v416 = vunpack.c.l.b16 %v232
      %v417 = vunpack.c.l.b16 %v233
      %v418 = vunpack.c.l.b16 %v234
      %v419 = vunpack.c.l.b16 %v235
      %v420 = vunpack.c.l.b16 %v236
      %v421 = vunpack.c.l.b16 %v237
      %v422 = vunpack.c.l.b16 %v238
      %v423 = vunpack.c.l.b16 %v239
      %v424 = vunpack.c.l.b16 %v240
      %v425 = vunpack.c.l.b16 %v241
      %v426 = vunpack.c.l.b16 %v242
      %v427 = vunpack.c.l.b16 %v243
      %v428 = vunpack.c.l.b16 %v244
      %v429 = vunpack.c.l.b16 %v245
      %v430 = vunpack.c.l.b16 %v246
      %v431 = vunpack.c.l.b16 %v247
      %v432 = vunpack.c.l.b16 %v248
      %v433 = vunpack.c.l.b16 %v249
      %v434 = vunpack.c.l.b16 %v250
      %v435 = vunpack.c.l.b16 %v251
      %v436 = vunpack.c.l.b16 %v252
      %v437 = vunpack.c.l.b16 %v253
      %v438 = vunpack.c.l.b16 %v254
      %v439 = vunpack.c.l.b16 %v255
      %v440 = vunpack.c.l.b16 %v256
      %v441 = vunpack.c.l.b16 %v257
      %v442 = vunpack.c.l.b16 %v258
      %v443 = vunpack.c.l.b16 %v259
      %v444 = vunpack.c.l.b16 %v260
      %v445 = vunpack.c.l.b16 %v261
      %v446 = vunpack.c.l.b16 %v262
      %v447 = vunpack.c.l.b16 %v263
      %v448 = vunpack.c.l.b16 %v264
      %v449 = vunpack.c.l.b16 %v265
      %v450 = vunpack.c.l.b16 %v266
      %v451 = vunpack.c.l.b16 %v267
      %v452 = vunpack.c.l.b16 %v268
      %v453 = vunpack.c.l.b16 %v269
      %v454 = vunpack.c.l.b16 %v270
      %v455 = vunpack.c.l.b16 %v271
      %v456 = vunpack.c.l.b16 %v272
      %v457 = vunpack.c.l.b16 %v273
      %v458 = vunpack.c.l.b16 %v274
      %v459 = vpack.c.b16 %v406, %v405
      %v460 = vpack.c.b16 %v408, %v407
      %v461 = vpack.c.b16 %v410, %v409
      %v462 = vpack.c.b16 %v412, %v411
      %v463 = vpack.c.b16 %v414, %v413
      %v464 = vpack.c.b16 %v416, %v415
      %v465 = vpack.c.b16 %v418, %v417
      %v466 = vpack.c.b16 %v420, %v419
      %v467 = vpack.c.b16 %v422, %v421
      %v468 = vpack.c.b16 %v424, %v423
      %v469 = vpack.c.b16 %v426, %v425
      %v470 = vpack.c.b16 %v428, %v427
      %v471 = vpack.c.b16 %v430, %v429
      %v472 = vpack.c.b16 %v432, %v431
      %v473 = vpack.c.b16 %v434, %v433
      %v474 = vpack.c.b16 %v436, %v435
      %v475 = vpack.c.b16 %v438, %v437
      %v476 = vpack.c.b16 %v440, %v439
      %v477 = vpack.c.b16 %v442, %v441
      %v478 = vpack.c.b16 %v444, %v443
      %v479 = vpack.c.b16 %v446, %v445
      %v480 = vpack.c.b16 %v448, %v447
      %v481 = vpack.c.b16 %v450, %v449
      %v482 = vpack.c.b16 %v452, %v451
      %v483 = vpack.c.b16 %v454, %v453
      %v484 = vpack.c.b16 %v456, %v455
      %v485 = vpack.c.b16 %v458, %v457
      %vm513 = vcmask 392192
      %v515 = vsel %vm513, %v326, 0
      %v518 = vsel %vm513, %v330, 0
      %v521 = vsel %vm513, %v334, 0
      %v524 = vsel %vm513, %v338, 0
      %526 = vmatpush.bf16.msra.mxu0 %v466
      %527 = vmatpush.bf16.msra.mxu0 %v465
      %528 = vmatpush.bf16.msra.mxu0 %v464
      %529 = vmatpush.bf16.msra.mxu0 %v463
      %530 = vmatpush.bf16.msra.mxu0 %v462
      %531 = vmatpush.bf16.msra.mxu0 %v461
      %532 = vmatpush.bf16.msra.mxu0 %v460
      %533 = vmatpush.bf16.msra.mxu0 %v459
      %534 = vmatmul.bf16.gmra.mxu0 %v323
      %v535 = vpop.f32.mrf.mxu0
      %v536 = vadd.f32 0.0, %v535
      %v537 = vpop.f32.mrf.mxu0
      %v538 = vadd.f32 0.0, %v537
      %539 = vmatmul.bf16.gmra.mxu0 %v327
      %v540 = vpop.f32.mrf.mxu0
      %v541 = vadd.f32 0.0, %v540
      %v542 = vpop.f32.mrf.mxu0
      %v543 = vadd.f32 0.0, %v542
      %544 = vmatmul.bf16.gmra.mxu0 %v331
      %v545 = vpop.f32.mrf.mxu0
      %v546 = vadd.f32 0.0, %v545
      %v547 = vpop.f32.mrf.mxu0
      %v548 = vadd.f32 0.0, %v547
      %549 = vmatmul.bf16.gmra.mxu0 %v335
      %v550 = vpop.f32.mrf.mxu0
      %v551 = vadd.f32 0.0, %v550
      %v552 = vpop.f32.mrf.mxu0
      %v553 = vadd.f32 0.0, %v552
      %554 = vdwg.mxu0
      %555 = vmatpush.bf16.msra.mxu0 %v474
      %556 = vmatpush.bf16.msra.mxu0 %v473
      %557 = vmatpush.bf16.msra.mxu0 %v472
      %558 = vmatpush.bf16.msra.mxu0 %v471
      %559 = vmatpush.bf16.msra.mxu0 %v470
      %560 = vmatpush.bf16.msra.mxu0 %v469
      %561 = vmatpush.bf16.msra.mxu0 %v468
      %562 = vmatpush.bf16.msra.mxu0 %v467
      %563 = vmatmul.bf16.gmra.mxu0 %v324
      %v564 = vpop.f32.mrf.mxu0
      %v565 = vadd.f32 %v536, %v564
      %v566 = vpop.f32.mrf.mxu0
      %v567 = vadd.f32 %v538, %v566
      %568 = vmatmul.bf16.gmra.mxu0 %v328
      %v569 = vpop.f32.mrf.mxu0
      %v570 = vadd.f32 %v541, %v569
      %v571 = vpop.f32.mrf.mxu0
      %v572 = vadd.f32 %v543, %v571
      %573 = vmatmul.bf16.gmra.mxu0 %v332
      %v574 = vpop.f32.mrf.mxu0
      %v575 = vadd.f32 %v546, %v574
      %v576 = vpop.f32.mrf.mxu0
      %v577 = vadd.f32 %v548, %v576
      %578 = vmatmul.bf16.gmra.mxu0 %v336
      %v579 = vpop.f32.mrf.mxu0
      %v580 = vadd.f32 %v551, %v579
      %v581 = vpop.f32.mrf.mxu0
      %v582 = vadd.f32 %v553, %v581
      %583 = vdwg.mxu0
      %584 = vmatpush.bf16.msra.mxu0 %v482
      %585 = vmatpush.bf16.msra.mxu0 %v481
      %586 = vmatpush.bf16.msra.mxu0 %v480
      %587 = vmatpush.bf16.msra.mxu0 %v479
      %588 = vmatpush.bf16.msra.mxu0 %v478
      %589 = vmatpush.bf16.msra.mxu0 %v477
      %590 = vmatpush.bf16.msra.mxu0 %v476
      %591 = vmatpush.bf16.msra.mxu0 %v475
      %592 = vmatmul.bf16.gmra.mxu0 %v325
      %v593 = vpop.f32.mrf.mxu0
      %v594 = vadd.f32 %v565, %v593
      %v595 = vpop.f32.mrf.mxu0
      %v596 = vadd.f32 %v567, %v595
      %597 = vmatmul.bf16.gmra.mxu0 %v329
      %v598 = vpop.f32.mrf.mxu0
      %v599 = vadd.f32 %v570, %v598
      %v600 = vpop.f32.mrf.mxu0
      %v601 = vadd.f32 %v572, %v600
      %602 = vmatmul.bf16.gmra.mxu0 %v333
      %v603 = vpop.f32.mrf.mxu0
      %v604 = vadd.f32 %v575, %v603
      %v605 = vpop.f32.mrf.mxu0
      %v606 = vadd.f32 %v577, %v605
      %607 = vmatmul.bf16.gmra.mxu0 %v337
      %v608 = vpop.f32.mrf.mxu0
      %v609 = vadd.f32 %v580, %v608
      %v610 = vpop.f32.mrf.mxu0
      %v611 = vadd.f32 %v582, %v610
      %612 = vdwg.mxu0
      %613 = vmatpush.bf16.msra.mxu0 0
      %614 = vmatpush.bf16.msra.mxu0 0
      %615 = vmatpush.bf16.msra.mxu0 0
      %616 = vmatpush.bf16.msra.mxu0 0
      %617 = vmatpush.bf16.msra.mxu0 0
      %618 = vmatpush.bf16.msra.mxu0 %v485
      %619 = vmatpush.bf16.msra.mxu0 %v484
      %620 = vmatpush.bf16.msra.mxu0 %v483
      %621 = vmatmul.bf16.gmra.mxu0 %v515
      %v622 = vpop.f32.mrf.mxu0
      %v623 = vadd.f32 %v594, %v622
      %v624 = vpop.f32.mrf.mxu0
      %v625 = vadd.f32 %v596, %v624
      %626 = vmatmul.bf16.gmra.mxu0 %v518
      %v627 = vpop.f32.mrf.mxu0
      %v628 = vadd.f32 %v599, %v627
      %v629 = vpop.f32.mrf.mxu0
      %v630 = vadd.f32 %v601, %v629
      %631 = vmatmul.bf16.gmra.mxu0 %v521
      %v632 = vpop.f32.mrf.mxu0
      %v633 = vadd.f32 %v604, %v632
      %v634 = vpop.f32.mrf.mxu0
      %v635 = vadd.f32 %v606, %v634
      %636 = vmatmul.bf16.gmra.mxu0 %v524
      %v637 = vpop.f32.mrf.mxu0
      %v638 = vadd.f32 %v609, %v637
      %v639 = vpop.f32.mrf.mxu0
      %v640 = vadd.f32 %v611, %v639
      %641 = vdwg.mxu0
      %v642 = vld [vmem:[%s2] sm:$0x1]
      %v644 = vperm.slane %v642, 0
      %v646 = vmul.f32 %v623, %v644
      %v647 = vmul.f32 %v625, %v644
      %v648 = vmul.f32 %v628, %v644
      %v649 = vmul.f32 %v630, %v644
      %v650 = vmul.f32 %v633, %v644
      %v651 = vmul.f32 %v635, %v644
      %v652 = vmul.f32 %v638, %v644
      %v653 = vmul.f32 %v640, %v644
      %v654 = vld [vmem:[%s3] sm:$0x1]
      %v656 = vperm.slane %v654, 0
      %v658 = vadd.f32 %v646, %v656
      %v659 = vadd.f32 %v647, %v656
      %v660 = vadd.f32 %v648, %v656
      %v661 = vadd.f32 %v649, %v656
      %v662 = vadd.f32 %v650, %v656
      %v663 = vadd.f32 %v651, %v656
      %v664 = vadd.f32 %v652, %v656
      %v665 = vadd.f32 %v653, %v656
      %v666 = vmax.f32 %v658, 0.0
      %v667 = vmax.f32 %v659, 0.0
      %v668 = vmax.f32 %v660, 0.0
      %v669 = vmax.f32 %v661, 0.0
      %v670 = vmax.f32 %v662, 0.0
      %v671 = vmax.f32 %v663, 0.0
      %v672 = vmax.f32 %v664, 0.0
      %v673 = vmax.f32 %v665, 0.0
      %674 = vst [vmem:[%s202] sm:$0xff] %v666
      %675 = vst [vmem:[%s202 + $0x8] sm:$0xff] %v667
      %676 = vst [vmem:[%s202 + $0x10] sm:$0xff] %v668
      %677 = vst [vmem:[%s202 + $0x18] sm:$0xff] %v669
      %678 = vst [vmem:[%s202 + $0x20] sm:$0xff] %v670
      %679 = vst [vmem:[%s202 + $0x28] sm:$0xff] %v671
      %680 = vst [vmem:[%s202 + $0x30] sm:$0xff] %v672
      %681 = vst [vmem:[%s202 + $0x38] sm:$0xff] %v673
      %s682 = smul.u32 8, %s15
      %p683 = scmp.lt.s32.totalorder %s682, 15
      %s684 = scalar_select %p683, %s682, 15
      %s685 = smul.addr %s684, 8
      %s686 = scalar_lea.vmem %s4, %s685
      // Predicated region
      $region37: #{_lambda_.8} parent=35 // pred_check
        %p687 = pneg %p122
      $region38: #{_lambda_.8} parent=35 // pred_check_branch
        %689 = sbr.rel (%p687) target = $region40
      $region39: #{_lambda_.8} parent=35 // pred_region
        %s690 = smul.u32 8, %s15
      $region40: #{_lambda_.8} parent=35 // pred_fallthru
        _
    $region36: #{_lambda_.8} parent=5 // pred_fallthru
      _
    %p691 = scmp.le.s32.totalorder 2, %s10
    // Predicated region
    $region41: #{_lambda_.8} parent=5 // pred_check
      %p692 = pneg %p691
    $region42: #{_lambda_.8} parent=5 // pred_check_branch
      %694 = sbr.rel (%p692) target = $region44
    $region43: #{_lambda_.8} parent=5 // pred_region
      %s695 = ssub.s32 %s10, 2
      // Predicated region
      $region45: #{_lambda_.8} parent=43 // pred_check
        %p696 = pneg %p128
      $region46: #{_lambda_.8} parent=43 // pred_check_branch
        %698 = sbr.rel (%p696) target = $region48
      $region47: #{_lambda_.8} parent=43 // pred_region
        %s699 = smul.u32 8, %s16
        %p700 = scmp.lt.s32.totalorder %s699, 15
        %s701 = scalar_select %p700, %s699, 15
        %s702 = smul.addr %s701, 8
        %s703 = scalar_lea.vmem %s4, %s702
      $region48: #{_lambda_.8} parent=43 // pred_fallthru
        _
    $region44: #{_lambda_.8} parent=5 // pred_fallthru
      _
  $region6: #{_lambda_.8} parent=0 // loop_footer
    %s14 = sadd.s32 1, %s10
  $region7: #{_lambda_.8} parent=0 // loop_footer_branch
    %9 = sbr.rel target = $region3
  $region8: #{_lambda_.8} parent=0 // loop_exit
    _

// kernel: _lambda_.9
$region0: #{_lambda_.9}
  #allocation0 [shape = 'u32[]', space=smem, size = 0x4, offset = 0x4, fixed_abs, tag = 'smem constant byte address 0x4 - core index']
  #allocation1 [shape = 'u32[72,128]{1,0:T(1,128)}', space=vmem, size = 0x9000, scoped, tag = 'internal scratch']
  %s0 = inlined_call_operand.vmem [shape: bf16[128,432], index: 0, kind: input, shape index: {}]
  %s1 = inlined_call_operand.vmem [shape: bf16[432,128], index: 1, kind: input, shape index: {}]
  %s2 = inlined_call_operand.vmem [shape: f32[1,128], index: 2, kind: input, shape index: {}]
  %s3 = inlined_call_operand.vmem [shape: f32[1,128], index: 3, kind: input, shape index: {}]
  %s4 = inlined_call_operand.vmem [shape: f32[128,128], index: 4, kind: input, shape index: {}]
  %s5 = inlined_call_operand.vmem [shape: f32[128,128], index: 5, kind: output, shape index: {}]
  %s6 = sld [smem:[#allocation0]]
  $region53: #{_lambda_.9} parent=0
    _
  %s8 = ssub.s32 1, %s6
  %s9 = scalar_select 0, %s8, %s6
  loop: start=0, step=1, limit=4
  $region2: #{_lambda_.9} parent=0 // loop_pre_header
    _
  $region3: #{_lambda_.9} parent=0 // loop_header
    %s11 = sphi 0, %s15
    %p12 = scmp.ge.s32.totalorder %s11, 4
    %s21 = sphi 0, %s23
    %s24 = sphi 0, %s21
    %s25 = sphi 0, %s24
    %s41 = sphi 0, %s25
    %s45 = sphi 0, %s45
    %s47 = sphi 0, %s45
    %s48 = sphi 0, %s47
    %s62 = sphi 0, %s48
    %s66 = sphi 0, %s66
    %s68 = sphi 0, %s66
    %s69 = sphi 0, %s68
    %s83 = sphi 0, %s69
    %s87 = sphi 0, %s87
    %s89 = sphi 0, %s87
    %s90 = sphi 0, %s89
    %s104 = sphi 0, %s90
    %s110 = sphi 0, %s112
    %s113 = sphi 0, %s110
    %s114 = sphi 0, %s113
    %s130 = sphi 0, %s114
    %s136 = sphi 0, %s138
    %s139 = sphi 0, %s136
    %s140 = sphi 0, %s139
    %s156 = sphi 0, %s140
  $region4: #{_lambda_.9} parent=0 // loop_header_branch
    %14 = sbr.rel (%p12) target = $region8
  $region5: #{_lambda_.9} parent=0 // loop_body
    %s16 = ssub.s32 %s11, 1
    %s17 = ssub.s32 %s11, 2
    %s18 = sadd.s32 %s11, 1
    %s19 = ssub.s32 %s11, %s18
    %p20 = scmp.eq.s32.totalorder %s19, 0
    %s22 = sadd.s32 %s21, 1
    %s23 = scalar_select %p20, %s21, %s22
    %p26 = pneg %p20
    %p27 = scmp.eq.s32.totalorder %s11, 1
    %p28 = por %p26, %p27
    %p29 = scmp.ne.s32.totalorder %s21, %s24
    %p30 = scmp.eq.s32.totalorder %s11, 0
    %p31 = por %p29, %p30
    %p32 = scmp.ne.s32.totalorder %s21, %s24
    %p33 = scmp.eq.s32.totalorder %s16, 1
    %p34 = por %p32, %p33
    %p35 = scmp.ne.s32.totalorder %s24, %s25
    %p36 = scmp.eq.s32.totalorder %s16, 0
    %p37 = por %p35, %p36
    %p38 = scmp.ne.s32.totalorder %s24, %s25
    %p39 = scmp.eq.s32.totalorder %s17, 1
    %p40 = por %p38, %p39
    %p42 = scmp.ne.s32.totalorder %s25, %s41
    %p43 = scmp.eq.s32.totalorder %s17, 0
    %p44 = por %p42, %p43
    %s46 = sadd.s32 %s45, 1
    %p49 = scmp.eq.s32.totalorder %s11, 1
    %p50 = scmp.ne.s32.totalorder %s45, %s47
    %p51 = scmp.eq.s32.totalorder %s11, 0
    %p52 = por %p50, %p51
    %p53 = scmp.ne.s32.totalorder %s45, %s47
    %p54 = scmp.eq.s32.totalorder %s16, 1
    %p55 = por %p53, %p54
    %p56 = scmp.ne.s32.totalorder %s47, %s48
    %p57 = scmp.eq.s32.totalorder %s16, 0
    %p58 = por %p56, %p57
    %p59 = scmp.ne.s32.totalorder %s47, %s48
    %p60 = scmp.eq.s32.totalorder %s17, 1
    %p61 = por %p59, %p60
    %p63 = scmp.ne.s32.totalorder %s48, %s62
    %p64 = scmp.eq.s32.totalorder %s17, 0
    %p65 = por %p63, %p64
    %s67 = sadd.s32 %s66, 1
    %p70 = scmp.eq.s32.totalorder %s11, 1
    %p71 = scmp.ne.s32.totalorder %s66, %s68
    %p72 = scmp.eq.s32.totalorder %s11, 0
    %p73 = por %p71, %p72
    %p74 = scmp.ne.s32.totalorder %s66, %s68
    %p75 = scmp.eq.s32.totalorder %s16, 1
    %p76 = por %p74, %p75
    %p77 = scmp.ne.s32.totalorder %s68, %s69
    %p78 = scmp.eq.s32.totalorder %s16, 0
    %p79 = por %p77, %p78
    %p80 = scmp.ne.s32.totalorder %s68, %s69
    %p81 = scmp.eq.s32.totalorder %s17, 1
    %p82 = por %p80, %p81
    %p84 = scmp.ne.s32.totalorder %s69, %s83
    %p85 = scmp.eq.s32.totalorder %s17, 0
    %p86 = por %p84, %p85
    %s88 = sadd.s32 %s87, 1
    %p91 = scmp.eq.s32.totalorder %s11, 1
    %p92 = scmp.ne.s32.totalorder %s87, %s89
    %p93 = scmp.eq.s32.totalorder %s11, 0
    %p94 = por %p92, %p93
    %p95 = scmp.ne.s32.totalorder %s87, %s89
    %p96 = scmp.eq.s32.totalorder %s16, 1
    %p97 = por %p95, %p96
    %p98 = scmp.ne.s32.totalorder %s89, %s90
    %p99 = scmp.eq.s32.totalorder %s16, 0
    %p100 = por %p98, %p99
    %p101 = scmp.ne.s32.totalorder %s89, %s90
    %p102 = scmp.eq.s32.totalorder %s17, 1
    %p103 = por %p101, %p102
    %p105 = scmp.ne.s32.totalorder %s90, %s104
    %p106 = scmp.eq.s32.totalorder %s17, 0
    %p107 = por %p105, %p106
    %s108 = ssub.s32 %s11, %s18
    %p109 = scmp.eq.s32.totalorder %s108, 0
    %s111 = sadd.s32 %s110, 1
    %s112 = scalar_select %p109, %s110, %s111
    %p115 = pneg %p109
    %p116 = scmp.eq.s32.totalorder %s11, 1
    %p117 = por %p115, %p116
    %p118 = scmp.ne.s32.totalorder %s110, %s113
    %p119 = scmp.eq.s32.totalorder %s11, 0
    %p120 = por %p118, %p119
    %p121 = scmp.ne.s32.totalorder %s110, %s113
    %p122 = scmp.eq.s32.totalorder %s16, 1
    %p123 = por %p121, %p122
    %p124 = scmp.ne.s32.totalorder %s113, %s114
    %p125 = scmp.eq.s32.totalorder %s16, 0
    %p126 = por %p124, %p125
    %p127 = scmp.ne.s32.totalorder %s113, %s114
    %p128 = scmp.eq.s32.totalorder %s17, 1
    %p129 = por %p127, %p128
    %p131 = scmp.ne.s32.totalorder %s114, %s130
    %p132 = scmp.eq.s32.totalorder %s17, 0
    %p133 = por %p131, %p132
    %s134 = ssub.s32 %s11, %s18
    %p135 = scmp.eq.s32.totalorder %s134, 0
    %s137 = sadd.s32 %s136, 1
    %s138 = scalar_select %p135, %s136, %s137
    %p141 = pneg %p135
    %p142 = scmp.eq.s32.totalorder %s11, 1
    %p143 = por %p141, %p142
    %p144 = scmp.ne.s32.totalorder %s136, %s139
    %p145 = scmp.eq.s32.totalorder %s11, 0
    %p146 = por %p144, %p145
    %p147 = scmp.ne.s32.totalorder %s136, %s139
    %p148 = scmp.eq.s32.totalorder %s16, 1
    %p149 = por %p147, %p148
    %p150 = scmp.ne.s32.totalorder %s139, %s140
    %p151 = scmp.eq.s32.totalorder %s16, 0
    %p152 = por %p150, %p151
    %p153 = scmp.ne.s32.totalorder %s139, %s140
    %p154 = scmp.eq.s32.totalorder %s17, 1
    %p155 = por %p153, %p154
    %p157 = scmp.ne.s32.totalorder %s140, %s156
    %p158 = scmp.eq.s32.totalorder %s17, 0
    %p159 = por %p157, %p158
    %p160 = scmp.le.s32.totalorder 1, %s11
    %p161 = scmp.lt.s32.totalorder %s11, 3
    %p162 = pnand %p160, %p161
    %p163 = pneg %p162
    // Predicated region
    $region9: #{_lambda_.9} parent=5 // pred_check
      _
    $region10: #{_lambda_.9} parent=5 // pred_check_branch
      %165 = sbr.rel (%p162) target = $region12
    $region11: #{_lambda_.9} parent=5 // pred_region
      %s166 = ssub.s32 %s11, 1
      // Predicated region
      $region13: #{_lambda_.9} parent=11 // pred_check
        %p167 = pneg %p58
      $region14: #{_lambda_.9} parent=11 // pred_check_branch
        %169 = sbr.rel (%p167) target = $region16
      $region15: #{_lambda_.9} parent=11 // pred_region
        _
      $region16: #{_lambda_.9} parent=11 // pred_fallthru
        _
      // Predicated region
      $region17: #{_lambda_.9} parent=11 // pred_check
        %p170 = pneg %p79
      $region18: #{_lambda_.9} parent=11 // pred_check_branch
        %172 = sbr.rel (%p170) target = $region20
      $region19: #{_lambda_.9} parent=11 // pred_region
        _
      $region20: #{_lambda_.9} parent=11 // pred_fallthru
        _
      // Predicated region
      $region21: #{_lambda_.9} parent=11 // pred_check
        %p173 = pneg %p100
      $region22: #{_lambda_.9} parent=11 // pred_check_branch
        %175 = sbr.rel (%p173) target = $region24
      $region23: #{_lambda_.9} parent=11 // pred_region
        _
      $region24: #{_lambda_.9} parent=11 // pred_fallthru
        _
    $region12: #{_lambda_.9} parent=5 // pred_fallthru
      _
    %p176 = scmp.lt.s32.totalorder %s11, 2
    // Predicated region
    $region25: #{_lambda_.9} parent=5 // pred_check
      %p177 = pneg %p176
    $region26: #{_lambda_.9} parent=5 // pred_check_branch
      %179 = sbr.rel (%p177) target = $region28
    $region27: #{_lambda_.9} parent=5 // pred_region
      // Predicated region
      $region29: #{_lambda_.9} parent=27 // pred_check
        %p180 = pneg %p31
      $region30: #{_lambda_.9} parent=27 // pred_check_branch
        %182 = sbr.rel (%p180) target = $region32
      $region31: #{_lambda_.9} parent=27 // pred_region
        %s183 = smul.u32 8, %s11
        %p184 = scmp.lt.s32.totalorder %s183, 15
        %s185 = scalar_select %p184, %s183, 15
        %s186 = smul.addr %s185, 4
        %s187 = smul.addr %s186, 4
        %s188 = scalar_lea.vmem %s0, %s187
        %s189 = smul.u32 8, %s11
      $region32: #{_lambda_.9} parent=27 // pred_fallthru
        _
      // Predicated region
      $region33: #{_lambda_.9} parent=27 // pred_check
        %p190 = pneg %p120
      $region34: #{_lambda_.9} parent=27 // pred_check_branch
        %192 = sbr.rel (%p190) target = $region36
      $region35: #{_lambda_.9} parent=27 // pred_region
        %s193 = smul.u32 8, %s11
        %p194 = scmp.lt.s32.totalorder %s193, 15
        %s195 = scalar_select %p194, %s193, 15
        %s196 = smul.addr %s195, 8
        %s197 = scalar_lea.vmem %s4, %s196
        %s198 = smul.u32 8, %s11
      $region36: #{_lambda_.9} parent=27 // pred_fallthru
        _
    $region28: #{_lambda_.9} parent=5 // pred_fallthru
      _
    %p199 = scmp.le.s32.totalorder 1, %s11
    %p200 = scmp.lt.s32.totalorder %s11, 3
    %p201 = pnand %p199, %p200
    %p202 = pneg %p201
    // Predicated region
    $region37: #{_lambda_.9} parent=5 // pred_check
      _
    $region38: #{_lambda_.9} parent=5 // pred_check_branch
      %204 = sbr.rel (%p201) target = $region40
    $region39: #{_lambda_.9} parent=5 // pred_region
      %s205 = ssub.s32 %s11, 1
      %s206 = smul.u32 8, %s16
      %p207 = scmp.lt.s32.totalorder %s206, 15
      %s208 = scalar_select %p207, %s206, 15
      %s209 = smul.addr %s208, 4
      %s210 = smul.addr %s209, 4
      %s211 = scalar_lea.vmem %s0, %s210
      %p212 = pneg %p37
      %p213 = pneg %p34
      %p214 = pneg %p58
      %p215 = pneg %p55
      %p216 = pneg %p79
      %p217 = pneg %p76
      %p218 = pneg %p100
      %p219 = pneg %p97
      %s220 = smul.u32 8, %s16
      %p221 = scmp.lt.s32.totalorder %s220, 15
      %s222 = scalar_select %p221, %s220, 15
      %s223 = smul.addr %s222, 8
      %s224 = scalar_lea.vmem %s4, %s223
      %p225 = pneg %p126
      %p226 = pneg %p123
      %p227 = pneg %p152
      %p228 = pneg %p149
      %s229 = smul.u32 8, %s16
      %p230 = scmp.lt.s32.totalorder %s229, 15
      %s231 = scalar_select %p230, %s229, 15
      %s232 = smul.addr %s231, 8
      %s233 = scalar_lea.vmem %s5, %s232
      %s234 = smul.u32 8, %s16
      %p235 = scmp.lt.s32.totalorder %s234, 15
      %s236 = scalar_select %p235, %s234, 15
      %s237 = smul.addr %s236, 4
      %s238 = smul.addr %s237, 4
      %s239 = scalar_lea.vmem %s0, %s238
      %s240 = smul.u32 8, %s16
      %s241 = smul.u32 8, %s16
      %p242 = scmp.lt.s32.totalorder %s241, 15
      %s243 = scalar_select %p242, %s241, 15
      %s244 = smul.addr %s243, 8
      %s245 = scalar_lea.vmem %s4, %s244
      %s246 = smul.u32 8, %s16
      %s247 = smul.u32 8, %s16
      %p248 = scmp.lt.s32.totalorder %s247, 15
      %s249 = scalar_select %p248, %s247, 15
      %s250 = smul.addr %s249, 8
      %s251 = scalar_lea.vmem %s5, %s250
      %s252 = smul.u32 8, %s16
      %v254 = vld [vmem:[%s239] sm:$0xff]
      %v255 = vld [vmem:[%s239 + $0x8] sm:$0xff]
      %v256 = vld [vmem:[%s239 + $0x10] sm:$0xff]
      %v257 = vld [vmem:[%s239 + $0x18] sm:$0xff]
      %v258 = vld [vmem:[%s239 + $0x20] sm:$0xff]
      %v259 = vld [vmem:[%s239 + $0x28] sm:$0xff]
      %v260 = vld [vmem:[%s239 + $0x30] sm:$0xff]
      %v261 = vld [vmem:[%s239 + $0x38] sm:$0xff]
      %v262 = vld [vmem:[%s239 + $0x40] sm:$0xff]
      %v263 = vld [vmem:[%s239 + $0x48] sm:$0xff]
      %v264 = vld [vmem:[%s239 + $0x50] sm:$0xff]
      %v265 = vld [vmem:[%s239 + $0x58] sm:$0xff]
      %v266 = vld [vmem:[%s239 + $0x60] sm:$0xff]
      %v267 = vld [vmem:[%s239 + $0x68] sm:$0xff]
      %v268 = vld [vmem:[%s239 + $0x70] sm:$0xff]
      %v269 = vld [vmem:[%s239 + $0x78] sm:$0xff]
      %v270 = vld [vmem:[%s1] sm:$0xf]
      %v271 = vld [vmem:[%s1 + $0x4] sm:$0xf]
      %v272 = vld [vmem:[%s1 + $0x8] sm:$0xf]
      %v273 = vld [vmem:[%s1 + $0xc] sm:$0xf]
      %v274 = vld [vmem:[%s1 + $0x10] sm:$0xf]
      %v275 = vld [vmem:[%s1 + $0x14] sm:$0xf]
      %v276 = vld [vmem:[%s1 + $0x18] sm:$0xf]
      %v277 = vld [vmem:[%s1 + $0x1c] sm:$0xf]
      %v278 = vld [vmem:[%s1 + $0x20] sm:$0xf]
      %v279 = vld [vmem:[%s1 + $0x24] sm:$0xf]
      %v280 = vld [vmem:[%s1 + $0x28] sm:$0xf]
      %v281 = vld [vmem:[%s1 + $0x2c] sm:$0xf]
      %v282 = vld [vmem:[%s1 + $0x30] sm:$0xf]
      %v283 = vld [vmem:[%s1 + $0x34] sm:$0xf]
      %v284 = vld [vmem:[%s1 + $0x38] sm:$0xf]
      %v285 = vld [vmem:[%s1 + $0x3c] sm:$0xf]
      %v286 = vld [vmem:[%s1 + $0x40] sm:$0xf]
      %v287 = vld [vmem:[%s1 + $0x44] sm:$0xf]
      %v288 = vld [vmem:[%s1 + $0x48] sm:$0xf]
      %v289 = vld [vmem:[%s1 + $0x4c] sm:$0xf]
      %v290 = vld [vmem:[%s1 + $0x50] sm:$0xf]
      %v291 = vld [vmem:[%s1 + $0x54] sm:$0xf]
      %v292 = vld [vmem:[%s1 + $0x58] sm:$0xf]
      %v293 = vld [vmem:[%s1 + $0x5c] sm:$0xf]
      %v294 = vld [vmem:[%s1 + $0x60] sm:$0xf]
      %v295 = vld [vmem:[%s1 + $0x64] sm:$0xf]
      %v296 = vld [vmem:[%s1 + $0x68] sm:$0xf]
      %v297 = vld [vmem:[%s1 + $0x6c] sm:$0xf]
      %v298 = vld [vmem:[%s1 + $0x70] sm:$0xf]
      %v299 = vld [vmem:[%s1 + $0x74] sm:$0xf]
      %v300 = vld [vmem:[%s1 + $0x78] sm:$0xf]
      %v301 = vld [vmem:[%s1 + $0x7c] sm:$0xf]
      %v302 = vld [vmem:[%s1 + $0x80] sm:$0xf]
      %v303 = vld [vmem:[%s1 + $0x84] sm:$0xf]
      %v304 = vld [vmem:[%s1 + $0x88] sm:$0xf]
      %v305 = vld [vmem:[%s1 + $0x8c] sm:$0xf]
      %v306 = vld [vmem:[%s1 + $0x90] sm:$0xf]
      %v307 = vld [vmem:[%s1 + $0x94] sm:$0xf]
      %v308 = vld [vmem:[%s1 + $0x98] sm:$0xf]
      %v309 = vld [vmem:[%s1 + $0x9c] sm:$0xf]
      %v310 = vld [vmem:[%s1 + $0xa0] sm:$0xf]
      %v311 = vld [vmem:[%s1 + $0xa4] sm:$0xf]
      %v312 = vld [vmem:[%s1 + $0xa8] sm:$0xf]
      %v313 = vld [vmem:[%s1 + $0xac] sm:$0xf]
      %v314 = vld [vmem:[%s1 + $0xb0] sm:$0xf]
      %v315 = vld [vmem:[%s1 + $0xb4] sm:$0xf]
      %v316 = vld [vmem:[%s1 + $0xb8] sm:$0xf]
      %v317 = vld [vmem:[%s1 + $0xbc] sm:$0xf]
      %v318 = vld [vmem:[%s1 + $0xc0] sm:$0xf]
      %v319 = vld [vmem:[%s1 + $0xc4] sm:$0xf]
      %v320 = vld [vmem:[%s1 + $0xc8] sm:$0xf]
      %v321 = vld [vmem:[%s1 + $0xcc] sm:$0xf]
      %v322 = vld [vmem:[%s1 + $0xd0] sm:$0xf]
      %v323 = vld [vmem:[%s1 + $0xd4] sm:$0xf]
      %v340 = vunpack.c.l.b16 %v254
      %v341 = vunpack.c.h.b16 %v254
      %v342 = vunpack.c.l.b16 %v255
      %v343 = vunpack.c.h.b16 %v255
      %v344 = vunpack.c.l.b16 %v256
      %v345 = vunpack.c.h.b16 %v256
      %v346 = vunpack.c.l.b16 %v257
      %v347 = vunpack.c.h.b16 %v257
      %v348 = vunpack.c.l.b16 %v258
      %v349 = vunpack.c.h.b16 %v258
      %v350 = vunpack.c.l.b16 %v259
      %v351 = vunpack.c.h.b16 %v259
      %v352 = vunpack.c.l.b16 %v260
      %v353 = vunpack.c.h.b16 %v260
      %v354 = vunpack.c.l.b16 %v261
      %v355 = vunpack.c.h.b16 %v261
      %v356 = vunpack.c.l.b16 %v262
      %v357 = vunpack.c.h.b16 %v262
      %v358 = vunpack.c.l.b16 %v263
      %v359 = vunpack.c.h.b16 %v263
      %v360 = vunpack.c.l.b16 %v264
      %v361 = vunpack.c.h.b16 %v264
      %v362 = vunpack.c.l.b16 %v265
      %v363 = vunpack.c.h.b16 %v265
      %v364 = vunpack.c.l.b16 %v266
      %v365 = vunpack.c.h.b16 %v266
      %v366 = vunpack.c.l.b16 %v267
      %v367 = vunpack.c.h.b16 %v267
      %v368 = vunpack.c.l.b16 %v268
      %v369 = vunpack.c.h.b16 %v268
      %v370 = vunpack.c.l.b16 %v269
      %v371 = vunpack.c.h.b16 %v269
      %v372 = vpack.c.b16 %v344, %v340
      %v373 = vpack.c.b16 %v345, %v341
      %v374 = vpack.c.b16 %v346, %v342
      %v375 = vpack.c.b16 %v347, %v343
      %v376 = vpack.c.b16 %v352, %v348
      %v377 = vpack.c.b16 %v353, %v349
      %v378 = vpack.c.b16 %v354, %v350
      %v379 = vpack.c.b16 %v355, %v351
      %v380 = vpack.c.b16 %v360, %v356
      %v381 = vpack.c.b16 %v361, %v357
      %v382 = vpack.c.b16 %v362, %v358
      %v383 = vpack.c.b16 %v363, %v359
      %v384 = vpack.c.b16 %v368, %v364
      %v385 = vpack.c.b16 %v369, %v365
      %v386 = vpack.c.b16 %v370, %v366
      %v387 = vpack.c.b16 %v371, %v367
      %v454 = vunpack.c.l.b16 %v270
      %v455 = vunpack.c.l.b16 %v271
      %v456 = vunpack.c.l.b16 %v272
      %v457 = vunpack.c.l.b16 %v273
      %v458 = vunpack.c.l.b16 %v274
      %v459 = vunpack.c.l.b16 %v275
      %v460 = vunpack.c.l.b16 %v276
      %v461 = vunpack.c.l.b16 %v277
      %v462 = vunpack.c.l.b16 %v278
      %v463 = vunpack.c.l.b16 %v279
      %v464 = vunpack.c.l.b16 %v280
      %v465 = vunpack.c.l.b16 %v281
      %v466 = vunpack.c.l.b16 %v282
      %v467 = vunpack.c.l.b16 %v283
      %v468 = vunpack.c.l.b16 %v284
      %v469 = vunpack.c.l.b16 %v285
      %v470 = vunpack.c.l.b16 %v286
      %v471 = vunpack.c.l.b16 %v287
      %v472 = vunpack.c.l.b16 %v288
      %v473 = vunpack.c.l.b16 %v289
      %v474 = vunpack.c.l.b16 %v290
      %v475 = vunpack.c.l.b16 %v291
      %v476 = vunpack.c.l.b16 %v292
      %v477 = vunpack.c.l.b16 %v293
      %v478 = vunpack.c.l.b16 %v294
      %v479 = vunpack.c.l.b16 %v295
      %v480 = vunpack.c.l.b16 %v296
      %v481 = vunpack.c.l.b16 %v297
      %v482 = vunpack.c.l.b16 %v298
      %v483 = vunpack.c.l.b16 %v299
      %v484 = vunpack.c.l.b16 %v300
      %v485 = vunpack.c.l.b16 %v301
      %v486 = vunpack.c.l.b16 %v302
      %v487 = vunpack.c.l.b16 %v303
      %v488 = vunpack.c.l.b16 %v304
      %v489 = vunpack.c.l.b16 %v305
      %v490 = vunpack.c.l.b16 %v306
      %v491 = vunpack.c.l.b16 %v307
      %v492 = vunpack.c.l.b16 %v308
      %v493 = vunpack.c.l.b16 %v309
      %v494 = vunpack.c.l.b16 %v310
      %v495 = vunpack.c.l.b16 %v311
      %v496 = vunpack.c.l.b16 %v312
      %v497 = vunpack.c.l.b16 %v313
      %v498 = vunpack.c.l.b16 %v314
      %v499 = vunpack.c.l.b16 %v315
      %v500 = vunpack.c.l.b16 %v316
      %v501 = vunpack.c.l.b16 %v317
      %v502 = vunpack.c.l.b16 %v318
      %v503 = vunpack.c.l.b16 %v319
      %v504 = vunpack.c.l.b16 %v320
      %v505 = vunpack.c.l.b16 %v321
      %v506 = vunpack.c.l.b16 %v322
      %v507 = vunpack.c.l.b16 %v323
      %v508 = vpack.c.b16 %v455, %v454
      %v509 = vpack.c.b16 %v457, %v456
      %v510 = vpack.c.b16 %v459, %v458
      %v511 = vpack.c.b16 %v461, %v460
      %v512 = vpack.c.b16 %v463, %v462
      %v513 = vpack.c.b16 %v465, %v464
      %v514 = vpack.c.b16 %v467, %v466
      %v515 = vpack.c.b16 %v469, %v468
      %v516 = vpack.c.b16 %v471, %v470
      %v517 = vpack.c.b16 %v473, %v472
      %v518 = vpack.c.b16 %v475, %v474
      %v519 = vpack.c.b16 %v477, %v476
      %v520 = vpack.c.b16 %v479, %v478
      %v521 = vpack.c.b16 %v481, %v480
      %v522 = vpack.c.b16 %v483, %v482
      %v523 = vpack.c.b16 %v485, %v484
      %v524 = vpack.c.b16 %v487, %v486
      %v525 = vpack.c.b16 %v489, %v488
      %v526 = vpack.c.b16 %v491, %v490
      %v527 = vpack.c.b16 %v493, %v492
      %v528 = vpack.c.b16 %v495, %v494
      %v529 = vpack.c.b16 %v497, %v496
      %v530 = vpack.c.b16 %v499, %v498
      %v531 = vpack.c.b16 %v501, %v500
      %v532 = vpack.c.b16 %v503, %v502
      %v533 = vpack.c.b16 %v505, %v504
      %v534 = vpack.c.b16 %v507, %v506
      %vm562 = vcmask 392192
      %v564 = vsel %vm562, %v375, 0
      %v567 = vsel %vm562, %v379, 0
      %v570 = vsel %vm562, %v383, 0
      %v573 = vsel %vm562, %v387, 0
      %575 = vmatpush.bf16.msra.mxu0 %v515
      %576 = vmatpush.bf16.msra.mxu0 %v514
      %577 = vmatpush.bf16.msra.mxu0 %v513
      %578 = vmatpush.bf16.msra.mxu0 %v512
      %579 = vmatpush.bf16.msra.mxu0 %v511
      %580 = vmatpush.bf16.msra.mxu0 %v510
      %581 = vmatpush.bf16.msra.mxu0 %v509
      %582 = vmatpush.bf16.msra.mxu0 %v508
      %583 = vmatmul.bf16.gmra.mxu0 %v372
      %v584 = vpop.f32.mrf.mxu0
      %v585 = vadd.f32 0.0, %v584
      %v586 = vpop.f32.mrf.mxu0
      %v587 = vadd.f32 0.0, %v586
      %588 = vmatmul.bf16.gmra.mxu0 %v376
      %v589 = vpop.f32.mrf.mxu0
      %v590 = vadd.f32 0.0, %v589
      %v591 = vpop.f32.mrf.mxu0
      %v592 = vadd.f32 0.0, %v591
      %593 = vmatmul.bf16.gmra.mxu0 %v380
      %v594 = vpop.f32.mrf.mxu0
      %v595 = vadd.f32 0.0, %v594
      %v596 = vpop.f32.mrf.mxu0
      %v597 = vadd.f32 0.0, %v596
      %598 = vmatmul.bf16.gmra.mxu0 %v384
      %v599 = vpop.f32.mrf.mxu0
      %v600 = vadd.f32 0.0, %v599
      %v601 = vpop.f32.mrf.mxu0
      %v602 = vadd.f32 0.0, %v601
      %603 = vdwg.mxu0
      %604 = vmatpush.bf16.msra.mxu0 %v523
      %605 = vmatpush.bf16.msra.mxu0 %v522
      %606 = vmatpush.bf16.msra.mxu0 %v521
      %607 = vmatpush.bf16.msra.mxu0 %v520
      %608 = vmatpush.bf16.msra.mxu0 %v519
      %609 = vmatpush.bf16.msra.mxu0 %v518
      %610 = vmatpush.bf16.msra.mxu0 %v517
      %611 = vmatpush.bf16.msra.mxu0 %v516
      %612 = vmatmul.bf16.gmra.mxu0 %v373
      %v613 = vpop.f32.mrf.mxu0
      %v614 = vadd.f32 %v585, %v613
      %v615 = vpop.f32.mrf.mxu0
      %v616 = vadd.f32 %v587, %v615
      %617 = vmatmul.bf16.gmra.mxu0 %v377
      %v618 = vpop.f32.mrf.mxu0
      %v619 = vadd.f32 %v590, %v618
      %v620 = vpop.f32.mrf.mxu0
      %v621 = vadd.f32 %v592, %v620
      %622 = vmatmul.bf16.gmra.mxu0 %v381
      %v623 = vpop.f32.mrf.mxu0
      %v624 = vadd.f32 %v595, %v623
      %v625 = vpop.f32.mrf.mxu0
      %v626 = vadd.f32 %v597, %v625
      %627 = vmatmul.bf16.gmra.mxu0 %v385
      %v628 = vpop.f32.mrf.mxu0
      %v629 = vadd.f32 %v600, %v628
      %v630 = vpop.f32.mrf.mxu0
      %v631 = vadd.f32 %v602, %v630
      %632 = vdwg.mxu0
      %633 = vmatpush.bf16.msra.mxu0 %v531
      %634 = vmatpush.bf16.msra.mxu0 %v530
      %635 = vmatpush.bf16.msra.mxu0 %v529
      %636 = vmatpush.bf16.msra.mxu0 %v528
      %637 = vmatpush.bf16.msra.mxu0 %v527
      %638 = vmatpush.bf16.msra.mxu0 %v526
      %639 = vmatpush.bf16.msra.mxu0 %v525
      %640 = vmatpush.bf16.msra.mxu0 %v524
      %641 = vmatmul.bf16.gmra.mxu0 %v374
      %v642 = vpop.f32.mrf.mxu0
      %v643 = vadd.f32 %v614, %v642
      %v644 = vpop.f32.mrf.mxu0
      %v645 = vadd.f32 %v616, %v644
      %646 = vmatmul.bf16.gmra.mxu0 %v378
      %v647 = vpop.f32.mrf.mxu0
      %v648 = vadd.f32 %v619, %v647
      %v649 = vpop.f32.mrf.mxu0
      %v650 = vadd.f32 %v621, %v649
      %651 = vmatmul.bf16.gmra.mxu0 %v382
      %v652 = vpop.f32.mrf.mxu0
      %v653 = vadd.f32 %v624, %v652
      %v654 = vpop.f32.mrf.mxu0
      %v655 = vadd.f32 %v626, %v654
      %656 = vmatmul.bf16.gmra.mxu0 %v386
      %v657 = vpop.f32.mrf.mxu0
      %v658 = vadd.f32 %v629, %v657
      %v659 = vpop.f32.mrf.mxu0
      %v660 = vadd.f32 %v631, %v659
      %661 = vdwg.mxu0
      %662 = vmatpush.bf16.msra.mxu0 0
      %663 = vmatpush.bf16.msra.mxu0 0
      %664 = vmatpush.bf16.msra.mxu0 0
      %665 = vmatpush.bf16.msra.mxu0 0
      %666 = vmatpush.bf16.msra.mxu0 0
      %667 = vmatpush.bf16.msra.mxu0 %v534
      %668 = vmatpush.bf16.msra.mxu0 %v533
      %669 = vmatpush.bf16.msra.mxu0 %v532
      %670 = vmatmul.bf16.gmra.mxu0 %v564
      %v671 = vpop.f32.mrf.mxu0
      %v672 = vadd.f32 %v643, %v671
      %v673 = vpop.f32.mrf.mxu0
      %v674 = vadd.f32 %v645, %v673
      %675 = vmatmul.bf16.gmra.mxu0 %v567
      %v676 = vpop.f32.mrf.mxu0
      %v677 = vadd.f32 %v648, %v676
      %v678 = vpop.f32.mrf.mxu0
      %v679 = vadd.f32 %v650, %v678
      %680 = vmatmul.bf16.gmra.mxu0 %v570
      %v681 = vpop.f32.mrf.mxu0
      %v682 = vadd.f32 %v653, %v681
      %v683 = vpop.f32.mrf.mxu0
      %v684 = vadd.f32 %v655, %v683
      %685 = vmatmul.bf16.gmra.mxu0 %v573
      %v686 = vpop.f32.mrf.mxu0
      %v687 = vadd.f32 %v658, %v686
      %v688 = vpop.f32.mrf.mxu0
      %v689 = vadd.f32 %v660, %v688
      %690 = vdwg.mxu0
      %v691 = vld [vmem:[%s2] sm:$0x1]
      %v693 = vperm.slane %v691, 0
      %v695 = vmul.f32 %v672, %v693
      %v696 = vmul.f32 %v674, %v693
      %v697 = vmul.f32 %v677, %v693
      %v698 = vmul.f32 %v679, %v693
      %v699 = vmul.f32 %v682, %v693
      %v700 = vmul.f32 %v684, %v693
      %v701 = vmul.f32 %v687, %v693
      %v702 = vmul.f32 %v689, %v693
      %v703 = vld [vmem:[%s3] sm:$0x1]
      %v705 = vperm.slane %v703, 0
      %v707 = vadd.f32 %v695, %v705
      %v708 = vadd.f32 %v696, %v705
      %v709 = vadd.f32 %v697, %v705
      %v710 = vadd.f32 %v698, %v705
      %v711 = vadd.f32 %v699, %v705
      %v712 = vadd.f32 %v700, %v705
      %v713 = vadd.f32 %v701, %v705
      %v714 = vadd.f32 %v702, %v705
      %v715 = vld [vmem:[%s245] sm:$0xff]
      %v716 = vld [vmem:[%s245 + $0x8] sm:$0xff]
      %v717 = vld [vmem:[%s245 + $0x10] sm:$0xff]
      %v718 = vld [vmem:[%s245 + $0x18] sm:$0xff]
      %v719 = vld [vmem:[%s245 + $0x20] sm:$0xff]
      %v720 = vld [vmem:[%s245 + $0x28] sm:$0xff]
      %v721 = vld [vmem:[%s245 + $0x30] sm:$0xff]
      %v722 = vld [vmem:[%s245 + $0x38] sm:$0xff]
      %v723 = vadd.f32 %v707, %v715
      %v724 = vadd.f32 %v708, %v716
      %v725 = vadd.f32 %v709, %v717
      %v726 = vadd.f32 %v710, %v718
      %v727 = vadd.f32 %v711, %v719
      %v728 = vadd.f32 %v712, %v720
      %v729 = vadd.f32 %v713, %v721
      %v730 = vadd.f32 %v714, %v722
      %v731 = vmax.f32 %v723, 0.0
      %v732 = vmax.f32 %v724, 0.0
      %v733 = vmax.f32 %v725, 0.0
      %v734 = vmax.f32 %v726, 0.0
      %v735 = vmax.f32 %v727, 0.0
      %v736 = vmax.f32 %v728, 0.0
      %v737 = vmax.f32 %v729, 0.0
      %v738 = vmax.f32 %v730, 0.0
      %739 = vst [vmem:[%s251] sm:$0xff] %v731
      %740 = vst [vmem:[%s251 + $0x8] sm:$0xff] %v732
      %741 = vst [vmem:[%s251 + $0x10] sm:$0xff] %v733
      %742 = vst [vmem:[%s251 + $0x18] sm:$0xff] %v734
      %743 = vst [vmem:[%s251 + $0x20] sm:$0xff] %v735
      %744 = vst [vmem:[%s251 + $0x28] sm:$0xff] %v736
      %745 = vst [vmem:[%s251 + $0x30] sm:$0xff] %v737
      %746 = vst [vmem:[%s251 + $0x38] sm:$0xff] %v738
      %s747 = smul.u32 8, %s16
      %p748 = scmp.lt.s32.totalorder %s747, 15
      %s749 = scalar_select %p748, %s747, 15
      %s750 = smul.addr %s749, 8
      %s751 = scalar_lea.vmem %s5, %s750
      // Predicated region
      $region41: #{_lambda_.9} parent=39 // pred_check
        %p752 = pneg %p149
      $region42: #{_lambda_.9} parent=39 // pred_check_branch
        %754 = sbr.rel (%p752) target = $region44
      $region43: #{_lambda_.9} parent=39 // pred_region
        %s755 = smul.u32 8, %s16
      $region44: #{_lambda_.9} parent=39 // pred_fallthru
        _
    $region40: #{_lambda_.9} parent=5 // pred_fallthru
      _
    %p756 = scmp.le.s32.totalorder 2, %s11
    // Predicated region
    $region45: #{_lambda_.9} parent=5 // pred_check
      %p757 = pneg %p756
    $region46: #{_lambda_.9} parent=5 // pred_check_branch
      %759 = sbr.rel (%p757) target = $region48
    $region47: #{_lambda_.9} parent=5 // pred_region
      %s760 = ssub.s32 %s11, 2
      // Predicated region
      $region49: #{_lambda_.9} parent=47 // pred_check
        %p761 = pneg %p155
      $region50: #{_lambda_.9} parent=47 // pred_check_branch
        %763 = sbr.rel (%p761) target = $region52
      $region51: #{_lambda_.9} parent=47 // pred_region
        %s764 = smul.u32 8, %s17
        %p765 = scmp.lt.s32.totalorder %s764, 15
        %s766 = scalar_select %p765, %s764, 15
        %s767 = smul.addr %s766, 8
        %s768 = scalar_lea.vmem %s5, %s767
      $region52: #{_lambda_.9} parent=47 // pred_fallthru
        _
    $region48: #{_lambda_.9} parent=5 // pred_fallthru
      _
  $region6: #{_lambda_.9} parent=0 // loop_footer
    %s15 = sadd.s32 1, %s11
  $region7: #{_lambda_.9} parent=0 // loop_footer_branch
    %10 = sbr.rel target = $region3
  $region8: #{_lambda_.9} parent=0 // loop_exit
    _

// kernel: _lambda_.7
$region0: #{_lambda_.7}
  #allocation0 [shape = 'u32[]', space=smem, size = 0x4, offset = 0x4, fixed_abs, tag = 'smem constant byte address 0x4 - core index']
  #allocation1 [shape = 'u32[72,128]{1,0:T(1,128)}', space=vmem, size = 0x9000, scoped, tag = 'internal scratch']
  %s0 = inlined_call_operand.vmem [shape: bf16[128,432], index: 0, kind: input, shape index: {}]
  %s1 = inlined_call_operand.vmem [shape: bf16[432,128], index: 1, kind: input, shape index: {}]
  %s2 = inlined_call_operand.vmem [shape: f32[1,128], index: 2, kind: input, shape index: {}]
  %s3 = inlined_call_operand.vmem [shape: f32[1,128], index: 3, kind: input, shape index: {}]
  %s4 = inlined_call_operand.vmem [shape: bf16[128,3], index: 4, kind: input, shape index: {}]
  %s5 = inlined_call_operand.vmem [shape: bf16[3,128], index: 5, kind: input, shape index: {}]
  %s6 = inlined_call_operand.vmem [shape: f32[1,128], index: 6, kind: input, shape index: {}]
  %s7 = inlined_call_operand.vmem [shape: f32[128,128], index: 7, kind: output, shape index: {}]
  %s8 = sld [smem:[#allocation0]]
  $region61: #{_lambda_.7} parent=0
    _
  %s10 = ssub.s32 1, %s8
  %s11 = scalar_select 0, %s10, %s8
  loop: start=0, step=1, limit=4
  $region2: #{_lambda_.7} parent=0 // loop_pre_header
    _
  $region3: #{_lambda_.7} parent=0 // loop_header
    %s13 = sphi 0, %s17
    %p14 = scmp.ge.s32.totalorder %s13, 4
    %s23 = sphi 0, %s25
    %s26 = sphi 0, %s23
    %s27 = sphi 0, %s26
    %s43 = sphi 0, %s27
    %s47 = sphi 0, %s47
    %s49 = sphi 0, %s47
    %s50 = sphi 0, %s49
    %s64 = sphi 0, %s50
    %s68 = sphi 0, %s68
    %s70 = sphi 0, %s68
    %s71 = sphi 0, %s70
    %s85 = sphi 0, %s71
    %s89 = sphi 0, %s89
    %s91 = sphi 0, %s89
    %s92 = sphi 0, %s91
    %s106 = sphi 0, %s92
    %s112 = sphi 0, %s114
    %s115 = sphi 0, %s112
    %s116 = sphi 0, %s115
    %s132 = sphi 0, %s116
    %s136 = sphi 0, %s136
    %s138 = sphi 0, %s136
    %s139 = sphi 0, %s138
    %s153 = sphi 0, %s139
    %s157 = sphi 0, %s157
    %s159 = sphi 0, %s157
    %s160 = sphi 0, %s159
    %s174 = sphi 0, %s160
    %s180 = sphi 0, %s182
    %s183 = sphi 0, %s180
    %s184 = sphi 0, %s183
    %s200 = sphi 0, %s184
  $region4: #{_lambda_.7} parent=0 // loop_header_branch
    %16 = sbr.rel (%p14) target = $region8
  $region5: #{_lambda_.7} parent=0 // loop_body
    %s18 = ssub.s32 %s13, 1
    %s19 = ssub.s32 %s13, 2
    %s20 = sadd.s32 %s13, 1
    %s21 = ssub.s32 %s13, %s20
    %p22 = scmp.eq.s32.totalorder %s21, 0
    %s24 = sadd.s32 %s23, 1
    %s25 = scalar_select %p22, %s23, %s24
    %p28 = pneg %p22
    %p29 = scmp.eq.s32.totalorder %s13, 1
    %p30 = por %p28, %p29
    %p31 = scmp.ne.s32.totalorder %s23, %s26
    %p32 = scmp.eq.s32.totalorder %s13, 0
    %p33 = por %p31, %p32
    %p34 = scmp.ne.s32.totalorder %s23, %s26
    %p35 = scmp.eq.s32.totalorder %s18, 1
    %p36 = por %p34, %p35
    %p37 = scmp.ne.s32.totalorder %s26, %s27
    %p38 = scmp.eq.s32.totalorder %s18, 0
    %p39 = por %p37, %p38
    %p40 = scmp.ne.s32.totalorder %s26, %s27
    %p41 = scmp.eq.s32.totalorder %s19, 1
    %p42 = por %p40, %p41
    %p44 = scmp.ne.s32.totalorder %s27, %s43
    %p45 = scmp.eq.s32.totalorder %s19, 0
    %p46 = por %p44, %p45
    %s48 = sadd.s32 %s47, 1
    %p51 = scmp.eq.s32.totalorder %s13, 1
    %p52 = scmp.ne.s32.totalorder %s47, %s49
    %p53 = scmp.eq.s32.totalorder %s13, 0
    %p54 = por %p52, %p53
    %p55 = scmp.ne.s32.totalorder %s47, %s49
    %p56 = scmp.eq.s32.totalorder %s18, 1
    %p57 = por %p55, %p56
    %p58 = scmp.ne.s32.totalorder %s49, %s50
    %p59 = scmp.eq.s32.totalorder %s18, 0
    %p60 = por %p58, %p59
    %p61 = scmp.ne.s32.totalorder %s49, %s50
    %p62 = scmp.eq.s32.totalorder %s19, 1
    %p63 = por %p61, %p62
    %p65 = scmp.ne.s32.totalorder %s50, %s64
    %p66 = scmp.eq.s32.totalorder %s19, 0
    %p67 = por %p65, %p66
    %s69 = sadd.s32 %s68, 1
    %p72 = scmp.eq.s32.totalorder %s13, 1
    %p73 = scmp.ne.s32.totalorder %s68, %s70
    %p74 = scmp.eq.s32.totalorder %s13, 0
    %p75 = por %p73, %p74
    %p76 = scmp.ne.s32.totalorder %s68, %s70
    %p77 = scmp.eq.s32.totalorder %s18, 1
    %p78 = por %p76, %p77
    %p79 = scmp.ne.s32.totalorder %s70, %s71
    %p80 = scmp.eq.s32.totalorder %s18, 0
    %p81 = por %p79, %p80
    %p82 = scmp.ne.s32.totalorder %s70, %s71
    %p83 = scmp.eq.s32.totalorder %s19, 1
    %p84 = por %p82, %p83
    %p86 = scmp.ne.s32.totalorder %s71, %s85
    %p87 = scmp.eq.s32.totalorder %s19, 0
    %p88 = por %p86, %p87
    %s90 = sadd.s32 %s89, 1
    %p93 = scmp.eq.s32.totalorder %s13, 1
    %p94 = scmp.ne.s32.totalorder %s89, %s91
    %p95 = scmp.eq.s32.totalorder %s13, 0
    %p96 = por %p94, %p95
    %p97 = scmp.ne.s32.totalorder %s89, %s91
    %p98 = scmp.eq.s32.totalorder %s18, 1
    %p99 = por %p97, %p98
    %p100 = scmp.ne.s32.totalorder %s91, %s92
    %p101 = scmp.eq.s32.totalorder %s18, 0
    %p102 = por %p100, %p101
    %p103 = scmp.ne.s32.totalorder %s91, %s92
    %p104 = scmp.eq.s32.totalorder %s19, 1
    %p105 = por %p103, %p104
    %p107 = scmp.ne.s32.totalorder %s92, %s106
    %p108 = scmp.eq.s32.totalorder %s19, 0
    %p109 = por %p107, %p108
    %s110 = ssub.s32 %s13, %s20
    %p111 = scmp.eq.s32.totalorder %s110, 0
    %s113 = sadd.s32 %s112, 1
    %s114 = scalar_select %p111, %s112, %s113
    %p117 = pneg %p111
    %p118 = scmp.eq.s32.totalorder %s13, 1
    %p119 = por %p117, %p118
    %p120 = scmp.ne.s32.totalorder %s112, %s115
    %p121 = scmp.eq.s32.totalorder %s13, 0
    %p122 = por %p120, %p121
    %p123 = scmp.ne.s32.totalorder %s112, %s115
    %p124 = scmp.eq.s32.totalorder %s18, 1
    %p125 = por %p123, %p124
    %p126 = scmp.ne.s32.totalorder %s115, %s116
    %p127 = scmp.eq.s32.totalorder %s18, 0
    %p128 = por %p126, %p127
    %p129 = scmp.ne.s32.totalorder %s115, %s116
    %p130 = scmp.eq.s32.totalorder %s19, 1
    %p131 = por %p129, %p130
    %p133 = scmp.ne.s32.totalorder %s116, %s132
    %p134 = scmp.eq.s32.totalorder %s19, 0
    %p135 = por %p133, %p134
    %s137 = sadd.s32 %s136, 1
    %p140 = scmp.eq.s32.totalorder %s13, 1
    %p141 = scmp.ne.s32.totalorder %s136, %s138
    %p142 = scmp.eq.s32.totalorder %s13, 0
    %p143 = por %p141, %p142
    %p144 = scmp.ne.s32.totalorder %s136, %s138
    %p145 = scmp.eq.s32.totalorder %s18, 1
    %p146 = por %p144, %p145
    %p147 = scmp.ne.s32.totalorder %s138, %s139
    %p148 = scmp.eq.s32.totalorder %s18, 0
    %p149 = por %p147, %p148
    %p150 = scmp.ne.s32.totalorder %s138, %s139
    %p151 = scmp.eq.s32.totalorder %s19, 1
    %p152 = por %p150, %p151
    %p154 = scmp.ne.s32.totalorder %s139, %s153
    %p155 = scmp.eq.s32.totalorder %s19, 0
    %p156 = por %p154, %p155
    %s158 = sadd.s32 %s157, 1
    %p161 = scmp.eq.s32.totalorder %s13, 1
    %p162 = scmp.ne.s32.totalorder %s157, %s159
    %p163 = scmp.eq.s32.totalorder %s13, 0
    %p164 = por %p162, %p163
    %p165 = scmp.ne.s32.totalorder %s157, %s159
    %p166 = scmp.eq.s32.totalorder %s18, 1
    %p167 = por %p165, %p166
    %p168 = scmp.ne.s32.totalorder %s159, %s160
    %p169 = scmp.eq.s32.totalorder %s18, 0
    %p170 = por %p168, %p169
    %p171 = scmp.ne.s32.totalorder %s159, %s160
    %p172 = scmp.eq.s32.totalorder %s19, 1
    %p173 = por %p171, %p172
    %p175 = scmp.ne.s32.totalorder %s160, %s174
    %p176 = scmp.eq.s32.totalorder %s19, 0
    %p177 = por %p175, %p176
    %s178 = ssub.s32 %s13, %s20
    %p179 = scmp.eq.s32.totalorder %s178, 0
    %s181 = sadd.s32 %s180, 1
    %s182 = scalar_select %p179, %s180, %s181
    %p185 = pneg %p179
    %p186 = scmp.eq.s32.totalorder %s13, 1
    %p187 = por %p185, %p186
    %p188 = scmp.ne.s32.totalorder %s180, %s183
    %p189 = scmp.eq.s32.totalorder %s13, 0
    %p190 = por %p188, %p189
    %p191 = scmp.ne.s32.totalorder %s180, %s183
    %p192 = scmp.eq.s32.totalorder %s18, 1
    %p193 = por %p191, %p192
    %p194 = scmp.ne.s32.totalorder %s183, %s184
    %p195 = scmp.eq.s32.totalorder %s18, 0
    %p196 = por %p194, %p195
    %p197 = scmp.ne.s32.totalorder %s183, %s184
    %p198 = scmp.eq.s32.totalorder %s19, 1
    %p199 = por %p197, %p198
    %p201 = scmp.ne.s32.totalorder %s184, %s200
    %p202 = scmp.eq.s32.totalorder %s19, 0
    %p203 = por %p201, %p202
    %p204 = scmp.le.s32.totalorder 1, %s13
    %p205 = scmp.lt.s32.totalorder %s13, 3
    %p206 = pnand %p204, %p205
    %p207 = pneg %p206
    // Predicated region
    $region9: #{_lambda_.7} parent=5 // pred_check
      _
    $region10: #{_lambda_.7} parent=5 // pred_check_branch
      %209 = sbr.rel (%p206) target = $region12
    $region11: #{_lambda_.7} parent=5 // pred_region
      %s210 = ssub.s32 %s13, 1
      // Predicated region
      $region13: #{_lambda_.7} parent=11 // pred_check
        %p211 = pneg %p60
      $region14: #{_lambda_.7} parent=11 // pred_check_branch
        %213 = sbr.rel (%p211) target = $region16
      $region15: #{_lambda_.7} parent=11 // pred_region
        _
      $region16: #{_lambda_.7} parent=11 // pred_fallthru
        _
      // Predicated region
      $region17: #{_lambda_.7} parent=11 // pred_check
        %p214 = pneg %p81
      $region18: #{_lambda_.7} parent=11 // pred_check_branch
        %216 = sbr.rel (%p214) target = $region20
      $region19: #{_lambda_.7} parent=11 // pred_region
        _
      $region20: #{_lambda_.7} parent=11 // pred_fallthru
        _
      // Predicated region
      $region21: #{_lambda_.7} parent=11 // pred_check
        %p217 = pneg %p102
      $region22: #{_lambda_.7} parent=11 // pred_check_branch
        %219 = sbr.rel (%p217) target = $region24
      $region23: #{_lambda_.7} parent=11 // pred_region
        _
      $region24: #{_lambda_.7} parent=11 // pred_fallthru
        _
      // Predicated region
      $region25: #{_lambda_.7} parent=11 // pred_check
        %p220 = pneg %p149
      $region26: #{_lambda_.7} parent=11 // pred_check_branch
        %222 = sbr.rel (%p220) target = $region28
      $region27: #{_lambda_.7} parent=11 // pred_region
        _
      $region28: #{_lambda_.7} parent=11 // pred_fallthru
        _
      // Predicated region
      $region29: #{_lambda_.7} parent=11 // pred_check
        %p223 = pneg %p170
      $region30: #{_lambda_.7} parent=11 // pred_check_branch
        %225 = sbr.rel (%p223) target = $region32
      $region31: #{_lambda_.7} parent=11 // pred_region
        _
      $region32: #{_lambda_.7} parent=11 // pred_fallthru
        _
    $region12: #{_lambda_.7} parent=5 // pred_fallthru
      _
    %p226 = scmp.lt.s32.totalorder %s13, 2
    // Predicated region
    $region33: #{_lambda_.7} parent=5 // pred_check
      %p227 = pneg %p226
    $region34: #{_lambda_.7} parent=5 // pred_check_branch
      %229 = sbr.rel (%p227) target = $region36
    $region35: #{_lambda_.7} parent=5 // pred_region
      // Predicated region
      $region37: #{_lambda_.7} parent=35 // pred_check
        %p230 = pneg %p33
      $region38: #{_lambda_.7} parent=35 // pred_check_branch
        %232 = sbr.rel (%p230) target = $region40
      $region39: #{_lambda_.7} parent=35 // pred_region
        %s233 = smul.u32 8, %s13
        %p234 = scmp.lt.s32.totalorder %s233, 15
        %s235 = scalar_select %p234, %s233, 15
        %s236 = smul.addr %s235, 4
        %s237 = smul.addr %s236, 4
        %s238 = scalar_lea.vmem %s0, %s237
        %s239 = smul.u32 8, %s13
      $region40: #{_lambda_.7} parent=35 // pred_fallthru
        _
      // Predicated region
      $region41: #{_lambda_.7} parent=35 // pred_check
        %p240 = pneg %p122
      $region42: #{_lambda_.7} parent=35 // pred_check_branch
        %242 = sbr.rel (%p240) target = $region44
      $region43: #{_lambda_.7} parent=35 // pred_region
        %s243 = smul.u32 8, %s13
        %p244 = scmp.lt.s32.totalorder %s243, 15
        %s245 = scalar_select %p244, %s243, 15
        %s246 = smul.addr %s245, 4
        %s247 = scalar_lea.vmem %s4, %s246
        %s248 = smul.u32 8, %s13
      $region44: #{_lambda_.7} parent=35 // pred_fallthru
        _
    $region36: #{_lambda_.7} parent=5 // pred_fallthru
      _
    %p249 = scmp.le.s32.totalorder 1, %s13
    %p250 = scmp.lt.s32.totalorder %s13, 3
    %p251 = pnand %p249, %p250
    %p252 = pneg %p251
    // Predicated region
    $region45: #{_lambda_.7} parent=5 // pred_check
      _
    $region46: #{_lambda_.7} parent=5 // pred_check_branch
      %254 = sbr.rel (%p251) target = $region48
    $region47: #{_lambda_.7} parent=5 // pred_region
      %s255 = ssub.s32 %s13, 1
      %s256 = smul.u32 8, %s18
      %p257 = scmp.lt.s32.totalorder %s256, 15
      %s258 = scalar_select %p257, %s256, 15
      %s259 = smul.addr %s258, 4
      %s260 = smul.addr %s259, 4
      %s261 = scalar_lea.vmem %s0, %s260
      %p262 = pneg %p39
      %p263 = pneg %p36
      %p264 = pneg %p60
      %p265 = pneg %p57
      %p266 = pneg %p81
      %p267 = pneg %p78
      %p268 = pneg %p102
      %p269 = pneg %p99
      %s270 = smul.u32 8, %s18
      %p271 = scmp.lt.s32.totalorder %s270, 15
      %s272 = scalar_select %p271, %s270, 15
      %s273 = smul.addr %s272, 4
      %s274 = scalar_lea.vmem %s4, %s273
      %p275 = pneg %p128
      %p276 = pneg %p125
      %p277 = pneg %p149
      %p278 = pneg %p146
      %p279 = pneg %p170
      %p280 = pneg %p167
      %p281 = pneg %p196
      %p282 = pneg %p193
      %s283 = smul.u32 8, %s18
      %p284 = scmp.lt.s32.totalorder %s283, 15
      %s285 = scalar_select %p284, %s283, 15
      %s286 = smul.addr %s285, 8
      %s287 = scalar_lea.vmem %s7, %s286
      %s288 = smul.u32 8, %s18
      %p289 = scmp.lt.s32.totalorder %s288, 15
      %s290 = scalar_select %p289, %s288, 15
      %s291 = smul.addr %s290, 4
      %s292 = smul.addr %s291, 4
      %s293 = scalar_lea.vmem %s0, %s292
      %s294 = smul.u32 8, %s18
      %s295 = smul.u32 8, %s18
      %p296 = scmp.lt.s32.totalorder %s295, 15
      %s297 = scalar_select %p296, %s295, 15
      %s298 = smul.addr %s297, 4
      %s299 = scalar_lea.vmem %s4, %s298
      %s300 = smul.u32 8, %s18
      %s301 = smul.u32 8, %s18
      %p302 = scmp.lt.s32.totalorder %s301, 15
      %s303 = scalar_select %p302, %s301, 15
      %s304 = smul.addr %s303, 8
      %s305 = scalar_lea.vmem %s7, %s304
      %s306 = smul.u32 8, %s18
      %v308 = vld [vmem:[%s293] sm:$0xff]
      %v309 = vld [vmem:[%s293 + $0x8] sm:$0xff]
      %v310 = vld [vmem:[%s293 + $0x10] sm:$0xff]
      %v311 = vld [vmem:[%s293 + $0x18] sm:$0xff]
      %v312 = vld [vmem:[%s293 + $0x20] sm:$0xff]
      %v313 = vld [vmem:[%s293 + $0x28] sm:$0xff]
      %v314 = vld [vmem:[%s293 + $0x30] sm:$0xff]
      %v315 = vld [vmem:[%s293 + $0x38] sm:$0xff]
      %v316 = vld [vmem:[%s293 + $0x40] sm:$0xff]
      %v317 = vld [vmem:[%s293 + $0x48] sm:$0xff]
      %v318 = vld [vmem:[%s293 + $0x50] sm:$0xff]
      %v319 = vld [vmem:[%s293 + $0x58] sm:$0xff]
      %v320 = vld [vmem:[%s293 + $0x60] sm:$0xff]
      %v321 = vld [vmem:[%s293 + $0x68] sm:$0xff]
      %v322 = vld [vmem:[%s293 + $0x70] sm:$0xff]
      %v323 = vld [vmem:[%s293 + $0x78] sm:$0xff]
      %v324 = vld [vmem:[%s1] sm:$0xf]
      %v325 = vld [vmem:[%s1 + $0x4] sm:$0xf]
      %v326 = vld [vmem:[%s1 + $0x8] sm:$0xf]
      %v327 = vld [vmem:[%s1 + $0xc] sm:$0xf]
      %v328 = vld [vmem:[%s1 + $0x10] sm:$0xf]
      %v329 = vld [vmem:[%s1 + $0x14] sm:$0xf]
      %v330 = vld [vmem:[%s1 + $0x18] sm:$0xf]
      %v331 = vld [vmem:[%s1 + $0x1c] sm:$0xf]
      %v332 = vld [vmem:[%s1 + $0x20] sm:$0xf]
      %v333 = vld [vmem:[%s1 + $0x24] sm:$0xf]
      %v334 = vld [vmem:[%s1 + $0x28] sm:$0xf]
      %v335 = vld [vmem:[%s1 + $0x2c] sm:$0xf]
      %v336 = vld [vmem:[%s1 + $0x30] sm:$0xf]
      %v337 = vld [vmem:[%s1 + $0x34] sm:$0xf]
      %v338 = vld [vmem:[%s1 + $0x38] sm:$0xf]
      %v339 = vld [vmem:[%s1 + $0x3c] sm:$0xf]
      %v340 = vld [vmem:[%s1 + $0x40] sm:$0xf]
      %v341 = vld [vmem:[%s1 + $0x44] sm:$0xf]
      %v342 = vld [vmem:[%s1 + $0x48] sm:$0xf]
      %v343 = vld [vmem:[%s1 + $0x4c] sm:$0xf]
      %v344 = vld [vmem:[%s1 + $0x50] sm:$0xf]
      %v345 = vld [vmem:[%s1 + $0x54] sm:$0xf]
      %v346 = vld [vmem:[%s1 + $0x58] sm:$0xf]
      %v347 = vld [vmem:[%s1 + $0x5c] sm:$0xf]
      %v348 = vld [vmem:[%s1 + $0x60] sm:$0xf]
      %v349 = vld [vmem:[%s1 + $0x64] sm:$0xf]
      %v350 = vld [vmem:[%s1 + $0x68] sm:$0xf]
      %v351 = vld [vmem:[%s1 + $0x6c] sm:$0xf]
      %v352 = vld [vmem:[%s1 + $0x70] sm:$0xf]
      %v353 = vld [vmem:[%s1 + $0x74] sm:$0xf]
      %v354 = vld [vmem:[%s1 + $0x78] sm:$0xf]
      %v355 = vld [vmem:[%s1 + $0x7c] sm:$0xf]
      %v356 = vld [vmem:[%s1 + $0x80] sm:$0xf]
      %v357 = vld [vmem:[%s1 + $0x84] sm:$0xf]
      %v358 = vld [vmem:[%s1 + $0x88] sm:$0xf]
      %v359 = vld [vmem:[%s1 + $0x8c] sm:$0xf]
      %v360 = vld [vmem:[%s1 + $0x90] sm:$0xf]
      %v361 = vld [vmem:[%s1 + $0x94] sm:$0xf]
      %v362 = vld [vmem:[%s1 + $0x98] sm:$0xf]
      %v363 = vld [vmem:[%s1 + $0x9c] sm:$0xf]
      %v364 = vld [vmem:[%s1 + $0xa0] sm:$0xf]
      %v365 = vld [vmem:[%s1 + $0xa4] sm:$0xf]
      %v366 = vld [vmem:[%s1 + $0xa8] sm:$0xf]
      %v367 = vld [vmem:[%s1 + $0xac] sm:$0xf]
      %v368 = vld [vmem:[%s1 + $0xb0] sm:$0xf]
      %v369 = vld [vmem:[%s1 + $0xb4] sm:$0xf]
      %v370 = vld [vmem:[%s1 + $0xb8] sm:$0xf]
      %v371 = vld [vmem:[%s1 + $0xbc] sm:$0xf]
      %v372 = vld [vmem:[%s1 + $0xc0] sm:$0xf]
      %v373 = vld [vmem:[%s1 + $0xc4] sm:$0xf]
      %v374 = vld [vmem:[%s1 + $0xc8] sm:$0xf]
      %v375 = vld [vmem:[%s1 + $0xcc] sm:$0xf]
      %v376 = vld [vmem:[%s1 + $0xd0] sm:$0xf]
      %v377 = vld [vmem:[%s1 + $0xd4] sm:$0xf]
      %v394 = vunpack.c.l.b16 %v308
      %v395 = vunpack.c.h.b16 %v308
      %v396 = vunpack.c.l.b16 %v309
      %v397 = vunpack.c.h.b16 %v309
      %v398 = vunpack.c.l.b16 %v310
      %v399 = vunpack.c.h.b16 %v310
      %v400 = vunpack.c.l.b16 %v311
      %v401 = vunpack.c.h.b16 %v311
      %v402 = vunpack.c.l.b16 %v312
      %v403 = vunpack.c.h.b16 %v312
      %v404 = vunpack.c.l.b16 %v313
      %v405 = vunpack.c.h.b16 %v313
      %v406 = vunpack.c.l.b16 %v314
      %v407 = vunpack.c.h.b16 %v314
      %v408 = vunpack.c.l.b16 %v315
      %v409 = vunpack.c.h.b16 %v315
      %v410 = vunpack.c.l.b16 %v316
      %v411 = vunpack.c.h.b16 %v316
      %v412 = vunpack.c.l.b16 %v317
      %v413 = vunpack.c.h.b16 %v317
      %v414 = vunpack.c.l.b16 %v318
      %v415 = vunpack.c.h.b16 %v318
      %v416 = vunpack.c.l.b16 %v319
      %v417 = vunpack.c.h.b16 %v319
      %v418 = vunpack.c.l.b16 %v320
      %v419 = vunpack.c.h.b16 %v320
      %v420 = vunpack.c.l.b16 %v321
      %v421 = vunpack.c.h.b16 %v321
      %v422 = vunpack.c.l.b16 %v322
      %v423 = vunpack.c.h.b16 %v322
      %v424 = vunpack.c.l.b16 %v323
      %v425 = vunpack.c.h.b16 %v323
      %v426 = vpack.c.b16 %v398, %v394
      %v427 = vpack.c.b16 %v399, %v395
      %v428 = vpack.c.b16 %v400, %v396
      %v429 = vpack.c.b16 %v401, %v397
      %v430 = vpack.c.b16 %v406, %v402
      %v431 = vpack.c.b16 %v407, %v403
      %v432 = vpack.c.b16 %v408, %v404
      %v433 = vpack.c.b16 %v409, %v405
      %v434 = vpack.c.b16 %v414, %v410
      %v435 = vpack.c.b16 %v415, %v411
      %v436 = vpack.c.b16 %v416, %v412
      %v437 = vpack.c.b16 %v417, %v413
      %v438 = vpack.c.b16 %v422, %v418
      %v439 = vpack.c.b16 %v423, %v419
      %v440 = vpack.c.b16 %v424, %v420
      %v441 = vpack.c.b16 %v425, %v421
      %v508 = vunpack.c.l.b16 %v324
      %v509 = vunpack.c.l.b16 %v325
      %v510 = vunpack.c.l.b16 %v326
      %v511 = vunpack.c.l.b16 %v327
      %v512 = vunpack.c.l.b16 %v328
      %v513 = vunpack.c.l.b16 %v329
      %v514 = vunpack.c.l.b16 %v330
      %v515 = vunpack.c.l.b16 %v331
      %v516 = vunpack.c.l.b16 %v332
      %v517 = vunpack.c.l.b16 %v333
      %v518 = vunpack.c.l.b16 %v334
      %v519 = vunpack.c.l.b16 %v335
      %v520 = vunpack.c.l.b16 %v336
      %v521 = vunpack.c.l.b16 %v337
      %v522 = vunpack.c.l.b16 %v338
      %v523 = vunpack.c.l.b16 %v339
      %v524 = vunpack.c.l.b16 %v340
      %v525 = vunpack.c.l.b16 %v341
      %v526 = vunpack.c.l.b16 %v342
      %v527 = vunpack.c.l.b16 %v343
      %v528 = vunpack.c.l.b16 %v344
      %v529 = vunpack.c.l.b16 %v345
      %v530 = vunpack.c.l.b16 %v346
      %v531 = vunpack.c.l.b16 %v347
      %v532 = vunpack.c.l.b16 %v348
      %v533 = vunpack.c.l.b16 %v349
      %v534 = vunpack.c.l.b16 %v350
      %v535 = vunpack.c.l.b16 %v351
      %v536 = vunpack.c.l.b16 %v352
      %v537 = vunpack.c.l.b16 %v353
      %v538 = vunpack.c.l.b16 %v354
      %v539 = vunpack.c.l.b16 %v355
      %v540 = vunpack.c.l.b16 %v356
      %v541 = vunpack.c.l.b16 %v357
      %v542 = vunpack.c.l.b16 %v358
      %v543 = vunpack.c.l.b16 %v359
      %v544 = vunpack.c.l.b16 %v360
      %v545 = vunpack.c.l.b16 %v361
      %v546 = vunpack.c.l.b16 %v362
      %v547 = vunpack.c.l.b16 %v363
      %v548 = vunpack.c.l.b16 %v364
      %v549 = vunpack.c.l.b16 %v365
      %v550 = vunpack.c.l.b16 %v366
      %v551 = vunpack.c.l.b16 %v367
      %v552 = vunpack.c.l.b16 %v368
      %v553 = vunpack.c.l.b16 %v369
      %v554 = vunpack.c.l.b16 %v370
      %v555 = vunpack.c.l.b16 %v371
      %v556 = vunpack.c.l.b16 %v372
      %v557 = vunpack.c.l.b16 %v373
      %v558 = vunpack.c.l.b16 %v374
      %v559 = vunpack.c.l.b16 %v375
      %v560 = vunpack.c.l.b16 %v376
      %v561 = vunpack.c.l.b16 %v377
      %v562 = vpack.c.b16 %v509, %v508
      %v563 = vpack.c.b16 %v511, %v510
      %v564 = vpack.c.b16 %v513, %v512
      %v565 = vpack.c.b16 %v515, %v514
      %v566 = vpack.c.b16 %v517, %v516
      %v567 = vpack.c.b16 %v519, %v518
      %v568 = vpack.c.b16 %v521, %v520
      %v569 = vpack.c.b16 %v523, %v522
      %v570 = vpack.c.b16 %v525, %v524
      %v571 = vpack.c.b16 %v527, %v526
      %v572 = vpack.c.b16 %v529, %v528
      %v573 = vpack.c.b16 %v531, %v530
      %v574 = vpack.c.b16 %v533, %v532
      %v575 = vpack.c.b16 %v535, %v534
      %v576 = vpack.c.b16 %v537, %v536
      %v577 = vpack.c.b16 %v539, %v538
      %v578 = vpack.c.b16 %v541, %v540
      %v579 = vpack.c.b16 %v543, %v542
      %v580 = vpack.c.b16 %v545, %v544
      %v581 = vpack.c.b16 %v547, %v546
      %v582 = vpack.c.b16 %v549, %v548
      %v583 = vpack.c.b16 %v551, %v550
      %v584 = vpack.c.b16 %v553, %v552
      %v585 = vpack.c.b16 %v555, %v554
      %v586 = vpack.c.b16 %v557, %v556
      %v587 = vpack.c.b16 %v559, %v558
      %v588 = vpack.c.b16 %v561, %v560
      %vm616 = vcmask 392192
      %v618 = vsel %vm616, %v429, 0
      %v621 = vsel %vm616, %v433, 0
      %v624 = vsel %vm616, %v437, 0
      %v627 = vsel %vm616, %v441, 0
      %629 = vmatpush.bf16.msra.mxu0 %v569
      %630 = vmatpush.bf16.msra.mxu0 %v568
      %631 = vmatpush.bf16.msra.mxu0 %v567
      %632 = vmatpush.bf16.msra.mxu0 %v566
      %633 = vmatpush.bf16.msra.mxu0 %v565
      %634 = vmatpush.bf16.msra.mxu0 %v564
      %635 = vmatpush.bf16.msra.mxu0 %v563
      %636 = vmatpush.bf16.msra.mxu0 %v562
      %637 = vmatmul.bf16.gmra.mxu0 %v426
      %v638 = vpop.f32.mrf.mxu0
      %v639 = vadd.f32 0.0, %v638
      %v640 = vpop.f32.mrf.mxu0
      %v641 = vadd.f32 0.0, %v640
      %642 = vmatmul.bf16.gmra.mxu0 %v430
      %v643 = vpop.f32.mrf.mxu0
      %v644 = vadd.f32 0.0, %v643
      %v645 = vpop.f32.mrf.mxu0
      %v646 = vadd.f32 0.0, %v645
      %647 = vmatmul.bf16.gmra.mxu0 %v434
      %v648 = vpop.f32.mrf.mxu0
      %v649 = vadd.f32 0.0, %v648
      %v650 = vpop.f32.mrf.mxu0
      %v651 = vadd.f32 0.0, %v650
      %652 = vmatmul.bf16.gmra.mxu0 %v438
      %v653 = vpop.f32.mrf.mxu0
      %v654 = vadd.f32 0.0, %v653
      %v655 = vpop.f32.mrf.mxu0
      %v656 = vadd.f32 0.0, %v655
      %657 = vdwg.mxu0
      %658 = vmatpush.bf16.msra.mxu0 %v577
      %659 = vmatpush.bf16.msra.mxu0 %v576
      %660 = vmatpush.bf16.msra.mxu0 %v575
      %661 = vmatpush.bf16.msra.mxu0 %v574
      %662 = vmatpush.bf16.msra.mxu0 %v573
      %663 = vmatpush.bf16.msra.mxu0 %v572
      %664 = vmatpush.bf16.msra.mxu0 %v571
      %665 = vmatpush.bf16.msra.mxu0 %v570
      %666 = vmatmul.bf16.gmra.mxu0 %v427
      %v667 = vpop.f32.mrf.mxu0
      %v668 = vadd.f32 %v639, %v667
      %v669 = vpop.f32.mrf.mxu0
      %v670 = vadd.f32 %v641, %v669
      %671 = vmatmul.bf16.gmra.mxu0 %v431
      %v672 = vpop.f32.mrf.mxu0
      %v673 = vadd.f32 %v644, %v672
      %v674 = vpop.f32.mrf.mxu0
      %v675 = vadd.f32 %v646, %v674
      %676 = vmatmul.bf16.gmra.mxu0 %v435
      %v677 = vpop.f32.mrf.mxu0
      %v678 = vadd.f32 %v649, %v677
      %v679 = vpop.f32.mrf.mxu0
      %v680 = vadd.f32 %v651, %v679
      %681 = vmatmul.bf16.gmra.mxu0 %v439
      %v682 = vpop.f32.mrf.mxu0
      %v683 = vadd.f32 %v654, %v682
      %v684 = vpop.f32.mrf.mxu0
      %v685 = vadd.f32 %v656, %v684
      %686 = vdwg.mxu0
      %687 = vmatpush.bf16.msra.mxu0 %v585
      %688 = vmatpush.bf16.msra.mxu0 %v584
      %689 = vmatpush.bf16.msra.mxu0 %v583
      %690 = vmatpush.bf16.msra.mxu0 %v582
      %691 = vmatpush.bf16.msra.mxu0 %v581
      %692 = vmatpush.bf16.msra.mxu0 %v580
      %693 = vmatpush.bf16.msra.mxu0 %v579
      %694 = vmatpush.bf16.msra.mxu0 %v578
      %695 = vmatmul.bf16.gmra.mxu0 %v428
      %v696 = vpop.f32.mrf.mxu0
      %v697 = vadd.f32 %v668, %v696
      %v698 = vpop.f32.mrf.mxu0
      %v699 = vadd.f32 %v670, %v698
      %700 = vmatmul.bf16.gmra.mxu0 %v432
      %v701 = vpop.f32.mrf.mxu0
      %v702 = vadd.f32 %v673, %v701
      %v703 = vpop.f32.mrf.mxu0
      %v704 = vadd.f32 %v675, %v703
      %705 = vmatmul.bf16.gmra.mxu0 %v436
      %v706 = vpop.f32.mrf.mxu0
      %v707 = vadd.f32 %v678, %v706
      %v708 = vpop.f32.mrf.mxu0
      %v709 = vadd.f32 %v680, %v708
      %710 = vmatmul.bf16.gmra.mxu0 %v440
      %v711 = vpop.f32.mrf.mxu0
      %v712 = vadd.f32 %v683, %v711
      %v713 = vpop.f32.mrf.mxu0
      %v714 = vadd.f32 %v685, %v713
      %715 = vdwg.mxu0
      %716 = vmatpush.bf16.msra.mxu0 0
      %717 = vmatpush.bf16.msra.mxu0 0
      %718 = vmatpush.bf16.msra.mxu0 0
      %719 = vmatpush.bf16.msra.mxu0 0
      %720 = vmatpush.bf16.msra.mxu0 0
      %721 = vmatpush.bf16.msra.mxu0 %v588
      %722 = vmatpush.bf16.msra.mxu0 %v587
      %723 = vmatpush.bf16.msra.mxu0 %v586
      %724 = vmatmul.bf16.gmra.mxu0 %v618
      %v725 = vpop.f32.mrf.mxu0
      %v726 = vadd.f32 %v697, %v725
      %v727 = vpop.f32.mrf.mxu0
      %v728 = vadd.f32 %v699, %v727
      %729 = vmatmul.bf16.gmra.mxu0 %v621
      %v730 = vpop.f32.mrf.mxu0
      %v731 = vadd.f32 %v702, %v730
      %v732 = vpop.f32.mrf.mxu0
      %v733 = vadd.f32 %v704, %v732
      %734 = vmatmul.bf16.gmra.mxu0 %v624
      %v735 = vpop.f32.mrf.mxu0
      %v736 = vadd.f32 %v707, %v735
      %v737 = vpop.f32.mrf.mxu0
      %v738 = vadd.f32 %v709, %v737
      %739 = vmatmul.bf16.gmra.mxu0 %v627
      %v740 = vpop.f32.mrf.mxu0
      %v741 = vadd.f32 %v712, %v740
      %v742 = vpop.f32.mrf.mxu0
      %v743 = vadd.f32 %v714, %v742
      %744 = vdwg.mxu0
      %v745 = vld [vmem:[%s2] sm:$0x1]
      %v747 = vperm.slane %v745, 0
      %v749 = vmul.f32 %v726, %v747
      %v750 = vmul.f32 %v728, %v747
      %v751 = vmul.f32 %v731, %v747
      %v752 = vmul.f32 %v733, %v747
      %v753 = vmul.f32 %v736, %v747
      %v754 = vmul.f32 %v738, %v747
      %v755 = vmul.f32 %v741, %v747
      %v756 = vmul.f32 %v743, %v747
      %v757 = vld [vmem:[%s3] sm:$0x1]
      %v759 = vperm.slane %v757, 0
      %v761 = vadd.f32 %v749, %v759
      %v762 = vadd.f32 %v750, %v759
      %v763 = vadd.f32 %v751, %v759
      %v764 = vadd.f32 %v752, %v759
      %v765 = vadd.f32 %v753, %v759
      %v766 = vadd.f32 %v754, %v759
      %v767 = vadd.f32 %v755, %v759
      %v768 = vadd.f32 %v756, %v759
      %v769 = vld [vmem:[%s299] sm:$0xf]
      %v770 = vld [vmem:[%s299 + $0x4] sm:$0xf]
      %v771 = vld [vmem:[%s299 + $0x8] sm:$0xf]
      %v772 = vld [vmem:[%s299 + $0xc] sm:$0xf]
      %v773 = vld [vmem:[%s299 + $0x10] sm:$0xf]
      %v774 = vld [vmem:[%s299 + $0x14] sm:$0xf]
      %v775 = vld [vmem:[%s299 + $0x18] sm:$0xf]
      %v776 = vld [vmem:[%s299 + $0x1c] sm:$0xf]
      %v777 = vld [vmem:[%s5] sm:$0x3]
      %v786 = vunpack.c.l.b16 %v769
      %v787 = vunpack.c.l.b16 %v770
      %v788 = vunpack.c.l.b16 %v771
      %v789 = vunpack.c.l.b16 %v772
      %v790 = vunpack.c.l.b16 %v773
      %v791 = vunpack.c.l.b16 %v774
      %v792 = vunpack.c.l.b16 %v775
      %v793 = vunpack.c.l.b16 %v776
      %v794 = vpack.c.b16 %v787, %v786
      %v795 = vpack.c.b16 %v789, %v788
      %v796 = vpack.c.b16 %v791, %v790
      %v797 = vpack.c.b16 %v793, %v792
      %vm798 = vcmask 23552
      %v800 = vsel %vm798, %v794, 0
      %v803 = vsel %vm798, %v795, 0
      %v806 = vsel %vm798, %v796, 0
      %v809 = vsel %vm798, %v797, 0
      %vm811 = vcmask 1040384
      %vm812 = vcmask 1041408
      %v813 = vsel %vm811, 4294967295, 65535
      %v814 = vsel %vm812, %v813, 0
      %v816 = vand.u32 %v777, %v814
      %818 = vmatpush.bf16.msra.mxu0 0
      %819 = vmatpush.bf16.msra.mxu0 0
      %820 = vmatpush.bf16.msra.mxu0 0
      %821 = vmatpush.bf16.msra.mxu0 0
      %822 = vmatpush.bf16.msra.mxu0 0
      %823 = vmatpush.bf16.msra.mxu0 0
      %824 = vmatpush.bf16.msra.mxu0 0
      %825 = vmatpush.bf16.msra.mxu0 %v816
      %826 = vmatmul.bf16.gmra.mxu0 %v800
      %v827 = vpop.f32.mrf.mxu0
      %v828 = vadd.f32 0.0, %v827
      %v829 = vpop.f32.mrf.mxu0
      %v830 = vadd.f32 0.0, %v829
      %831 = vmatmul.bf16.gmra.mxu0 %v803
      %v832 = vpop.f32.mrf.mxu0
      %v833 = vadd.f32 0.0, %v832
      %v834 = vpop.f32.mrf.mxu0
      %v835 = vadd.f32 0.0, %v834
      %836 = vmatmul.bf16.gmra.mxu0 %v806
      %v837 = vpop.f32.mrf.mxu0
      %v838 = vadd.f32 0.0, %v837
      %v839 = vpop.f32.mrf.mxu0
      %v840 = vadd.f32 0.0, %v839
      %841 = vmatmul.bf16.gmra.mxu0 %v809
      %v842 = vpop.f32.mrf.mxu0
      %v843 = vadd.f32 0.0, %v842
      %v844 = vpop.f32.mrf.mxu0
      %v845 = vadd.f32 0.0, %v844
      %846 = vdwg.mxu0
      %v847 = vadd.f32 %v761, %v828
      %v848 = vadd.f32 %v762, %v830
      %v849 = vadd.f32 %v763, %v833
      %v850 = vadd.f32 %v764, %v835
      %v851 = vadd.f32 %v765, %v838
      %v852 = vadd.f32 %v766, %v840
      %v853 = vadd.f32 %v767, %v843
      %v854 = vadd.f32 %v768, %v845
      %v855 = vld [vmem:[%s6] sm:$0x1]
      %v857 = vperm.slane %v855, 0
      %v859 = vadd.f32 %v847, %v857
      %v860 = vadd.f32 %v848, %v857
      %v861 = vadd.f32 %v849, %v857
      %v862 = vadd.f32 %v850, %v857
      %v863 = vadd.f32 %v851, %v857
      %v864 = vadd.f32 %v852, %v857
      %v865 = vadd.f32 %v853, %v857
      %v866 = vadd.f32 %v854, %v857
      %v867 = vmax.f32 %v859, 0.0
      %v868 = vmax.f32 %v860, 0.0
      %v869 = vmax.f32 %v861, 0.0
      %v870 = vmax.f32 %v862, 0.0
      %v871 = vmax.f32 %v863, 0.0
      %v872 = vmax.f32 %v864, 0.0
      %v873 = vmax.f32 %v865, 0.0
      %v874 = vmax.f32 %v866, 0.0
      %875 = vst [vmem:[%s305] sm:$0xff] %v867
      %876 = vst [vmem:[%s305 + $0x8] sm:$0xff] %v868
      %877 = vst [vmem:[%s305 + $0x10] sm:$0xff] %v869
      %878 = vst [vmem:[%s305 + $0x18] sm:$0xff] %v870
      %879 = vst [vmem:[%s305 + $0x20] sm:$0xff] %v871
      %880 = vst [vmem:[%s305 + $0x28] sm:$0xff] %v872
      %881 = vst [vmem:[%s305 + $0x30] sm:$0xff] %v873
      %882 = vst [vmem:[%s305 + $0x38] sm:$0xff] %v874
      %s883 = smul.u32 8, %s18
      %p884 = scmp.lt.s32.totalorder %s883, 15
      %s885 = scalar_select %p884, %s883, 15
      %s886 = smul.addr %s885, 8
      %s887 = scalar_lea.vmem %s7, %s886
      // Predicated region
      $region49: #{_lambda_.7} parent=47 // pred_check
        %p888 = pneg %p193
      $region50: #{_lambda_.7} parent=47 // pred_check_branch
        %890 = sbr.rel (%p888) target = $region52
      $region51: #{_lambda_.7} parent=47 // pred_region
        %s891 = smul.u32 8, %s18
      $region52: #{_lambda_.7} parent=47 // pred_fallthru
        _
    $region48: #{_lambda_.7} parent=5 // pred_fallthru
      _
    %p892 = scmp.le.s32.totalorder 2, %s13
    // Predicated region
    $region53: #{_lambda_.7} parent=5 // pred_check
      %p893 = pneg %p892
    $region54: #{_lambda_.7} parent=5 // pred_check_branch
      %895 = sbr.rel (%p893) target = $region56
    $region55: #{_lambda_.7} parent=5 // pred_region
      %s896 = ssub.s32 %s13, 2
      // Predicated region
      $region57: #{_lambda_.7} parent=55 // pred_check
        %p897 = pneg %p199
      $region58: #{_lambda_.7} parent=55 // pred_check_branch
        %899 = sbr.rel (%p897) target = $region60
      $region59: #{_lambda_.7} parent=55 // pred_region
        %s900 = smul.u32 8, %s19
        %p901 = scmp.lt.s32.totalorder %s900, 15
        %s902 = scalar_select %p901, %s900, 15
        %s903 = smul.addr %s902, 8
        %s904 = scalar_lea.vmem %s7, %s903
      $region60: #{_lambda_.7} parent=55 // pred_fallthru
        _
    $region56: #{_lambda_.7} parent=5 // pred_fallthru
      _
  $region6: #{_lambda_.7} parent=0 // loop_footer
    %s17 = sadd.s32 1, %s13
  $region7: #{_lambda_.7} parent=0 // loop_footer_branch
    %12 = sbr.rel target = $region3
  $region8: #{_lambda_.7} parent=0 // loop_exit
    _

// kernel: _lambda_.10
$region0: #{_lambda_.10}
  #allocation0 [shape = 'u32[]', space=smem, size = 0x4, offset = 0x4, fixed_abs, tag = 'smem constant byte address 0x4 - core index']
  #allocation1 [shape = 'u32[72,128]{1,0:T(1,128)}', space=vmem, size = 0x9000, scoped, tag = 'internal scratch']
  %s0 = inlined_call_operand.vmem [shape: bf16[32,432], index: 0, kind: input, shape index: {}]
  %s1 = inlined_call_operand.vmem [shape: bf16[432,128], index: 1, kind: input, shape index: {}]
  %s2 = inlined_call_operand.vmem [shape: f32[1,128], index: 2, kind: input, shape index: {}]
  %s3 = inlined_call_operand.vmem [shape: f32[1,128], index: 3, kind: input, shape index: {}]
  %s4 = inlined_call_operand.vmem [shape: f32[32,128], index: 4, kind: output, shape index: {}]
  %s5 = sld [smem:[#allocation0]]
  $region49: #{_lambda_.10} parent=0
    _
  %s7 = ssub.s32 1, %s5
  %s8 = scalar_select 0, %s7, %s5
  loop: start=0, step=1, limit=4
  $region2: #{_lambda_.10} parent=0 // loop_pre_header
    _
  $region3: #{_lambda_.10} parent=0 // loop_header
    %s10 = sphi 0, %s14
    %p11 = scmp.ge.s32.totalorder %s10, 4
    %s20 = sphi 0, %s22
    %s23 = sphi 0, %s20
    %s24 = sphi 0, %s23
    %s40 = sphi 0, %s24
    %s44 = sphi 0, %s44
    %s46 = sphi 0, %s44
    %s47 = sphi 0, %s46
    %s61 = sphi 0, %s47
    %s65 = sphi 0, %s65
    %s67 = sphi 0, %s65
    %s68 = sphi 0, %s67
    %s82 = sphi 0, %s68
    %s86 = sphi 0, %s86
    %s88 = sphi 0, %s86
    %s89 = sphi 0, %s88
    %s103 = sphi 0, %s89
    %s109 = sphi 0, %s111
    %s112 = sphi 0, %s109
    %s113 = sphi 0, %s112
    %s129 = sphi 0, %s113
  $region4: #{_lambda_.10} parent=0 // loop_header_branch
    %13 = sbr.rel (%p11) target = $region8
  $region5: #{_lambda_.10} parent=0 // loop_body
    %s15 = ssub.s32 %s10, 1
    %s16 = ssub.s32 %s10, 2
    %s17 = sadd.s32 %s10, 1
    %s18 = ssub.s32 %s10, %s17
    %p19 = scmp.eq.s32.totalorder %s18, 0
    %s21 = sadd.s32 %s20, 1
    %s22 = scalar_select %p19, %s20, %s21
    %p25 = pneg %p19
    %p26 = scmp.eq.s32.totalorder %s10, 1
    %p27 = por %p25, %p26
    %p28 = scmp.ne.s32.totalorder %s20, %s23
    %p29 = scmp.eq.s32.totalorder %s10, 0
    %p30 = por %p28, %p29
    %p31 = scmp.ne.s32.totalorder %s20, %s23
    %p32 = scmp.eq.s32.totalorder %s15, 1
    %p33 = por %p31, %p32
    %p34 = scmp.ne.s32.totalorder %s23, %s24
    %p35 = scmp.eq.s32.totalorder %s15, 0
    %p36 = por %p34, %p35
    %p37 = scmp.ne.s32.totalorder %s23, %s24
    %p38 = scmp.eq.s32.totalorder %s16, 1
    %p39 = por %p37, %p38
    %p41 = scmp.ne.s32.totalorder %s24, %s40
    %p42 = scmp.eq.s32.totalorder %s16, 0
    %p43 = por %p41, %p42
    %s45 = sadd.s32 %s44, 1
    %p48 = scmp.eq.s32.totalorder %s10, 1
    %p49 = scmp.ne.s32.totalorder %s44, %s46
    %p50 = scmp.eq.s32.totalorder %s10, 0
    %p51 = por %p49, %p50
    %p52 = scmp.ne.s32.totalorder %s44, %s46
    %p53 = scmp.eq.s32.totalorder %s15, 1
    %p54 = por %p52, %p53
    %p55 = scmp.ne.s32.totalorder %s46, %s47
    %p56 = scmp.eq.s32.totalorder %s15, 0
    %p57 = por %p55, %p56
    %p58 = scmp.ne.s32.totalorder %s46, %s47
    %p59 = scmp.eq.s32.totalorder %s16, 1
    %p60 = por %p58, %p59
    %p62 = scmp.ne.s32.totalorder %s47, %s61
    %p63 = scmp.eq.s32.totalorder %s16, 0
    %p64 = por %p62, %p63
    %s66 = sadd.s32 %s65, 1
    %p69 = scmp.eq.s32.totalorder %s10, 1
    %p70 = scmp.ne.s32.totalorder %s65, %s67
    %p71 = scmp.eq.s32.totalorder %s10, 0
    %p72 = por %p70, %p71
    %p73 = scmp.ne.s32.totalorder %s65, %s67
    %p74 = scmp.eq.s32.totalorder %s15, 1
    %p75 = por %p73, %p74
    %p76 = scmp.ne.s32.totalorder %s67, %s68
    %p77 = scmp.eq.s32.totalorder %s15, 0
    %p78 = por %p76, %p77
    %p79 = scmp.ne.s32.totalorder %s67, %s68
    %p80 = scmp.eq.s32.totalorder %s16, 1
    %p81 = por %p79, %p80
    %p83 = scmp.ne.s32.totalorder %s68, %s82
    %p84 = scmp.eq.s32.totalorder %s16, 0
    %p85 = por %p83, %p84
    %s87 = sadd.s32 %s86, 1
    %p90 = scmp.eq.s32.totalorder %s10, 1
    %p91 = scmp.ne.s32.totalorder %s86, %s88
    %p92 = scmp.eq.s32.totalorder %s10, 0
    %p93 = por %p91, %p92
    %p94 = scmp.ne.s32.totalorder %s86, %s88
    %p95 = scmp.eq.s32.totalorder %s15, 1
    %p96 = por %p94, %p95
    %p97 = scmp.ne.s32.totalorder %s88, %s89
    %p98 = scmp.eq.s32.totalorder %s15, 0
    %p99 = por %p97, %p98
    %p100 = scmp.ne.s32.totalorder %s88, %s89
    %p101 = scmp.eq.s32.totalorder %s16, 1
    %p102 = por %p100, %p101
    %p104 = scmp.ne.s32.totalorder %s89, %s103
    %p105 = scmp.eq.s32.totalorder %s16, 0
    %p106 = por %p104, %p105
    %s107 = ssub.s32 %s10, %s17
    %p108 = scmp.eq.s32.totalorder %s107, 0
    %s110 = sadd.s32 %s109, 1
    %s111 = scalar_select %p108, %s109, %s110
    %p114 = pneg %p108
    %p115 = scmp.eq.s32.totalorder %s10, 1
    %p116 = por %p114, %p115
    %p117 = scmp.ne.s32.totalorder %s109, %s112
    %p118 = scmp.eq.s32.totalorder %s10, 0
    %p119 = por %p117, %p118
    %p120 = scmp.ne.s32.totalorder %s109, %s112
    %p121 = scmp.eq.s32.totalorder %s15, 1
    %p122 = por %p120, %p121
    %p123 = scmp.ne.s32.totalorder %s112, %s113
    %p124 = scmp.eq.s32.totalorder %s15, 0
    %p125 = por %p123, %p124
    %p126 = scmp.ne.s32.totalorder %s112, %s113
    %p127 = scmp.eq.s32.totalorder %s16, 1
    %p128 = por %p126, %p127
    %p130 = scmp.ne.s32.totalorder %s113, %s129
    %p131 = scmp.eq.s32.totalorder %s16, 0
    %p132 = por %p130, %p131
    %p133 = scmp.le.s32.totalorder 1, %s10
    %p134 = scmp.lt.s32.totalorder %s10, 3
    %p135 = pnand %p133, %p134
    %p136 = pneg %p135
    // Predicated region
    $region9: #{_lambda_.10} parent=5 // pred_check
      _
    $region10: #{_lambda_.10} parent=5 // pred_check_branch
      %138 = sbr.rel (%p135) target = $region12
    $region11: #{_lambda_.10} parent=5 // pred_region
      %s139 = ssub.s32 %s10, 1
      // Predicated region
      $region13: #{_lambda_.10} parent=11 // pred_check
        %p140 = pneg %p57
      $region14: #{_lambda_.10} parent=11 // pred_check_branch
        %142 = sbr.rel (%p140) target = $region16
      $region15: #{_lambda_.10} parent=11 // pred_region
        _
      $region16: #{_lambda_.10} parent=11 // pred_fallthru
        _
      // Predicated region
      $region17: #{_lambda_.10} parent=11 // pred_check
        %p143 = pneg %p78
      $region18: #{_lambda_.10} parent=11 // pred_check_branch
        %145 = sbr.rel (%p143) target = $region20
      $region19: #{_lambda_.10} parent=11 // pred_region
        _
      $region20: #{_lambda_.10} parent=11 // pred_fallthru
        _
      // Predicated region
      $region21: #{_lambda_.10} parent=11 // pred_check
        %p146 = pneg %p99
      $region22: #{_lambda_.10} parent=11 // pred_check_branch
        %148 = sbr.rel (%p146) target = $region24
      $region23: #{_lambda_.10} parent=11 // pred_region
        _
      $region24: #{_lambda_.10} parent=11 // pred_fallthru
        _
    $region12: #{_lambda_.10} parent=5 // pred_fallthru
      _
    %p149 = scmp.lt.s32.totalorder %s10, 2
    // Predicated region
    $region25: #{_lambda_.10} parent=5 // pred_check
      %p150 = pneg %p149
    $region26: #{_lambda_.10} parent=5 // pred_check_branch
      %152 = sbr.rel (%p150) target = $region28
    $region27: #{_lambda_.10} parent=5 // pred_region
      // Predicated region
      $region29: #{_lambda_.10} parent=27 // pred_check
        %p153 = pneg %p30
      $region30: #{_lambda_.10} parent=27 // pred_check_branch
        %155 = sbr.rel (%p153) target = $region32
      $region31: #{_lambda_.10} parent=27 // pred_region
        %s156 = smul.u32 2, %s10
        %p157 = scmp.lt.s32.totalorder %s156, 3
        %s158 = scalar_select %p157, %s156, 3
        %s159 = smul.addr %s158, 4
        %s160 = smul.addr %s159, 4
        %s161 = scalar_lea.vmem %s0, %s160
        %s162 = smul.u32 2, %s10
      $region32: #{_lambda_.10} parent=27 // pred_fallthru
        _
    $region28: #{_lambda_.10} parent=5 // pred_fallthru
      _
    %p163 = scmp.le.s32.totalorder 1, %s10
    %p164 = scmp.lt.s32.totalorder %s10, 3
    %p165 = pnand %p163, %p164
    %p166 = pneg %p165
    // Predicated region
    $region33: #{_lambda_.10} parent=5 // pred_check
      _
    $region34: #{_lambda_.10} parent=5 // pred_check_branch
      %168 = sbr.rel (%p165) target = $region36
    $region35: #{_lambda_.10} parent=5 // pred_region
      %s169 = ssub.s32 %s10, 1
      %s170 = smul.u32 2, %s15
      %p171 = scmp.lt.s32.totalorder %s170, 3
      %s172 = scalar_select %p171, %s170, 3
      %s173 = smul.addr %s172, 4
      %s174 = smul.addr %s173, 4
      %s175 = scalar_lea.vmem %s0, %s174
      %p176 = pneg %p36
      %p177 = pneg %p33
      %p178 = pneg %p57
      %p179 = pneg %p54
      %p180 = pneg %p78
      %p181 = pneg %p75
      %p182 = pneg %p99
      %p183 = pneg %p96
      %p184 = pneg %p125
      %p185 = pneg %p122
      %s186 = smul.u32 2, %s15
      %p187 = scmp.lt.s32.totalorder %s186, 3
      %s188 = scalar_select %p187, %s186, 3
      %s189 = smul.addr %s188, 8
      %s190 = scalar_lea.vmem %s4, %s189
      %s191 = smul.u32 2, %s15
      %p192 = scmp.lt.s32.totalorder %s191, 3
      %s193 = scalar_select %p192, %s191, 3
      %s194 = smul.addr %s193, 4
      %s195 = smul.addr %s194, 4
      %s196 = scalar_lea.vmem %s0, %s195
      %s197 = smul.u32 2, %s15
      %s198 = smul.u32 2, %s15
      %p199 = scmp.lt.s32.totalorder %s198, 3
      %s200 = scalar_select %p199, %s198, 3
      %s201 = smul.addr %s200, 8
      %s202 = scalar_lea.vmem %s4, %s201
      %s203 = smul.u32 2, %s15
      %v205 = vld [vmem:[%s196] sm:$0xff]
      %v206 = vld [vmem:[%s196 + $0x8] sm:$0xff]
      %v207 = vld [vmem:[%s196 + $0x10] sm:$0xff]
      %v208 = vld [vmem:[%s196 + $0x18] sm:$0xff]
      %v209 = vld [vmem:[%s1] sm:$0xf]
      %v210 = vld [vmem:[%s1 + $0x4] sm:$0xf]
      %v211 = vld [vmem:[%s1 + $0x8] sm:$0xf]
      %v212 = vld [vmem:[%s1 + $0xc] sm:$0xf]
      %v213 = vld [vmem:[%s1 + $0x10] sm:$0xf]
      %v214 = vld [vmem:[%s1 + $0x14] sm:$0xf]
      %v215 = vld [vmem:[%s1 + $0x18] sm:$0xf]
      %v216 = vld [vmem:[%s1 + $0x1c] sm:$0xf]
      %v217 = vld [vmem:[%s1 + $0x20] sm:$0xf]
      %v218 = vld [vmem:[%s1 + $0x24] sm:$0xf]
      %v219 = vld [vmem:[%s1 + $0x28] sm:$0xf]
      %v220 = vld [vmem:[%s1 + $0x2c] sm:$0xf]
      %v221 = vld [vmem:[%s1 + $0x30] sm:$0xf]
      %v222 = vld [vmem:[%s1 + $0x34] sm:$0xf]
      %v223 = vld [vmem:[%s1 + $0x38] sm:$0xf]
      %v224 = vld [vmem:[%s1 + $0x3c] sm:$0xf]
      %v225 = vld [vmem:[%s1 + $0x40] sm:$0xf]
      %v226 = vld [vmem:[%s1 + $0x44] sm:$0xf]
      %v227 = vld [vmem:[%s1 + $0x48] sm:$0xf]
      %v228 = vld [vmem:[%s1 + $0x4c] sm:$0xf]
      %v229 = vld [vmem:[%s1 + $0x50] sm:$0xf]
      %v230 = vld [vmem:[%s1 + $0x54] sm:$0xf]
      %v231 = vld [vmem:[%s1 + $0x58] sm:$0xf]
      %v232 = vld [vmem:[%s1 + $0x5c] sm:$0xf]
      %v233 = vld [vmem:[%s1 + $0x60] sm:$0xf]
      %v234 = vld [vmem:[%s1 + $0x64] sm:$0xf]
      %v235 = vld [vmem:[%s1 + $0x68] sm:$0xf]
      %v236 = vld [vmem:[%s1 + $0x6c] sm:$0xf]
      %v237 = vld [vmem:[%s1 + $0x70] sm:$0xf]
      %v238 = vld [vmem:[%s1 + $0x74] sm:$0xf]
      %v239 = vld [vmem:[%s1 + $0x78] sm:$0xf]
      %v240 = vld [vmem:[%s1 + $0x7c] sm:$0xf]
      %v241 = vld [vmem:[%s1 + $0x80] sm:$0xf]
      %v242 = vld [vmem:[%s1 + $0x84] sm:$0xf]
      %v243 = vld [vmem:[%s1 + $0x88] sm:$0xf]
      %v244 = vld [vmem:[%s1 + $0x8c] sm:$0xf]
      %v245 = vld [vmem:[%s1 + $0x90] sm:$0xf]
      %v246 = vld [vmem:[%s1 + $0x94] sm:$0xf]
      %v247 = vld [vmem:[%s1 + $0x98] sm:$0xf]
      %v248 = vld [vmem:[%s1 + $0x9c] sm:$0xf]
      %v249 = vld [vmem:[%s1 + $0xa0] sm:$0xf]
      %v250 = vld [vmem:[%s1 + $0xa4] sm:$0xf]
      %v251 = vld [vmem:[%s1 + $0xa8] sm:$0xf]
      %v252 = vld [vmem:[%s1 + $0xac] sm:$0xf]
      %v253 = vld [vmem:[%s1 + $0xb0] sm:$0xf]
      %v254 = vld [vmem:[%s1 + $0xb4] sm:$0xf]
      %v255 = vld [vmem:[%s1 + $0xb8] sm:$0xf]
      %v256 = vld [vmem:[%s1 + $0xbc] sm:$0xf]
      %v257 = vld [vmem:[%s1 + $0xc0] sm:$0xf]
      %v258 = vld [vmem:[%s1 + $0xc4] sm:$0xf]
      %v259 = vld [vmem:[%s1 + $0xc8] sm:$0xf]
      %v260 = vld [vmem:[%s1 + $0xcc] sm:$0xf]
      %v261 = vld [vmem:[%s1 + $0xd0] sm:$0xf]
      %v262 = vld [vmem:[%s1 + $0xd4] sm:$0xf]
      %v267 = vunpack.c.l.b16 %v205
      %v268 = vunpack.c.h.b16 %v205
      %v269 = vunpack.c.l.b16 %v206
      %v270 = vunpack.c.h.b16 %v206
      %v271 = vunpack.c.l.b16 %v207
      %v272 = vunpack.c.h.b16 %v207
      %v273 = vunpack.c.l.b16 %v208
      %v274 = vunpack.c.h.b16 %v208
      %v275 = vpack.c.b16 %v271, %v267
      %v276 = vpack.c.b16 %v272, %v268
      %v277 = vpack.c.b16 %v273, %v269
      %v278 = vpack.c.b16 %v274, %v270
      %v336 = vunpack.c.l.b16 %v209
      %v337 = vunpack.c.l.b16 %v210
      %v338 = vunpack.c.l.b16 %v211
      %v339 = vunpack.c.l.b16 %v212
      %v340 = vunpack.c.l.b16 %v213
      %v341 = vunpack.c.l.b16 %v214
      %v342 = vunpack.c.l.b16 %v215
      %v343 = vunpack.c.l.b16 %v216
      %v344 = vunpack.c.l.b16 %v217
      %v345 = vunpack.c.l.b16 %v218
      %v346 = vunpack.c.l.b16 %v219
      %v347 = vunpack.c.l.b16 %v220
      %v348 = vunpack.c.l.b16 %v221
      %v349 = vunpack.c.l.b16 %v222
      %v350 = vunpack.c.l.b16 %v223
      %v351 = vunpack.c.l.b16 %v224
      %v352 = vunpack.c.l.b16 %v225
      %v353 = vunpack.c.l.b16 %v226
      %v354 = vunpack.c.l.b16 %v227
      %v355 = vunpack.c.l.b16 %v228
      %v356 = vunpack.c.l.b16 %v229
      %v357 = vunpack.c.l.b16 %v230
      %v358 = vunpack.c.l.b16 %v231
      %v359 = vunpack.c.l.b16 %v232
      %v360 = vunpack.c.l.b16 %v233
      %v361 = vunpack.c.l.b16 %v234
      %v362 = vunpack.c.l.b16 %v235
      %v363 = vunpack.c.l.b16 %v236
      %v364 = vunpack.c.l.b16 %v237
      %v365 = vunpack.c.l.b16 %v238
      %v366 = vunpack.c.l.b16 %v239
      %v367 = vunpack.c.l.b16 %v240
      %v368 = vunpack.c.l.b16 %v241
      %v369 = vunpack.c.l.b16 %v242
      %v370 = vunpack.c.l.b16 %v243
      %v371 = vunpack.c.l.b16 %v244
      %v372 = vunpack.c.l.b16 %v245
      %v373 = vunpack.c.l.b16 %v246
      %v374 = vunpack.c.l.b16 %v247
      %v375 = vunpack.c.l.b16 %v248
      %v376 = vunpack.c.l.b16 %v249
      %v377 = vunpack.c.l.b16 %v250
      %v378 = vunpack.c.l.b16 %v251
      %v379 = vunpack.c.l.b16 %v252
      %v380 = vunpack.c.l.b16 %v253
      %v381 = vunpack.c.l.b16 %v254
      %v382 = vunpack.c.l.b16 %v255
      %v383 = vunpack.c.l.b16 %v256
      %v384 = vunpack.c.l.b16 %v257
      %v385 = vunpack.c.l.b16 %v258
      %v386 = vunpack.c.l.b16 %v259
      %v387 = vunpack.c.l.b16 %v260
      %v388 = vunpack.c.l.b16 %v261
      %v389 = vunpack.c.l.b16 %v262
      %v390 = vpack.c.b16 %v337, %v336
      %v391 = vpack.c.b16 %v339, %v338
      %v392 = vpack.c.b16 %v341, %v340
      %v393 = vpack.c.b16 %v343, %v342
      %v394 = vpack.c.b16 %v345, %v344
      %v395 = vpack.c.b16 %v347, %v346
      %v396 = vpack.c.b16 %v349, %v348
      %v397 = vpack.c.b16 %v351, %v350
      %v398 = vpack.c.b16 %v353, %v352
      %v399 = vpack.c.b16 %v355, %v354
      %v400 = vpack.c.b16 %v357, %v356
      %v401 = vpack.c.b16 %v359, %v358
      %v402 = vpack.c.b16 %v361, %v360
      %v403 = vpack.c.b16 %v363, %v362
      %v404 = vpack.c.b16 %v365, %v364
      %v405 = vpack.c.b16 %v367, %v366
      %v406 = vpack.c.b16 %v369, %v368
      %v407 = vpack.c.b16 %v371, %v370
      %v408 = vpack.c.b16 %v373, %v372
      %v409 = vpack.c.b16 %v375, %v374
      %v410 = vpack.c.b16 %v377, %v376
      %v411 = vpack.c.b16 %v379, %v378
      %v412 = vpack.c.b16 %v381, %v380
      %v413 = vpack.c.b16 %v383, %v382
      %v414 = vpack.c.b16 %v385, %v384
      %v415 = vpack.c.b16 %v387, %v386
      %v416 = vpack.c.b16 %v389, %v388
      %vm444 = vcmask 392192
      %v446 = vsel %vm444, %v278, 0
      %448 = vmatpush.bf16.msra.mxu0 %v397
      %449 = vmatpush.bf16.msra.mxu0 %v396
      %450 = vmatpush.bf16.msra.mxu0 %v395
      %451 = vmatpush.bf16.msra.mxu0 %v394
      %452 = vmatpush.bf16.msra.mxu0 %v393
      %453 = vmatpush.bf16.msra.mxu0 %v392
      %454 = vmatpush.bf16.msra.mxu0 %v391
      %455 = vmatpush.bf16.msra.mxu0 %v390
      %456 = vmatmul.bf16.gmra.mxu0 %v275
      %v457 = vpop.f32.mrf.mxu0
      %v458 = vadd.f32 0.0, %v457
      %v459 = vpop.f32.mrf.mxu0
      %v460 = vadd.f32 0.0, %v459
      %461 = vdwg.mxu0
      %462 = vmatpush.bf16.msra.mxu0 %v405
      %463 = vmatpush.bf16.msra.mxu0 %v404
      %464 = vmatpush.bf16.msra.mxu0 %v403
      %465 = vmatpush.bf16.msra.mxu0 %v402
      %466 = vmatpush.bf16.msra.mxu0 %v401
      %467 = vmatpush.bf16.msra.mxu0 %v400
      %468 = vmatpush.bf16.msra.mxu0 %v399
      %469 = vmatpush.bf16.msra.mxu0 %v398
      %470 = vmatmul.bf16.gmra.mxu0 %v276
      %v471 = vpop.f32.mrf.mxu0
      %v472 = vadd.f32 %v458, %v471
      %v473 = vpop.f32.mrf.mxu0
      %v474 = vadd.f32 %v460, %v473
      %475 = vdwg.mxu0
      %476 = vmatpush.bf16.msra.mxu0 %v413
      %477 = vmatpush.bf16.msra.mxu0 %v412
      %478 = vmatpush.bf16.msra.mxu0 %v411
      %479 = vmatpush.bf16.msra.mxu0 %v410
      %480 = vmatpush.bf16.msra.mxu0 %v409
      %481 = vmatpush.bf16.msra.mxu0 %v408
      %482 = vmatpush.bf16.msra.mxu0 %v407
      %483 = vmatpush.bf16.msra.mxu0 %v406
      %484 = vmatmul.bf16.gmra.mxu0 %v277
      %v485 = vpop.f32.mrf.mxu0
      %v486 = vadd.f32 %v472, %v485
      %v487 = vpop.f32.mrf.mxu0
      %v488 = vadd.f32 %v474, %v487
      %489 = vdwg.mxu0
      %490 = vmatpush.bf16.msra.mxu0 0
      %491 = vmatpush.bf16.msra.mxu0 0
      %492 = vmatpush.bf16.msra.mxu0 0
      %493 = vmatpush.bf16.msra.mxu0 0
      %494 = vmatpush.bf16.msra.mxu0 0
      %495 = vmatpush.bf16.msra.mxu0 %v416
      %496 = vmatpush.bf16.msra.mxu0 %v415
      %497 = vmatpush.bf16.msra.mxu0 %v414
      %498 = vmatmul.bf16.gmra.mxu0 %v446
      %v499 = vpop.f32.mrf.mxu0
      %v500 = vadd.f32 %v486, %v499
      %v501 = vpop.f32.mrf.mxu0
      %v502 = vadd.f32 %v488, %v501
      %503 = vdwg.mxu0
      %v504 = vld [vmem:[%s2] sm:$0x1]
      %v506 = vperm.slane %v504, 0
      %v508 = vmul.f32 %v500, %v506
      %v509 = vmul.f32 %v502, %v506
      %v510 = vld [vmem:[%s3] sm:$0x1]
      %v512 = vperm.slane %v510, 0
      %v514 = vadd.f32 %v508, %v512
      %v515 = vadd.f32 %v509, %v512
      %v516 = vmax.f32 %v514, 0.0
      %v517 = vmax.f32 %v515, 0.0
      %518 = vst [vmem:[%s202] sm:$0xff] %v516
      %519 = vst [vmem:[%s202 + $0x8] sm:$0xff] %v517
      %s520 = smul.u32 2, %s15
      %p521 = scmp.lt.s32.totalorder %s520, 3
      %s522 = scalar_select %p521, %s520, 3
      %s523 = smul.addr %s522, 8
      %s524 = scalar_lea.vmem %s4, %s523
      // Predicated region
      $region37: #{_lambda_.10} parent=35 // pred_check
        %p525 = pneg %p122
      $region38: #{_lambda_.10} parent=35 // pred_check_branch
        %527 = sbr.rel (%p525) target = $region40
      $region39: #{_lambda_.10} parent=35 // pred_region
        %s528 = smul.u32 2, %s15
      $region40: #{_lambda_.10} parent=35 // pred_fallthru
        _
    $region36: #{_lambda_.10} parent=5 // pred_fallthru
      _
    %p529 = scmp.le.s32.totalorder 2, %s10
    // Predicated region
    $region41: #{_lambda_.10} parent=5 // pred_check
      %p530 = pneg %p529
    $region42: #{_lambda_.10} parent=5 // pred_check_branch
      %532 = sbr.rel (%p530) target = $region44
    $region43: #{_lambda_.10} parent=5 // pred_region
      %s533 = ssub.s32 %s10, 2
      // Predicated region
      $region45: #{_lambda_.10} parent=43 // pred_check
        %p534 = pneg %p128
      $region46: #{_lambda_.10} parent=43 // pred_check_branch
        %536 = sbr.rel (%p534) target = $region48
      $region47: #{_lambda_.10} parent=43 // pred_region
        %s537 = smul.u32 2, %s16
        %p538 = scmp.lt.s32.totalorder %s537, 3
        %s539 = scalar_select %p538, %s537, 3
        %s540 = smul.addr %s539, 8
        %s541 = scalar_lea.vmem %s4, %s540
      $region48: #{_lambda_.10} parent=43 // pred_fallthru
        _
    $region44: #{_lambda_.10} parent=5 // pred_fallthru
      _
  $region6: #{_lambda_.10} parent=0 // loop_footer
    %s14 = sadd.s32 1, %s10
  $region7: #{_lambda_.10} parent=0 // loop_footer_branch
    %9 = sbr.rel target = $region3
  $region8: #{_lambda_.10} parent=0 // loop_exit
    _

// kernel: _lambda_.11
$region0: #{_lambda_.11}
  #allocation0 [shape = 'u32[]', space=smem, size = 0x4, offset = 0x4, fixed_abs, tag = 'smem constant byte address 0x4 - core index']
  #allocation1 [shape = 'u32[72,128]{1,0:T(1,128)}', space=vmem, size = 0x9000, scoped, tag = 'internal scratch']
  %s0 = inlined_call_operand.vmem [shape: bf16[32,864], index: 0, kind: input, shape index: {}]
  %s1 = inlined_call_operand.vmem [shape: bf16[864,128], index: 1, kind: input, shape index: {}]
  %s2 = inlined_call_operand.vmem [shape: f32[1,128], index: 2, kind: input, shape index: {}]
  %s3 = inlined_call_operand.vmem [shape: f32[1,128], index: 3, kind: input, shape index: {}]
  %s4 = inlined_call_operand.vmem [shape: bf16[32,48], index: 4, kind: input, shape index: {}]
  %s5 = inlined_call_operand.vmem [shape: bf16[48,128], index: 5, kind: input, shape index: {}]
  %s6 = inlined_call_operand.vmem [shape: f32[1,128], index: 6, kind: input, shape index: {}]
  %s7 = inlined_call_operand.hbm [shape: f32[32,128], index: 7, kind: output, shape index: {}]
  %s8 = sld [smem:[#allocation0]]
  $region61: #{_lambda_.11} parent=0
    _
  %s10 = ssub.s32 1, %s8
  %s11 = scalar_select 0, %s10, %s8
  $region1: #{_lambda_.11} parent=0
    #allocation2 [shape = 'u8[16384]{0}', space=vmem, size = 0x4000, scoped, tag = 'output window, operand 0']
    #allocation3 [shape = 's32[2]{0}', space=sflag, size = 0x8, scoped, tag = 'scoped memory for _lambda_.11']
    %12 = vsyncpa [#allocation3], 0
    %s13 = scalar_lea.sflag [#allocation3], 1
    %14 = vsyncpa %s13, 0
    loop: start=0, step=1, limit=4
    $region2: #{_lambda_.11} parent=1 // loop_pre_header
      _
    $region3: #{_lambda_.11} parent=1 // loop_header
      %s16 = sphi 0, %s20
      %p17 = scmp.ge.s32.totalorder %s16, 4
      %s26 = sphi 0, %s28
      %s29 = sphi 0, %s26
      %s30 = sphi 0, %s29
      %s46 = sphi 0, %s30
      %s50 = sphi 0, %s50
      %s52 = sphi 0, %s50
      %s53 = sphi 0, %s52
      %s67 = sphi 0, %s53
      %s71 = sphi 0, %s71
      %s73 = sphi 0, %s71
      %s74 = sphi 0, %s73
      %s88 = sphi 0, %s74
      %s92 = sphi 0, %s92
      %s94 = sphi 0, %s92
      %s95 = sphi 0, %s94
      %s109 = sphi 0, %s95
      %s115 = sphi 0, %s117
      %s118 = sphi 0, %s115
      %s119 = sphi 0, %s118
      %s135 = sphi 0, %s119
      %s139 = sphi 0, %s139
      %s141 = sphi 0, %s139
      %s142 = sphi 0, %s141
      %s156 = sphi 0, %s142
      %s160 = sphi 0, %s160
      %s162 = sphi 0, %s160
      %s163 = sphi 0, %s162
      %s177 = sphi 0, %s163
      %s183 = sphi 0, %s185
      %s186 = sphi 0, %s183
      %s187 = sphi 0, %s186
      %s203 = sphi 0, %s187
    $region4: #{_lambda_.11} parent=1 // loop_header_branch
      %19 = sbr.rel (%p17) target = $region8
    $region5: #{_lambda_.11} parent=1 // loop_body
      %s21 = ssub.s32 %s16, 1
      %s22 = ssub.s32 %s16, 2
      %s23 = sadd.s32 %s16, 1
      %s24 = ssub.s32 %s16, %s23
      %p25 = scmp.eq.s32.totalorder %s24, 0
      %s27 = sadd.s32 %s26, 1
      %s28 = scalar_select %p25, %s26, %s27
      %p31 = pneg %p25
      %p32 = scmp.eq.s32.totalorder %s16, 1
      %p33 = por %p31, %p32
      %p34 = scmp.ne.s32.totalorder %s26, %s29
      %p35 = scmp.eq.s32.totalorder %s16, 0
      %p36 = por %p34, %p35
      %p37 = scmp.ne.s32.totalorder %s26, %s29
      %p38 = scmp.eq.s32.totalorder %s21, 1
      %p39 = por %p37, %p38
      %p40 = scmp.ne.s32.totalorder %s29, %s30
      %p41 = scmp.eq.s32.totalorder %s21, 0
      %p42 = por %p40, %p41
      %p43 = scmp.ne.s32.totalorder %s29, %s30
      %p44 = scmp.eq.s32.totalorder %s22, 1
      %p45 = por %p43, %p44
      %p47 = scmp.ne.s32.totalorder %s30, %s46
      %p48 = scmp.eq.s32.totalorder %s22, 0
      %p49 = por %p47, %p48
      %s51 = sadd.s32 %s50, 1
      %p54 = scmp.eq.s32.totalorder %s16, 1
      %p55 = scmp.ne.s32.totalorder %s50, %s52
      %p56 = scmp.eq.s32.totalorder %s16, 0
      %p57 = por %p55, %p56
      %p58 = scmp.ne.s32.totalorder %s50, %s52
      %p59 = scmp.eq.s32.totalorder %s21, 1
      %p60 = por %p58, %p59
      %p61 = scmp.ne.s32.totalorder %s52, %s53
      %p62 = scmp.eq.s32.totalorder %s21, 0
      %p63 = por %p61, %p62
      %p64 = scmp.ne.s32.totalorder %s52, %s53
      %p65 = scmp.eq.s32.totalorder %s22, 1
      %p66 = por %p64, %p65
      %p68 = scmp.ne.s32.totalorder %s53, %s67
      %p69 = scmp.eq.s32.totalorder %s22, 0
      %p70 = por %p68, %p69
      %s72 = sadd.s32 %s71, 1
      %p75 = scmp.eq.s32.totalorder %s16, 1
      %p76 = scmp.ne.s32.totalorder %s71, %s73
      %p77 = scmp.eq.s32.totalorder %s16, 0
      %p78 = por %p76, %p77
      %p79 = scmp.ne.s32.totalorder %s71, %s73
      %p80 = scmp.eq.s32.totalorder %s21, 1
      %p81 = por %p79, %p80
      %p82 = scmp.ne.s32.totalorder %s73, %s74
      %p83 = scmp.eq.s32.totalorder %s21, 0
      %p84 = por %p82, %p83
      %p85 = scmp.ne.s32.totalorder %s73, %s74
      %p86 = scmp.eq.s32.totalorder %s22, 1
      %p87 = por %p85, %p86
      %p89 = scmp.ne.s32.totalorder %s74, %s88
      %p90 = scmp.eq.s32.totalorder %s22, 0
      %p91 = por %p89, %p90
      %s93 = sadd.s32 %s92, 1
      %p96 = scmp.eq.s32.totalorder %s16, 1
      %p97 = scmp.ne.s32.totalorder %s92, %s94
      %p98 = scmp.eq.s32.totalorder %s16, 0
      %p99 = por %p97, %p98
      %p100 = scmp.ne.s32.totalorder %s92, %s94
      %p101 = scmp.eq.s32.totalorder %s21, 1
      %p102 = por %p100, %p101
      %p103 = scmp.ne.s32.totalorder %s94, %s95
      %p104 = scmp.eq.s32.totalorder %s21, 0
      %p105 = por %p103, %p104
      %p106 = scmp.ne.s32.totalorder %s94, %s95
      %p107 = scmp.eq.s32.totalorder %s22, 1
      %p108 = por %p106, %p107
      %p110 = scmp.ne.s32.totalorder %s95, %s109
      %p111 = scmp.eq.s32.totalorder %s22, 0
      %p112 = por %p110, %p111
      %s113 = ssub.s32 %s16, %s23
      %p114 = scmp.eq.s32.totalorder %s113, 0
      %s116 = sadd.s32 %s115, 1
      %s117 = scalar_select %p114, %s115, %s116
      %p120 = pneg %p114
      %p121 = scmp.eq.s32.totalorder %s16, 1
      %p122 = por %p120, %p121
      %p123 = scmp.ne.s32.totalorder %s115, %s118
      %p124 = scmp.eq.s32.totalorder %s16, 0
      %p125 = por %p123, %p124
      %p126 = scmp.ne.s32.totalorder %s115, %s118
      %p127 = scmp.eq.s32.totalorder %s21, 1
      %p128 = por %p126, %p127
      %p129 = scmp.ne.s32.totalorder %s118, %s119
      %p130 = scmp.eq.s32.totalorder %s21, 0
      %p131 = por %p129, %p130
      %p132 = scmp.ne.s32.totalorder %s118, %s119
      %p133 = scmp.eq.s32.totalorder %s22, 1
      %p134 = por %p132, %p133
      %p136 = scmp.ne.s32.totalorder %s119, %s135
      %p137 = scmp.eq.s32.totalorder %s22, 0
      %p138 = por %p136, %p137
      %s140 = sadd.s32 %s139, 1
      %p143 = scmp.eq.s32.totalorder %s16, 1
      %p144 = scmp.ne.s32.totalorder %s139, %s141
      %p145 = scmp.eq.s32.totalorder %s16, 0
      %p146 = por %p144, %p145
      %p147 = scmp.ne.s32.totalorder %s139, %s141
      %p148 = scmp.eq.s32.totalorder %s21, 1
      %p149 = por %p147, %p148
      %p150 = scmp.ne.s32.totalorder %s141, %s142
      %p151 = scmp.eq.s32.totalorder %s21, 0
      %p152 = por %p150, %p151
      %p153 = scmp.ne.s32.totalorder %s141, %s142
      %p154 = scmp.eq.s32.totalorder %s22, 1
      %p155 = por %p153, %p154
      %p157 = scmp.ne.s32.totalorder %s142, %s156
      %p158 = scmp.eq.s32.totalorder %s22, 0
      %p159 = por %p157, %p158
      %s161 = sadd.s32 %s160, 1
      %p164 = scmp.eq.s32.totalorder %s16, 1
      %p165 = scmp.ne.s32.totalorder %s160, %s162
      %p166 = scmp.eq.s32.totalorder %s16, 0
      %p167 = por %p165, %p166
      %p168 = scmp.ne.s32.totalorder %s160, %s162
      %p169 = scmp.eq.s32.totalorder %s21, 1
      %p170 = por %p168, %p169
      %p171 = scmp.ne.s32.totalorder %s162, %s163
      %p172 = scmp.eq.s32.totalorder %s21, 0
      %p173 = por %p171, %p172
      %p174 = scmp.ne.s32.totalorder %s162, %s163
      %p175 = scmp.eq.s32.totalorder %s22, 1
      %p176 = por %p174, %p175
      %p178 = scmp.ne.s32.totalorder %s163, %s177
      %p179 = scmp.eq.s32.totalorder %s22, 0
      %p180 = por %p178, %p179
      %s181 = ssub.s32 %s16, %s23
      %p182 = scmp.eq.s32.totalorder %s181, 0
      %s184 = sadd.s32 %s183, 1
      %s185 = scalar_select %p182, %s183, %s184
      %p188 = pneg %p182
      %p189 = scmp.eq.s32.totalorder %s16, 1
      %p190 = por %p188, %p189
      %p191 = scmp.ne.s32.totalorder %s183, %s186
      %p192 = scmp.eq.s32.totalorder %s16, 0
      %p193 = por %p191, %p192
      %p194 = scmp.ne.s32.totalorder %s183, %s186
      %p195 = scmp.eq.s32.totalorder %s21, 1
      %p196 = por %p194, %p195
      %p197 = scmp.ne.s32.totalorder %s186, %s187
      %p198 = scmp.eq.s32.totalorder %s21, 0
      %p199 = por %p197, %p198
      %p200 = scmp.ne.s32.totalorder %s186, %s187
      %p201 = scmp.eq.s32.totalorder %s22, 1
      %p202 = por %p200, %p201
      %p204 = scmp.ne.s32.totalorder %s187, %s203
      %p205 = scmp.eq.s32.totalorder %s22, 0
      %p206 = por %p204, %p205
      %p207 = scmp.le.s32.totalorder 1, %s16
      %p208 = scmp.lt.s32.totalorder %s16, 3
      %p209 = pnand %p207, %p208
      %p210 = pneg %p209
      // Predicated region
      $region9: #{_lambda_.11} parent=5 // pred_check
        _
      $region10: #{_lambda_.11} parent=5 // pred_check_branch
        %212 = sbr.rel (%p209) target = $region12
      $region11: #{_lambda_.11} parent=5 // pred_region
        %s213 = ssub.s32 %s16, 1
        // Predicated region
        $region13: #{_lambda_.11} parent=11 // pred_check
          %p214 = pneg %p63
        $region14: #{_lambda_.11} parent=11 // pred_check_branch
          %216 = sbr.rel (%p214) target = $region16
        $region15: #{_lambda_.11} parent=11 // pred_region
          _
        $region16: #{_lambda_.11} parent=11 // pred_fallthru
          _
        // Predicated region
        $region17: #{_lambda_.11} parent=11 // pred_check
          %p217 = pneg %p84
        $region18: #{_lambda_.11} parent=11 // pred_check_branch
          %219 = sbr.rel (%p217) target = $region20
        $region19: #{_lambda_.11} parent=11 // pred_region
          _
        $region20: #{_lambda_.11} parent=11 // pred_fallthru
          _
        // Predicated region
        $region21: #{_lambda_.11} parent=11 // pred_check
          %p220 = pneg %p105
        $region22: #{_lambda_.11} parent=11 // pred_check_branch
          %222 = sbr.rel (%p220) target = $region24
        $region23: #{_lambda_.11} parent=11 // pred_region
          _
        $region24: #{_lambda_.11} parent=11 // pred_fallthru
          _
        // Predicated region
        $region25: #{_lambda_.11} parent=11 // pred_check
          %p223 = pneg %p152
        $region26: #{_lambda_.11} parent=11 // pred_check_branch
          %225 = sbr.rel (%p223) target = $region28
        $region27: #{_lambda_.11} parent=11 // pred_region
          _
        $region28: #{_lambda_.11} parent=11 // pred_fallthru
          _
        // Predicated region
        $region29: #{_lambda_.11} parent=11 // pred_check
          %p226 = pneg %p173
        $region30: #{_lambda_.11} parent=11 // pred_check_branch
          %228 = sbr.rel (%p226) target = $region32
        $region31: #{_lambda_.11} parent=11 // pred_region
          _
        $region32: #{_lambda_.11} parent=11 // pred_fallthru
          _
      $region12: #{_lambda_.11} parent=5 // pred_fallthru
        _
      %p229 = scmp.lt.s32.totalorder %s16, 2
      // Predicated region
      $region33: #{_lambda_.11} parent=5 // pred_check
        %p230 = pneg %p229
      $region34: #{_lambda_.11} parent=5 // pred_check_branch
        %232 = sbr.rel (%p230) target = $region36
      $region35: #{_lambda_.11} parent=5 // pred_region
        // Predicated region
        $region37: #{_lambda_.11} parent=35 // pred_check
          %p233 = pneg %p36
        $region38: #{_lambda_.11} parent=35 // pred_check_branch
          %235 = sbr.rel (%p233) target = $region40
        $region39: #{_lambda_.11} parent=35 // pred_region
          %s236 = smul.u32 2, %s16
          %p237 = scmp.lt.s32.totalorder %s236, 3
          %s238 = scalar_select %p237, %s236, 3
          %s239 = smul.addr %s238, 7
          %s240 = smul.addr %s239, 4
          %s241 = scalar_lea.vmem %s0, %s240
          %s242 = smul.u32 2, %s16
        $region40: #{_lambda_.11} parent=35 // pred_fallthru
          _
        // Predicated region
        $region41: #{_lambda_.11} parent=35 // pred_check
          %p243 = pneg %p125
        $region42: #{_lambda_.11} parent=35 // pred_check_branch
          %245 = sbr.rel (%p243) target = $region44
        $region43: #{_lambda_.11} parent=35 // pred_region
          %s246 = smul.u32 2, %s16
          %p247 = scmp.lt.s32.totalorder %s246, 3
          %s248 = scalar_select %p247, %s246, 3
          %s249 = smul.addr %s248, 4
          %s250 = scalar_lea.vmem %s4, %s249
          %s251 = smul.u32 2, %s16
        $region44: #{_lambda_.11} parent=35 // pred_fallthru
          _
      $region36: #{_lambda_.11} parent=5 // pred_fallthru
        _
      %p252 = scmp.le.s32.totalorder 1, %s16
      %p253 = scmp.lt.s32.totalorder %s16, 3
      %p254 = pnand %p252, %p253
      %p255 = pneg %p254
      // Predicated region
      $region45: #{_lambda_.11} parent=5 // pred_check
        _
      $region46: #{_lambda_.11} parent=5 // pred_check_branch
        %257 = sbr.rel (%p254) target = $region48
      $region47: #{_lambda_.11} parent=5 // pred_region
        %s258 = ssub.s32 %s16, 1
        %s259 = smul.u32 2, %s21
        %p260 = scmp.lt.s32.totalorder %s259, 3
        %s261 = scalar_select %p260, %s259, 3
        %s262 = smul.addr %s261, 7
        %s263 = smul.addr %s262, 4
        %s264 = scalar_lea.vmem %s0, %s263
        %p265 = pneg %p42
        %p266 = pneg %p39
        %p267 = pneg %p63
        %p268 = pneg %p60
        %p269 = pneg %p84
        %p270 = pneg %p81
        %p271 = pneg %p105
        %p272 = pneg %p102
        %s273 = smul.u32 2, %s21
        %p274 = scmp.lt.s32.totalorder %s273, 3
        %s275 = scalar_select %p274, %s273, 3
        %s276 = smul.addr %s275, 4
        %s277 = scalar_lea.vmem %s4, %s276
        %p278 = pneg %p131
        %p279 = pneg %p128
        %p280 = pneg %p152
        %p281 = pneg %p149
        %p282 = pneg %p173
        %p283 = pneg %p170
        %p284 = pneg %p199
        %p285 = pneg %p196
        %s286 = sand.u32 %s186, 1
        %s287 = scalar_lea.sflag [#allocation3], %s286
        %s288 = sand.u32 %s186, 1
        %s289 = smul.addr %s288, 16
        %s290 = scalar_lea.vmem [#allocation2], %s289
        %s291 = smul.u32 2, %s21
        %p292 = scmp.lt.s32.totalorder %s291, 3
        %s293 = scalar_select %p292, %s291, 3
        %s294 = smul.addr %s293, 7
        %s295 = smul.addr %s294, 4
        %s296 = scalar_lea.vmem %s0, %s295
        %s297 = smul.u32 2, %s21
        %s298 = smul.u32 2, %s21
        %p299 = scmp.lt.s32.totalorder %s298, 3
        %s300 = scalar_select %p299, %s298, 3
        %s301 = smul.addr %s300, 4
        %s302 = scalar_lea.vmem %s4, %s301
        %s303 = smul.u32 2, %s21
        %s304 = smul.u32 2, %s21
        %v306 = vld [vmem:[%s296] sm:$0xff]
        %v307 = vld [vmem:[%s296 + $0x8] sm:$0xff]
        %v308 = vld [vmem:[%s296 + $0x10] sm:$0xff]
        %v309 = vld [vmem:[%s296 + $0x18] sm:$0xf]
        %v310 = vld [vmem:[%s296 + $0x1c] sm:$0xff]
        %v311 = vld [vmem:[%s296 + $0x24] sm:$0xff]
        %v312 = vld [vmem:[%s296 + $0x2c] sm:$0xff]
        %v313 = vld [vmem:[%s296 + $0x34] sm:$0xf]
        %v314 = vld [vmem:[%s1] sm:$0xf]
        %v315 = vld [vmem:[%s1 + $0x4] sm:$0xf]
        %v316 = vld [vmem:[%s1 + $0x8] sm:$0xf]
        %v317 = vld [vmem:[%s1 + $0xc] sm:$0xf]
        %v318 = vld [vmem:[%s1 + $0x10] sm:$0xf]
        %v319 = vld [vmem:[%s1 + $0x14] sm:$0xf]
        %v320 = vld [vmem:[%s1 + $0x18] sm:$0xf]
        %v321 = vld [vmem:[%s1 + $0x1c] sm:$0xf]
        %v322 = vld [vmem:[%s1 + $0x20] sm:$0xf]
        %v323 = vld [vmem:[%s1 + $0x24] sm:$0xf]
        %v324 = vld [vmem:[%s1 + $0x28] sm:$0xf]
        %v325 = vld [vmem:[%s1 + $0x2c] sm:$0xf]
        %v326 = vld [vmem:[%s1 + $0x30] sm:$0xf]
        %v327 = vld [vmem:[%s1 + $0x34] sm:$0xf]
        %v328 = vld [vmem:[%s1 + $0x38] sm:$0xf]
        %v329 = vld [vmem:[%s1 + $0x3c] sm:$0xf]
        %v330 = vld [vmem:[%s1 + $0x40] sm:$0xf]
        %v331 = vld [vmem:[%s1 + $0x44] sm:$0xf]
        %v332 = vld [vmem:[%s1 + $0x48] sm:$0xf]
        %v333 = vld [vmem:[%s1 + $0x4c] sm:$0xf]
        %v334 = vld [vmem:[%s1 + $0x50] sm:$0xf]
        %v335 = vld [vmem:[%s1 + $0x54] sm:$0xf]
        %v336 = vld [vmem:[%s1 + $0x58] sm:$0xf]
        %v337 = vld [vmem:[%s1 + $0x5c] sm:$0xf]
        %v338 = vld [vmem:[%s1 + $0x60] sm:$0xf]
        %v339 = vld [vmem:[%s1 + $0x64] sm:$0xf]
        %v340 = vld [vmem:[%s1 + $0x68] sm:$0xf]
        %v341 = vld [vmem:[%s1 + $0x6c] sm:$0xf]
        %v342 = vld [vmem:[%s1 + $0x70] sm:$0xf]
        %v343 = vld [vmem:[%s1 + $0x74] sm:$0xf]
        %v344 = vld [vmem:[%s1 + $0x78] sm:$0xf]
        %v345 = vld [vmem:[%s1 + $0x7c] sm:$0xf]
        %v346 = vld [vmem:[%s1 + $0x80] sm:$0xf]
        %v347 = vld [vmem:[%s1 + $0x84] sm:$0xf]
        %v348 = vld [vmem:[%s1 + $0x88] sm:$0xf]
        %v349 = vld [vmem:[%s1 + $0x8c] sm:$0xf]
        %v350 = vld [vmem:[%s1 + $0x90] sm:$0xf]
        %v351 = vld [vmem:[%s1 + $0x94] sm:$0xf]
        %v352 = vld [vmem:[%s1 + $0x98] sm:$0xf]
        %v353 = vld [vmem:[%s1 + $0x9c] sm:$0xf]
        %v354 = vld [vmem:[%s1 + $0xa0] sm:$0xf]
        %v355 = vld [vmem:[%s1 + $0xa4] sm:$0xf]
        %v356 = vld [vmem:[%s1 + $0xa8] sm:$0xf]
        %v357 = vld [vmem:[%s1 + $0xac] sm:$0xf]
        %v358 = vld [vmem:[%s1 + $0xb0] sm:$0xf]
        %v359 = vld [vmem:[%s1 + $0xb4] sm:$0xf]
        %v360 = vld [vmem:[%s1 + $0xb8] sm:$0xf]
        %v361 = vld [vmem:[%s1 + $0xbc] sm:$0xf]
        %v362 = vld [vmem:[%s1 + $0xc0] sm:$0xf]
        %v363 = vld [vmem:[%s1 + $0xc4] sm:$0xf]
        %v364 = vld [vmem:[%s1 + $0xc8] sm:$0xf]
        %v365 = vld [vmem:[%s1 + $0xcc] sm:$0xf]
        %v366 = vld [vmem:[%s1 + $0xd0] sm:$0xf]
        %v367 = vld [vmem:[%s1 + $0xd4] sm:$0xf]
        %v368 = vld [vmem:[%s1 + $0xd8] sm:$0xf]
        %v369 = vld [vmem:[%s1 + $0xdc] sm:$0xf]
        %v370 = vld [vmem:[%s1 + $0xe0] sm:$0xf]
        %v371 = vld [vmem:[%s1 + $0xe4] sm:$0xf]
        %v372 = vld [vmem:[%s1 + $0xe8] sm:$0xf]
        %v373 = vld [vmem:[%s1 + $0xec] sm:$0xf]
        %v374 = vld [vmem:[%s1 + $0xf0] sm:$0xf]
        %v375 = vld [vmem:[%s1 + $0xf4] sm:$0xf]
        %v376 = vld [vmem:[%s1 + $0xf8] sm:$0xf]
        %v377 = vld [vmem:[%s1 + $0xfc] sm:$0xf]
        %v378 = vld [vmem:[%s1 + $0x100] sm:$0xf]
        %v379 = vld [vmem:[%s1 + $0x104] sm:$0xf]
        %v380 = vld [vmem:[%s1 + $0x108] sm:$0xf]
        %v381 = vld [vmem:[%s1 + $0x10c] sm:$0xf]
        %v382 = vld [vmem:[%s1 + $0x110] sm:$0xf]
        %v383 = vld [vmem:[%s1 + $0x114] sm:$0xf]
        %v384 = vld [vmem:[%s1 + $0x118] sm:$0xf]
        %v385 = vld [vmem:[%s1 + $0x11c] sm:$0xf]
        %v386 = vld [vmem:[%s1 + $0x120] sm:$0xf]
        %v387 = vld [vmem:[%s1 + $0x124] sm:$0xf]
        %v388 = vld [vmem:[%s1 + $0x128] sm:$0xf]
        %v389 = vld [vmem:[%s1 + $0x12c] sm:$0xf]
        %v390 = vld [vmem:[%s1 + $0x130] sm:$0xf]
        %v391 = vld [vmem:[%s1 + $0x134] sm:$0xf]
        %v392 = vld [vmem:[%s1 + $0x138] sm:$0xf]
        %v393 = vld [vmem:[%s1 + $0x13c] sm:$0xf]
        %v394 = vld [vmem:[%s1 + $0x140] sm:$0xf]
        %v395 = vld [vmem:[%s1 + $0x144] sm:$0xf]
        %v396 = vld [vmem:[%s1 + $0x148] sm:$0xf]
        %v397 = vld [vmem:[%s1 + $0x14c] sm:$0xf]
        %v398 = vld [vmem:[%s1 + $0x150] sm:$0xf]
        %v399 = vld [vmem:[%s1 + $0x154] sm:$0xf]
        %v400 = vld [vmem:[%s1 + $0x158] sm:$0xf]
        %v401 = vld [vmem:[%s1 + $0x15c] sm:$0xf]
        %v402 = vld [vmem:[%s1 + $0x160] sm:$0xf]
        %v403 = vld [vmem:[%s1 + $0x164] sm:$0xf]
        %v404 = vld [vmem:[%s1 + $0x168] sm:$0xf]
        %v405 = vld [vmem:[%s1 + $0x16c] sm:$0xf]
        %v406 = vld [vmem:[%s1 + $0x170] sm:$0xf]
        %v407 = vld [vmem:[%s1 + $0x174] sm:$0xf]
        %v408 = vld [vmem:[%s1 + $0x178] sm:$0xf]
        %v409 = vld [vmem:[%s1 + $0x17c] sm:$0xf]
        %v410 = vld [vmem:[%s1 + $0x180] sm:$0xf]
        %v411 = vld [vmem:[%s1 + $0x184] sm:$0xf]
        %v412 = vld [vmem:[%s1 + $0x188] sm:$0xf]
        %v413 = vld [vmem:[%s1 + $0x18c] sm:$0xf]
        %v414 = vld [vmem:[%s1 + $0x190] sm:$0xf]
        %v415 = vld [vmem:[%s1 + $0x194] sm:$0xf]
        %v416 = vld [vmem:[%s1 + $0x198] sm:$0xf]
        %v417 = vld [vmem:[%s1 + $0x19c] sm:$0xf]
        %v418 = vld [vmem:[%s1 + $0x1a0] sm:$0xf]
        %v419 = vld [vmem:[%s1 + $0x1a4] sm:$0xf]
        %v420 = vld [vmem:[%s1 + $0x1a8] sm:$0xf]
        %v421 = vld [vmem:[%s1 + $0x1ac] sm:$0xf]
        %v430 = vunpack.c.l.b16 %v306
        %v431 = vunpack.c.h.b16 %v306
        %v432 = vunpack.c.l.b16 %v307
        %v433 = vunpack.c.h.b16 %v307
        %v434 = vunpack.c.l.b16 %v308
        %v435 = vunpack.c.h.b16 %v308
        %v436 = vunpack.c.l.b16 %v309
        %v437 = vunpack.c.l.b16 %v310
        %v438 = vunpack.c.h.b16 %v310
        %v439 = vunpack.c.l.b16 %v311
        %v440 = vunpack.c.h.b16 %v311
        %v441 = vunpack.c.l.b16 %v312
        %v442 = vunpack.c.h.b16 %v312
        %v443 = vunpack.c.l.b16 %v313
        %v444 = vpack.c.b16 %v437, %v430
        %v445 = vpack.c.b16 %v438, %v431
        %v446 = vpack.c.b16 %v439, %v432
        %v447 = vpack.c.b16 %v440, %v433
        %v448 = vpack.c.b16 %v441, %v434
        %v449 = vpack.c.b16 %v442, %v435
        %v450 = vpack.c.b16 %v443, %v436
        %v565 = vunpack.c.l.b16 %v314
        %v566 = vunpack.c.l.b16 %v315
        %v567 = vunpack.c.l.b16 %v316
        %v568 = vunpack.c.l.b16 %v317
        %v569 = vunpack.c.l.b16 %v318
        %v570 = vunpack.c.l.b16 %v319
        %v571 = vunpack.c.l.b16 %v320
        %v572 = vunpack.c.l.b16 %v321
        %v573 = vunpack.c.l.b16 %v322
        %v574 = vunpack.c.l.b16 %v323
        %v575 = vunpack.c.l.b16 %v324
        %v576 = vunpack.c.l.b16 %v325
        %v577 = vunpack.c.l.b16 %v326
        %v578 = vunpack.c.l.b16 %v327
        %v579 = vunpack.c.l.b16 %v328
        %v580 = vunpack.c.l.b16 %v329
        %v581 = vunpack.c.l.b16 %v330
        %v582 = vunpack.c.l.b16 %v331
        %v583 = vunpack.c.l.b16 %v332
        %v584 = vunpack.c.l.b16 %v333
        %v585 = vunpack.c.l.b16 %v334
        %v586 = vunpack.c.l.b16 %v335
        %v587 = vunpack.c.l.b16 %v336
        %v588 = vunpack.c.l.b16 %v337
        %v589 = vunpack.c.l.b16 %v338
        %v590 = vunpack.c.l.b16 %v339
        %v591 = vunpack.c.l.b16 %v340
        %v592 = vunpack.c.l.b16 %v341
        %v593 = vunpack.c.l.b16 %v342
        %v594 = vunpack.c.l.b16 %v343
        %v595 = vunpack.c.l.b16 %v344
        %v596 = vunpack.c.l.b16 %v345
        %v597 = vunpack.c.l.b16 %v346
        %v598 = vunpack.c.l.b16 %v347
        %v599 = vunpack.c.l.b16 %v348
        %v600 = vunpack.c.l.b16 %v349
        %v601 = vunpack.c.l.b16 %v350
        %v602 = vunpack.c.l.b16 %v351
        %v603 = vunpack.c.l.b16 %v352
        %v604 = vunpack.c.l.b16 %v353
        %v605 = vunpack.c.l.b16 %v354
        %v606 = vunpack.c.l.b16 %v355
        %v607 = vunpack.c.l.b16 %v356
        %v608 = vunpack.c.l.b16 %v357
        %v609 = vunpack.c.l.b16 %v358
        %v610 = vunpack.c.l.b16 %v359
        %v611 = vunpack.c.l.b16 %v360
        %v612 = vunpack.c.l.b16 %v361
        %v613 = vunpack.c.l.b16 %v362
        %v614 = vunpack.c.l.b16 %v363
        %v615 = vunpack.c.l.b16 %v364
        %v616 = vunpack.c.l.b16 %v365
        %v617 = vunpack.c.l.b16 %v366
        %v618 = vunpack.c.l.b16 %v367
        %v619 = vunpack.c.l.b16 %v368
        %v620 = vunpack.c.l.b16 %v369
        %v621 = vunpack.c.l.b16 %v370
        %v622 = vunpack.c.l.b16 %v371
        %v623 = vunpack.c.l.b16 %v372
        %v624 = vunpack.c.l.b16 %v373
        %v625 = vunpack.c.l.b16 %v374
        %v626 = vunpack.c.l.b16 %v375
        %v627 = vunpack.c.l.b16 %v376
        %v628 = vunpack.c.l.b16 %v377
        %v629 = vunpack.c.l.b16 %v378
        %v630 = vunpack.c.l.b16 %v379
        %v631 = vunpack.c.l.b16 %v380
        %v632 = vunpack.c.l.b16 %v381
        %v633 = vunpack.c.l.b16 %v382
        %v634 = vunpack.c.l.b16 %v383
        %v635 = vunpack.c.l.b16 %v384
        %v636 = vunpack.c.l.b16 %v385
        %v637 = vunpack.c.l.b16 %v386
        %v638 = vunpack.c.l.b16 %v387
        %v639 = vunpack.c.l.b16 %v388
        %v640 = vunpack.c.l.b16 %v389
        %v641 = vunpack.c.l.b16 %v390
        %v642 = vunpack.c.l.b16 %v391
        %v643 = vunpack.c.l.b16 %v392
        %v644 = vunpack.c.l.b16 %v393
        %v645 = vunpack.c.l.b16 %v394
        %v646 = vunpack.c.l.b16 %v395
        %v647 = vunpack.c.l.b16 %v396
        %v648 = vunpack.c.l.b16 %v397
        %v649 = vunpack.c.l.b16 %v398
        %v650 = vunpack.c.l.b16 %v399
        %v651 = vunpack.c.l.b16 %v400
        %v652 = vunpack.c.l.b16 %v401
        %v653 = vunpack.c.l.b16 %v402
        %v654 = vunpack.c.l.b16 %v403
        %v655 = vunpack.c.l.b16 %v404
        %v656 = vunpack.c.l.b16 %v405
        %v657 = vunpack.c.l.b16 %v406
        %v658 = vunpack.c.l.b16 %v407
        %v659 = vunpack.c.l.b16 %v408
        %v660 = vunpack.c.l.b16 %v409
        %v661 = vunpack.c.l.b16 %v410
        %v662 = vunpack.c.l.b16 %v411
        %v663 = vunpack.c.l.b16 %v412
        %v664 = vunpack.c.l.b16 %v413
        %v665 = vunpack.c.l.b16 %v414
        %v666 = vunpack.c.l.b16 %v415
        %v667 = vunpack.c.l.b16 %v416
        %v668 = vunpack.c.l.b16 %v417
        %v669 = vunpack.c.l.b16 %v418
        %v670 = vunpack.c.l.b16 %v419
        %v671 = vunpack.c.l.b16 %v420
        %v672 = vunpack.c.l.b16 %v421
        %v673 = vpack.c.b16 %v566, %v565
        %v674 = vpack.c.b16 %v568, %v567
        %v675 = vpack.c.b16 %v570, %v569
        %v676 = vpack.c.b16 %v572, %v571
        %v677 = vpack.c.b16 %v574, %v573
        %v678 = vpack.c.b16 %v576, %v575
        %v679 = vpack.c.b16 %v578, %v577
        %v680 = vpack.c.b16 %v580, %v579
        %v681 = vpack.c.b16 %v582, %v581
        %v682 = vpack.c.b16 %v584, %v583
        %v683 = vpack.c.b16 %v586, %v585
        %v684 = vpack.c.b16 %v588, %v587
        %v685 = vpack.c.b16 %v590, %v589
        %v686 = vpack.c.b16 %v592, %v591
        %v687 = vpack.c.b16 %v594, %v593
        %v688 = vpack.c.b16 %v596, %v595
        %v689 = vpack.c.b16 %v598, %v597
        %v690 = vpack.c.b16 %v600, %v599
        %v691 = vpack.c.b16 %v602, %v601
        %v692 = vpack.c.b16 %v604, %v603
        %v693 = vpack.c.b16 %v606, %v605
        %v694 = vpack.c.b16 %v608, %v607
        %v695 = vpack.c.b16 %v610, %v609
        %v696 = vpack.c.b16 %v612, %v611
        %v697 = vpack.c.b16 %v614, %v613
        %v698 = vpack.c.b16 %v616, %v615
        %v699 = vpack.c.b16 %v618, %v617
        %v700 = vpack.c.b16 %v620, %v619
        %v701 = vpack.c.b16 %v622, %v621
        %v702 = vpack.c.b16 %v624, %v623
        %v703 = vpack.c.b16 %v626, %v625
        %v704 = vpack.c.b16 %v628, %v627
        %v705 = vpack.c.b16 %v630, %v629
        %v706 = vpack.c.b16 %v632, %v631
        %v707 = vpack.c.b16 %v634, %v633
        %v708 = vpack.c.b16 %v636, %v635
        %v709 = vpack.c.b16 %v638, %v637
        %v710 = vpack.c.b16 %v640, %v639
        %v711 = vpack.c.b16 %v642, %v641
        %v712 = vpack.c.b16 %v644, %v643
        %v713 = vpack.c.b16 %v646, %v645
        %v714 = vpack.c.b16 %v648, %v647
        %v715 = vpack.c.b16 %v650, %v649
        %v716 = vpack.c.b16 %v652, %v651
        %v717 = vpack.c.b16 %v654, %v653
        %v718 = vpack.c.b16 %v656, %v655
        %v719 = vpack.c.b16 %v658, %v657
        %v720 = vpack.c.b16 %v660, %v659
        %v721 = vpack.c.b16 %v662, %v661
        %v722 = vpack.c.b16 %v664, %v663
        %v723 = vpack.c.b16 %v666, %v665
        %v724 = vpack.c.b16 %v668, %v667
        %v725 = vpack.c.b16 %v670, %v669
        %v726 = vpack.c.b16 %v672, %v671
        %vm781 = vcmask 785408
        %v783 = vsel %vm781, %v450, 0
        %785 = vmatpush.bf16.msra.mxu0 %v680
        %786 = vmatpush.bf16.msra.mxu0 %v679
        %787 = vmatpush.bf16.msra.mxu0 %v678
        %788 = vmatpush.bf16.msra.mxu0 %v677
        %789 = vmatpush.bf16.msra.mxu0 %v676
        %790 = vmatpush.bf16.msra.mxu0 %v675
        %791 = vmatpush.bf16.msra.mxu0 %v674
        %792 = vmatpush.bf16.msra.mxu0 %v673
        %793 = vmatmul.bf16.gmra.mxu0 %v444
        %v794 = vpop.f32.mrf.mxu0
        %v795 = vadd.f32 0.0, %v794
        %v796 = vpop.f32.mrf.mxu0
        %v797 = vadd.f32 0.0, %v796
        %798 = vdwg.mxu0
        %799 = vmatpush.bf16.msra.mxu0 %v688
        %800 = vmatpush.bf16.msra.mxu0 %v687
        %801 = vmatpush.bf16.msra.mxu0 %v686
        %802 = vmatpush.bf16.msra.mxu0 %v685
        %803 = vmatpush.bf16.msra.mxu0 %v684
        %804 = vmatpush.bf16.msra.mxu0 %v683
        %805 = vmatpush.bf16.msra.mxu0 %v682
        %806 = vmatpush.bf16.msra.mxu0 %v681
        %807 = vmatmul.bf16.gmra.mxu0 %v445
        %v808 = vpop.f32.mrf.mxu0
        %v809 = vadd.f32 %v795, %v808
        %v810 = vpop.f32.mrf.mxu0
        %v811 = vadd.f32 %v797, %v810
        %812 = vdwg.mxu0
        %813 = vmatpush.bf16.msra.mxu0 %v696
        %814 = vmatpush.bf16.msra.mxu0 %v695
        %815 = vmatpush.bf16.msra.mxu0 %v694
        %816 = vmatpush.bf16.msra.mxu0 %v693
        %817 = vmatpush.bf16.msra.mxu0 %v692
        %818 = vmatpush.bf16.msra.mxu0 %v691
        %819 = vmatpush.bf16.msra.mxu0 %v690
        %820 = vmatpush.bf16.msra.mxu0 %v689
        %821 = vmatmul.bf16.gmra.mxu0 %v446
        %v822 = vpop.f32.mrf.mxu0
        %v823 = vadd.f32 %v809, %v822
        %v824 = vpop.f32.mrf.mxu0
        %v825 = vadd.f32 %v811, %v824
        %826 = vdwg.mxu0
        %827 = vmatpush.bf16.msra.mxu0 %v704
        %828 = vmatpush.bf16.msra.mxu0 %v703
        %829 = vmatpush.bf16.msra.mxu0 %v702
        %830 = vmatpush.bf16.msra.mxu0 %v701
        %831 = vmatpush.bf16.msra.mxu0 %v700
        %832 = vmatpush.bf16.msra.mxu0 %v699
        %833 = vmatpush.bf16.msra.mxu0 %v698
        %834 = vmatpush.bf16.msra.mxu0 %v697
        %835 = vmatmul.bf16.gmra.mxu0 %v447
        %v836 = vpop.f32.mrf.mxu0
        %v837 = vadd.f32 %v823, %v836
        %v838 = vpop.f32.mrf.mxu0
        %v839 = vadd.f32 %v825, %v838
        %840 = vdwg.mxu0
        %841 = vmatpush.bf16.msra.mxu0 %v712
        %842 = vmatpush.bf16.msra.mxu0 %v711
        %843 = vmatpush.bf16.msra.mxu0 %v710
        %844 = vmatpush.bf16.msra.mxu0 %v709
        %845 = vmatpush.bf16.msra.mxu0 %v708
        %846 = vmatpush.bf16.msra.mxu0 %v707
        %847 = vmatpush.bf16.msra.mxu0 %v706
        %848 = vmatpush.bf16.msra.mxu0 %v705
        %849 = vmatmul.bf16.gmra.mxu0 %v448
        %v850 = vpop.f32.mrf.mxu0
        %v851 = vadd.f32 %v837, %v850
        %v852 = vpop.f32.mrf.mxu0
        %v853 = vadd.f32 %v839, %v852
        %854 = vdwg.mxu0
        %855 = vmatpush.bf16.msra.mxu0 %v720
        %856 = vmatpush.bf16.msra.mxu0 %v719
        %857 = vmatpush.bf16.msra.mxu0 %v718
        %858 = vmatpush.bf16.msra.mxu0 %v717
        %859 = vmatpush.bf16.msra.mxu0 %v716
        %860 = vmatpush.bf16.msra.mxu0 %v715
        %861 = vmatpush.bf16.msra.mxu0 %v714
        %862 = vmatpush.bf16.msra.mxu0 %v713
        %863 = vmatmul.bf16.gmra.mxu0 %v449
        %v864 = vpop.f32.mrf.mxu0
        %v865 = vadd.f32 %v851, %v864
        %v866 = vpop.f32.mrf.mxu0
        %v867 = vadd.f32 %v853, %v866
        %868 = vdwg.mxu0
        %869 = vmatpush.bf16.msra.mxu0 0
        %870 = vmatpush.bf16.msra.mxu0 0
        %871 = vmatpush.bf16.msra.mxu0 %v726
        %872 = vmatpush.bf16.msra.mxu0 %v725
        %873 = vmatpush.bf16.msra.mxu0 %v724
        %874 = vmatpush.bf16.msra.mxu0 %v723
        %875 = vmatpush.bf16.msra.mxu0 %v722
        %876 = vmatpush.bf16.msra.mxu0 %v721
        %877 = vmatmul.bf16.gmra.mxu0 %v783
        %v878 = vpop.f32.mrf.mxu0
        %v879 = vadd.f32 %v865, %v878
        %v880 = vpop.f32.mrf.mxu0
        %v881 = vadd.f32 %v867, %v880
        %882 = vdwg.mxu0
        %v883 = vld [vmem:[%s2] sm:$0x1]
        %v885 = vperm.slane %v883, 0
        %v887 = vmul.f32 %v879, %v885
        %v888 = vmul.f32 %v881, %v885
        %v889 = vld [vmem:[%s3] sm:$0x1]
        %v891 = vperm.slane %v889, 0
        %v893 = vadd.f32 %v887, %v891
        %v894 = vadd.f32 %v888, %v891
        %v895 = vld [vmem:[%s302] sm:$0xf]
        %v896 = vld [vmem:[%s302 + $0x4] sm:$0xf]
        %v897 = vld [vmem:[%s5] sm:$0xf]
        %v898 = vld [vmem:[%s5 + $0x4] sm:$0xf]
        %v899 = vld [vmem:[%s5 + $0x8] sm:$0xf]
        %v900 = vld [vmem:[%s5 + $0xc] sm:$0xf]
        %v901 = vld [vmem:[%s5 + $0x10] sm:$0xf]
        %v902 = vld [vmem:[%s5 + $0x14] sm:$0xf]
        %v905 = vunpack.c.l.b16 %v895
        %v906 = vunpack.c.l.b16 %v896
        %v907 = vpack.c.b16 %v906, %v905
        %v914 = vunpack.c.l.b16 %v897
        %v915 = vunpack.c.l.b16 %v898
        %v916 = vunpack.c.l.b16 %v899
        %v917 = vunpack.c.l.b16 %v900
        %v918 = vunpack.c.l.b16 %v901
        %v919 = vunpack.c.l.b16 %v902
        %v920 = vpack.c.b16 %v915, %v914
        %v921 = vpack.c.b16 %v917, %v916
        %v922 = vpack.c.b16 %v919, %v918
        %vm926 = vcmask 392192
        %v928 = vsel %vm926, %v907, 0
        %930 = vmatpush.bf16.msra.mxu0 0
        %931 = vmatpush.bf16.msra.mxu0 0
        %932 = vmatpush.bf16.msra.mxu0 0
        %933 = vmatpush.bf16.msra.mxu0 0
        %934 = vmatpush.bf16.msra.mxu0 0
        %935 = vmatpush.bf16.msra.mxu0 %v922
        %936 = vmatpush.bf16.msra.mxu0 %v921
        %937 = vmatpush.bf16.msra.mxu0 %v920
        %938 = vmatmul.bf16.gmra.mxu0 %v928
        %v939 = vpop.f32.mrf.mxu0
        %v940 = vadd.f32 0.0, %v939
        %v941 = vpop.f32.mrf.mxu0
        %v942 = vadd.f32 0.0, %v941
        %943 = vdwg.mxu0
        %v944 = vadd.f32 %v893, %v940
        %v945 = vadd.f32 %v894, %v942
        %v946 = vld [vmem:[%s6] sm:$0x1]
        %v948 = vperm.slane %v946, 0
        %v950 = vadd.f32 %v944, %v948
        %v951 = vadd.f32 %v945, %v948
        %v952 = vmax.f32 %v950, 0.0
        %v953 = vmax.f32 %v951, 0.0
        %954 = vst [vmem:[%s290] sm:$0xff] %v952
        %955 = vst [vmem:[%s290 + $0x8] sm:$0xff] %v953
        %s956 = sand.u32 %s186, 1
        %s957 = scalar_lea.sflag [#allocation3], %s956
        %s958 = sand.u32 %s186, 1
        %s959 = smul.addr %s958, 16
        %s960 = scalar_lea.vmem [#allocation2], %s959
        // Predicated region
        $region49: #{_lambda_.11} parent=47 // pred_check
          %p961 = pneg %p196
        $region50: #{_lambda_.11} parent=47 // pred_check_branch
          %963 = sbr.rel (%p961) target = $region52
        $region51: #{_lambda_.11} parent=47 // pred_region
          %s964 = smul.u32 2, %s21
          %966 = vsyncadd %s957, 0
          %s967 = smul.addr %s964, 8
          %s968 = scalar_lea.hbm %s7, %s967
          %s969 = sshll.u32 %s960, 4
          %s970 = int_to_ptr.vmem [resolvable:$true] %s969
          %s971 = sshll.u32 %s968, 4
          %s972 = int_to_ptr.hbm [resolvable:$true] %s971
          %977 = dma.vmem_to_hbm [thread:$0]  %s970, 256, %s972, %s957, 128, 128, 8
        $region52: #{_lambda_.11} parent=47 // pred_fallthru
          _
      $region48: #{_lambda_.11} parent=5 // pred_fallthru
        _
      %p978 = scmp.le.s32.totalorder 2, %s16
      // Predicated region
      $region53: #{_lambda_.11} parent=5 // pred_check
        %p979 = pneg %p978
      $region54: #{_lambda_.11} parent=5 // pred_check_branch
        %981 = sbr.rel (%p979) target = $region56
      $region55: #{_lambda_.11} parent=5 // pred_region
        %s982 = ssub.s32 %s16, 2
        // Predicated region
        $region57: #{_lambda_.11} parent=55 // pred_check
          %p983 = pneg %p202
        $region58: #{_lambda_.11} parent=55 // pred_check_branch
          %985 = sbr.rel (%p983) target = $region60
        $region59: #{_lambda_.11} parent=55 // pred_region
          %s986 = sand.u32 %s187, 1
          %s987 = scalar_lea.sflag [#allocation3], %s986
          %s988 = sand.u32 %s187, 1
          %s989 = smul.addr %s988, 16
          %s990 = scalar_lea.vmem [#allocation2], %s989
          %992 = dma.done %s987, 256
        $region60: #{_lambda_.11} parent=55 // pred_fallthru
          _
      $region56: #{_lambda_.11} parent=5 // pred_fallthru
        _
    $region6: #{_lambda_.11} parent=1 // loop_footer
      %s20 = sadd.s32 1, %s16
    $region7: #{_lambda_.11} parent=1 // loop_footer_branch
      %15 = sbr.rel target = $region3
    $region8: #{_lambda_.11} parent=1 // loop_exit
      _
    %993 = vsyncpa [#allocation3], 1
    %s994 = scalar_lea.sflag [#allocation3], 1
    %995 = vsyncpa %s994, 1

</llo_original>
